<compile_context>
chip_gen: v5e
topology: v5e:2x2
jax: 0.10.0
libtpu: 0.0.40
codegen_flags: <defaults>
</compile_context>

<pallas_src>
import functools

import jax
import jax.numpy as jnp
import numpy as np
from jax import lax
from jax.experimental import pallas as pl
from jax.experimental.pallas import tpu as pltpu

BN_EPS = 1e-5  # PyTorch BatchNorm1d default


# ----------------------------- kernels ------------------------------------------------

def _matmul_stats(a, adjt, wt, y_ref, sum_ref, sq_ref, precision):
    # a:    (tb, N, C_in)  channels-last activations (compute dtype)
    # adjt: (tb, N, N)     adjt[b, m, n] = adj[b, n, m]
    # wt:   (C_in, C_out)  pre-transposed 1x1-conv weight (compute dtype)
    a = a.astype(adjt.dtype)
    h = jnp.einsum('bmn,bnc->bmc', adjt, a,
                   preferred_element_type=jnp.float32, precision=precision)
    tb, n, c_in = h.shape
    # fold batch*length into the MXU M dim; cast the f32 accumulator to the MXU dtype
    h2d = h.reshape(tb * n, c_in).astype(wt.dtype)
    y2d = jnp.dot(h2d, wt, preferred_element_type=jnp.float32,
                  precision=precision)                                   # (tb*n, C_out) f32
    # per-block channel statistics from the f32 accumulator (one pass: sum, sum of squares)
    sum_ref[...] = jnp.sum(y2d, axis=0, keepdims=True)[None]             # (1, 1, C_out)
    sq_ref[...] = jnp.sum(y2d * y2d, axis=0, keepdims=True)[None]        # (1, 1, C_out)
    y_ref[...] = y2d.reshape(tb, n, -1).astype(y_ref.dtype)


def _layer1_kernel(x_ref, adjt_ref, w_ref, y_ref, sum_ref, sq_ref, *, precision):
    _matmul_stats(x_ref[...], adjt_ref[...], w_ref[...], y_ref, sum_ref, sq_ref, precision)


def _layer2_kernel(y1_ref, scale_ref, shift_ref, adjt_ref, w_ref,
                   y_ref, sum_ref, sq_ref, *, precision):
    # fused BN1 affine (scale/shift precomputed from global stats, f32) + ReLU
    a = jnp.maximum(y1_ref[...] * scale_ref[...][None] + shift_ref[...][None], 0.0)
    _matmul_stats(a, adjt_ref[...], w_ref[...], y_ref, sum_ref, sq_ref, precision)


def _bn_relu_out_kernel(y_ref, scale_ref, shift_ref, out_ref):
    # fused BN2 affine + ReLU, then transpose back to PyTorch NCL layout in the epilogue
    a = jnp.maximum(y_ref[...] * scale_ref[...][None] + shift_ref[...][None], 0.0)
    out_ref[...] = jnp.transpose(a, (0, 2, 1)).astype(out_ref.dtype)


# ----------------------------- wrapper helpers -----------------------------------------

def _tpu_physical_vmem_bytes():
    try:
        return int(pltpu.get_tpu_info().vmem_capacity_bytes)
    except Exception:
        return 64 << 20   # conservative default (v7x per-TensorCore VMEM)


def _scoped_vmem_cap(physical_bytes):
    # ~40 MiB scoped on 64 MiB parts (v7x), ~96 MiB on 128 MiB parts (v5e/v6e)
    return (40 << 20) if physical_bytes <= (64 << 20) else (96 << 20)


def _compiler_params(block_bytes, limit_cap):
    # double-buffered blocks + headroom, clamped to the generation-aware scoped cap
    limit = int(min(max(2 * block_bytes + (8 << 20), 32 << 20), limit_cap))
    return pltpu.CompilerParams(dimension_semantics=("parallel",),
                                vmem_limit_bytes=limit)


def _bn_scale_shift(ssum, ssq, gamma, beta, count):
    # one-pass biased (training-mode) statistics folded into a single per-channel FMA
    mean = ssum / count
    var = jnp.maximum(ssq / count - mean * mean, 0.0)
    scale = gamma * lax.rsqrt(var + BN_EPS)
    shift = beta - mean * scale
    return scale.reshape(1, -1), shift.reshape(1, -1)


def _pick_tb(B, N, C_in, C_out, bytes_per_el, vmem_budget):
    """Largest batch tile that (a) fits the budget with double-buffered blocks and f32
    intermediates, (b) divides B, (c) keeps nb >= 2, preferring even nb (megacore)."""
    per_b = (2 * bytes_per_el * (N * N + N * max(C_in, C_out) + N * C_out)  # 2x-buffered DMA blocks
             + 4 * (N * C_in + 3 * N * C_out))                              # f32 h / a / y / y*y temps
    cap = max(1, min(B // 2, int(vmem_budget // max(per_b, 1))))
    divisors = [t for t in range(1, cap + 1) if B % t == 0]
    even = [t for t in divisors if (B // t) % 2 == 0]
    return max(even) if even else max(divisors)


# ----------------------------- forward -------------------------------------------------

def gcn_our_forward(x_ncl, adj, params, *, tb=None, compute_dtype=jnp.bfloat16,
                    assume_symmetric_adj=False):
    """x_ncl: (B, 128, N) f32 (PyTorch NCL); adj: (B, N, N). Returns (B, 256, N) f32."""
    B, C_in, N = x_ncl.shape
    C_out = params['w1'].shape[0]
    f32 = jnp.float32
    cdt = jnp.dtype(compute_dtype)
    bpe = cdt.itemsize
    precision = lax.Precision.DEFAULT if cdt == jnp.bfloat16 else lax.Precision.HIGHEST

    limit_cap = _scoped_vmem_cap(_tpu_physical_vmem_bytes())
    if tb is None:
        tb = _pick_tb(B, N, C_in, C_out, bpe, vmem_budget=limit_cap - (8 << 20))
    assert B % tb == 0, (B, tb)
    nb = B // tb

    # Layout prep outside the kernels (each a single fused, lane-dense XLA pass):
    x_nlc = jnp.transpose(x_ncl, (0, 2, 1)).astype(cdt)        # (B, N, C_in)
    if assume_symmetric_adj:
        adj_t = adj.astype(cdt)                                # symmetric: skip transpose
    else:
        adj_t = jnp.transpose(adj, (0, 2, 1)).astype(cdt)      # transpose fused with cast
    w1_t = jnp.transpose(params['w1']).astype(cdt)             # (C_in, C_out)
    w2_t = jnp.transpose(params['w2']).astype(cdt)             # (C_out, C_out)
    # NOTE: conv biases are intentionally unused (cancelled by training-mode BN mean-sub).

    stats_spec = pl.BlockSpec((1, 1, C_out), lambda b: (b, 0, 0))
    stats_shape = jax.ShapeDtypeStruct((nb, 1, C_out), f32)
    vec_spec = pl.BlockSpec((1, C_out), lambda b: (0, 0))

    # ---------- layer 1: y1 = (adj^T bmm x) @ W1^T  (pre-BN) + per-block stats ----------
    blk1 = (bpe * (tb * N * C_in + tb * N * N + C_in * C_out + tb * N * C_out)
            + 4 * (tb * N * C_in + 2 * tb * N * C_out) + 8 * C_out)
    y1, s1, q1 = pl.pallas_call(
        functools.partial(_layer1_kernel, precision=precision),
        grid=(nb,),
        in_specs=[
            pl.BlockSpec((tb, N, C_in), lambda b: (b, 0, 0)),
            pl.BlockSpec((tb, N, N), lambda b: (b, 0, 0)),
            pl.BlockSpec((C_in, C_out), lambda b: (0, 0)),
        ],
        out_specs=(
            pl.BlockSpec((tb, N, C_out), lambda b: (b, 0, 0)),
            stats_spec,
            stats_spec,
        ),
        out_shape=(
            jax.ShapeDtypeStruct((B, N, C_out), cdt),
            stats_shape,
            stats_shape,
        ),
        compiler_params=_compiler_params(blk1, limit_cap),
    )(x_nlc, adj_t, w1_t)

    scale1, shift1 = _bn_scale_shift(jnp.sum(s1, axis=(0, 1)), jnp.sum(q1, axis=(0, 1)),
                                     params['g1'], params['be1'], B * N)

    # ---------- layer 2: a1 = relu(bn1(y1)); y2 = (adj^T bmm a1) @ W2^T (pre-BN) --------
    blk2 = (bpe * (2 * tb * N * C_out + tb * N * N + C_out * C_out)
            + 4 * (3 * tb * N * C_out) + 16 * C_out)
    y2, s2, q2 = pl.pallas_call(
        functools.partial(_layer2_kernel, precision=precision),
        grid=(nb,),
        in_specs=[
            pl.BlockSpec((tb, N, C_out), lambda b: (b, 0, 0)),
            vec_spec,
            vec_spec,
            pl.BlockSpec((tb, N, N), lambda b: (b, 0, 0)),
            pl.BlockSpec((C_out, C_out), lambda b: (0, 0)),
        ],
        out_specs=(
            pl.BlockSpec((tb, N, C_out), lambda b: (b, 0, 0)),
            stats_spec,
            stats_spec,
        ),
        out_shape=(
            jax.ShapeDtypeStruct((B, N, C_out), cdt),
            stats_shape,
            stats_shape,
        ),
        compiler_params=_compiler_params(blk2, limit_cap),
    )(y1, scale1, shift1, adj_t, w2_t)

    scale2, shift2 = _bn_scale_shift(jnp.sum(s2, axis=(0, 1)), jnp.sum(q2, axis=(0, 1)),
                                     params['g2'], params['be2'], B * N)

    # ---------- BN2 + ReLU + transpose back to (B, C_out, N) ----------------------------
    blk3 = bpe * tb * N * C_out + 4 * (2 * tb * N * C_out)
    out = pl.pallas_call(
        _bn_relu_out_kernel,
        grid=(nb,),
        in_specs=[
            pl.BlockSpec((tb, N, C_out), lambda b: (b, 0, 0)),
            vec_spec,
            vec_spec,
        ],
        out_specs=pl.BlockSpec((tb, C_out, N), lambda b: (b, 0, 0)),
        out_shape=jax.ShapeDtypeStruct((B, C_out, N), f32),
        compiler_params=_compiler_params(blk3, limit_cap),
    )(y2, scale2, shift2)

    return out


# ----------------------------- pure-JAX reference (PyTorch semantics) -------------------

def _reference_forward(x_ncl, adj, params):
    hp = lax.Precision.HIGHEST

    def bn_relu(y_ncl, gamma, beta):
        mean = jnp.mean(y_ncl, axis=(0, 2), keepdims=True)
        var = jnp.mean((y_ncl - mean) ** 2, axis=(0, 2), keepdims=True)
        yn = (y_ncl - mean) / jnp.sqrt(var + BN_EPS)
        return jnp.maximum(yn * gamma[None, :, None] + beta[None, :, None], 0.0)

    h = jnp.einsum('bcn,bnm->bcm', x_ncl, adj, precision=hp)
    y = jnp.einsum('oc,bcn->bon', params['w1'], h, precision=hp) + params['b1'][None, :, None]
    y = bn_relu(y, params['g1'], params['be1'])
    h2 = jnp.einsum('bcn,bnm->bcm', y, adj, precision=hp)
    y2 = jnp.einsum('oc,bcn->bon', params['w2'], h2, precision=hp) + params['b2'][None, :, None]
    return bn_relu(y2, params['g2'], params['be2'])


def init_params(key):
    ks = jax.random.split(key, 8)
    return {
        # Conv1d(128,256,1) weight (256,128,1) squeezed -> (256,128); Conv1d(256,256,1) -> (256,256)
        'w1': jax.random.normal(ks[0], (256, 128), jnp.float32) * 0.05,
        'b1': jax.random.normal(ks[1], (256,), jnp.float32) * 0.05,
        'g1': 1.0 + 0.1 * jax.random.normal(ks[2], (256,), jnp.float32),
        'be1': 0.1 * jax.random.normal(ks[3], (256,), jnp.float32),
        'w2': jax.random.normal(ks[4], (256, 256), jnp.float32) * 0.05,
        'b2': jax.random.normal(ks[5], (256,), jnp.float32) * 0.05,
        'g2': 1.0 + 0.1 * jax.random.normal(ks[6], (256,), jnp.float32),
        'be2': 0.1 * jax.random.normal(ks[7], (256,), jnp.float32),
    }


if __name__ == "__main__":
    key = jax.random.PRNGKey(0)
    kx, kadj, kp = jax.random.split(key, 3)

    B, C_in, N = 4, 128, 128
    x = jax.random.normal(kx, (B, C_in, N), jnp.float32)           # PyTorch NCL layout
    adj = jax.random.uniform(kadj, (B, N, N), jnp.float32) / N     # normalized adjacency
    params = init_params(kp)

    ref = jax.block_until_ready(_reference_forward(x, adj, params))

    # Semantics check: f32 compute path (HIGHEST precision) must match tightly.
    out_f32 = jax.block_until_ready(gcn_our_forward(x, adj, params, compute_dtype=jnp.float32))
    assert out_f32.shape == (B, 256, N), out_f32.shape
    np.testing.assert_allclose(np.asarray(out_f32), np.asarray(ref), rtol=1e-4, atol=1e-4)

    # Performance path (default): bf16 storage / MXU operands, f32 accumulation & BN stats.
    out_bf16 = jax.block_until_ready(gcn_our_forward(x, adj, params))
    assert out_bf16.shape == (B, 256, N), out_bf16.shape
    ref_np = np.asarray(ref)
    rel_l2 = (np.linalg.norm(np.asarray(out_bf16) - ref_np)
              / (np.linalg.norm(ref_np) + 1e-12))
    assert rel_l2 < 5e-2, f"bf16 path relative L2 error too high: {rel_l2}"

    print("KERNEL_OK")
</pallas_src>

<mosaic_0001>
module attributes {stable_mosaic.version = 11 : i64} {
  func.func @_layer1_kernel(%arg0: i32, %arg1: memref<2x128x128xf32, #tpu.memory_space<vmem>>, %arg2: memref<2x128x128xf32, #tpu.memory_space<vmem>>, %arg3: memref<128x256xf32, #tpu.memory_space<vmem>>, %arg4: memref<2x128x256xf32, #tpu.memory_space<vmem>>, %arg5: memref<1x1x256xf32, #tpu.memory_space<vmem>>, %arg6: memref<1x1x256xf32, #tpu.memory_space<vmem>>) attributes {dimension_semantics = [#tpu.dimension_semantics<parallel>], iteration_bounds = array<i64: 2>, scalar_prefetch = 0 : i64, scratch_operands = 0 : i64, tpu.core_type = #tpu.core_type<tc>, window_params = [{transform_indices = @transform_0, window_bounds = array<i64: 2, 128, 128>}, {transform_indices = @transform_1, window_bounds = array<i64: 2, 128, 128>}, {pipeline_mode = #tpu.pipeline_mode<synchronous>, transform_indices = @transform_2, window_bounds = array<i64: 128, 256>}, {transform_indices = @transform_3, window_bounds = array<i64: 2, 128, 256>}, {transform_indices = @transform_4, window_bounds = array<i64: 1, 1, 256>}, {transform_indices = @transform_5, window_bounds = array<i64: 1, 1, 256>}]} {
    %c0 = arith.constant 0 : index
    %c0_0 = arith.constant 0 : index
    %c0_1 = arith.constant 0 : index
    %0 = vector.load %arg1[%c0, %c0_0, %c0_1] : memref<2x128x128xf32, #tpu.memory_space<vmem>>, vector<2x128x128xf32>
    %c0_2 = arith.constant 0 : index
    %c0_3 = arith.constant 0 : index
    %c0_4 = arith.constant 0 : index
    %1 = vector.load %arg2[%c0_2, %c0_3, %c0_4] : memref<2x128x128xf32, #tpu.memory_space<vmem>>, vector<2x128x128xf32>
    %c0_5 = arith.constant 0 : index
    %c0_6 = arith.constant 0 : index
    %2 = vector.load %arg3[%c0_5, %c0_6] : memref<128x256xf32, #tpu.memory_space<vmem>>, vector<128x256xf32>
    "tpu.trace_start"() <{level = 10 : i32, message = "bmn,bnc->bmc"}> : () -> ()
    %cst = arith.constant dense<0.000000e+00> : vector<2x128x128xf32>
    %3 = tpu.matmul %1, %0, %cst {dimension_numbers = #tpu.dot_dimension_numbers<[2], [1], [1], [2], [0, 0, 0, 1, 1, 2], [0], [0]>, precision = #tpu.contract_precision<fp32>} : vector<2x128x128xf32>, vector<2x128x128xf32>, vector<2x128x128xf32> -> vector<2x128x128xf32>
    "tpu.trace_stop"() : () -> ()
    %4 = vector.shape_cast %3 : vector<2x128x128xf32> to vector<256x128xf32>
    %cst_7 = arith.constant dense<0.000000e+00> : vector<256x256xf32>
    %5 = tpu.matmul %4, %2, %cst_7 {dimension_numbers = #tpu.dot_dimension_numbers<[1], [0], [0], [1], [0, 0, 1, 1], [], []>, precision = #tpu.contract_precision<fp32>} : vector<256x128xf32>, vector<128x256xf32>, vector<256x256xf32> -> vector<256x256xf32>
    %cst_8 = arith.constant dense<0.000000e+00> : vector<256xf32>
    %6 = vector.multi_reduction <add>, %5, %cst_8 [0] : vector<256x256xf32> to vector<256xf32>
    %7 = vector.shape_cast %6 : vector<256xf32> to vector<1x256xf32>
    %8 = vector.shape_cast %7 : vector<1x256xf32> to vector<1x1x256xf32>
    %c0_9 = arith.constant 0 : index
    %c0_10 = arith.constant 0 : index
    %c0_11 = arith.constant 0 : index
    %9 = vector.load %arg5[%c0_9, %c0_10, %c0_11] : memref<1x1x256xf32, #tpu.memory_space<vmem>>, vector<1x1x256xf32>
    tpu.vector_store %arg5[%c0_9, %c0_10, %c0_11], %8 {strides = array<i32>} : memref<1x1x256xf32, #tpu.memory_space<vmem>>, vector<1x1x256xf32>,
    %10 = arith.mulf %5, %5 : vector<256x256xf32>
    %cst_12 = arith.constant dense<0.000000e+00> : vector<256xf32>
    %11 = vector.multi_reduction <add>, %10, %cst_12 [0] : vector<256x256xf32> to vector<256xf32>
    %12 = vector.shape_cast %11 : vector<256xf32> to vector<1x256xf32>
    %13 = vector.shape_cast %12 : vector<1x256xf32> to vector<1x1x256xf32>
    %c0_13 = arith.constant 0 : index
    %c0_14 = arith.constant 0 : index
    %c0_15 = arith.constant 0 : index
    %14 = vector.load %arg6[%c0_13, %c0_14, %c0_15] : memref<1x1x256xf32, #tpu.memory_space<vmem>>, vector<1x1x256xf32>
    tpu.vector_store %arg6[%c0_13, %c0_14, %c0_15], %13 {strides = array<i32>} : memref<1x1x256xf32, #tpu.memory_space<vmem>>, vector<1x1x256xf32>,
    %15 = vector.shape_cast %5 : vector<256x256xf32> to vector<2x128x256xf32>
    %c0_16 = arith.constant 0 : index
    %c0_17 = arith.constant 0 : index
    %c0_18 = arith.constant 0 : index
    %16 = vector.load %arg4[%c0_16, %c0_17, %c0_18] : memref<2x128x256xf32, #tpu.memory_space<vmem>>, vector<2x128x256xf32>
    tpu.vector_store %arg4[%c0_16, %c0_17, %c0_18], %15 {strides = array<i32>} : memref<2x128x256xf32, #tpu.memory_space<vmem>>, vector<2x128x256xf32>,
    return
  }
  func.func @transform_0(%arg0: i32) -> (i32, i32, i32) {
    %c0_i32 = arith.constant 0 : i32
    %c0_i32_0 = arith.constant 0 : i32
    %c0_i32_1 = arith.constant 0 : i32
    return %arg0, %c0_i32, %c0_i32_0 : i32, i32, i32
  }
  func.func @transform_1(%arg0: i32) -> (i32, i32, i32) {
    %c0_i32 = arith.constant 0 : i32
    %c0_i32_0 = arith.constant 0 : i32
    %c0_i32_1 = arith.constant 0 : i32
    return %arg0, %c0_i32, %c0_i32_0 : i32, i32, i32
  }
  func.func @transform_2(%arg0: i32) -> (i32, i32) {
    %c0_i32 = arith.constant 0 : i32
    %c0_i32_0 = arith.constant 0 : i32
    %c0_i32_1 = arith.constant 0 : i32
    return %c0_i32, %c0_i32_0 : i32, i32
  }
  func.func @transform_3(%arg0: i32) -> (i32, i32, i32) {
    %c0_i32 = arith.constant 0 : i32
    %c0_i32_0 = arith.constant 0 : i32
    %c0_i32_1 = arith.constant 0 : i32
    return %arg0, %c0_i32, %c0_i32_0 : i32, i32, i32
  }
  func.func @transform_4(%arg0: i32) -> (i32, i32, i32) {
    %c0_i32 = arith.constant 0 : i32
    %c0_i32_0 = arith.constant 0 : i32
    %c0_i32_1 = arith.constant 0 : i32
    return %arg0, %c0_i32, %c0_i32_0 : i32, i32, i32
  }
  func.func @transform_5(%arg0: i32) -> (i32, i32, i32) {
    %c0_i32 = arith.constant 0 : i32
    %c0_i32_0 = arith.constant 0 : i32
    %c0_i32_1 = arith.constant 0 : i32
    return %arg0, %c0_i32, %c0_i32_0 : i32, i32, i32
  }
}

</mosaic_0001>

<llo_original>
// kernel: tpu_custom_call.1
$region0: #{tpu_custom_call.1}
  #allocation0 [shape = 'u32[]', space=smem, size = 0x4, offset = 0x4, fixed_abs, tag = 'smem constant byte address 0x4 - core index']
  #allocation1 [shape = 'u32[72,128]{1,0:T(1,128)}', space=vmem, size = 0x9000, scoped, tag = 'internal scratch']
  %s0 = inlined_call_operand.hbm [shape: f32[4,128,128], index: 0, kind: input, shape index: {}]
  %s1 = inlined_call_operand.hbm [shape: f32[4,128,128], index: 1, kind: input, shape index: {}]
  %s2 = inlined_call_operand.hbm [shape: f32[128,256], index: 2, kind: input, shape index: {}]
  %s3 = inlined_call_operand.hbm [shape: f32[4,128,256], index: 3, kind: output, shape index: {0}]
  %s4 = inlined_call_operand.hbm [shape: f32[2,1,256], index: 4, kind: output, shape index: {1}]
  %s5 = inlined_call_operand.hbm [shape: f32[2,1,256], index: 5, kind: output, shape index: {2}]
  %6 = xla_tuple %s3, %s4, %s5
  %s7 = sld [smem:[#allocation0]]
  $region73: #{tpu_custom_call.1} parent=0
    _
  %s9 = ssub.s32 1, %s7
  %s10 = scalar_select 0, %s9, %s7
  $region1: #{tpu_custom_call.1} parent=0
    #allocation2 [shape = 'u8[262144]{0}', space=vmem, size = 0x40000, scoped, tag = 'input window, operand 0']
    #allocation3 [shape = 's32[2]{0}', space=sflag, size = 0x8, scoped, tag = 'scoped memory for tpu_custom_call.1']
    #allocation4 [shape = 's32[2]{0}', space=sflag, size = 0x8, scoped, tag = 'scoped memory for tpu_custom_call.1']
    #allocation5 [shape = 'u8[262144]{0}', space=vmem, size = 0x40000, scoped, tag = 'input window, operand 1']
    #allocation6 [shape = 's32[2]{0}', space=sflag, size = 0x8, scoped, tag = 'scoped memory for tpu_custom_call.1']
    #allocation7 [shape = 'u8[131072]{0}', space=vmem, size = 0x20000, scoped, tag = 'input window, operand 2, single buffered']
    #allocation8 [shape = 'u8[524288]{0}', space=vmem, size = 0x80000, scoped, tag = 'output window, operand 0']
    #allocation9 [shape = 'u8[2048]{0}', space=vmem, size = 0x800, scoped, tag = 'output window, operand 1']
    #allocation10 [shape = 's32[2]{0}', space=sflag, size = 0x8, scoped, tag = 'scoped memory for tpu_custom_call.1']
    #allocation11 [shape = 'u8[2048]{0}', space=vmem, size = 0x800, scoped, tag = 'output window, operand 2']
    %11 = vsyncpa [#allocation3], 0
    %s12 = scalar_lea.sflag [#allocation3], 1
    %13 = vsyncpa %s12, 0
    %14 = vsyncpa [#allocation6], 0
    %s15 = scalar_lea.sflag [#allocation6], 1
    %16 = vsyncpa %s15, 0
    %17 = vsyncpa [#allocation4], 0
    %s18 = scalar_lea.sflag [#allocation4], 1
    %19 = vsyncpa %s18, 0
    %20 = vsyncpa [#allocation10], 0
    %s21 = scalar_lea.sflag [#allocation10], 1
    %22 = vsyncpa %s21, 0
    loop: start=0, step=1, limit=4
    $region2: #{tpu_custom_call.1} parent=1 // loop_pre_header
      _
    $region3: #{tpu_custom_call.1} parent=1 // loop_header
      %s24 = sphi 0, %s28
      %p25 = scmp.ge.s32.totalorder %s24, 4
      %s34 = sphi 0, %s36
      %s37 = sphi 0, %s34
      %s38 = sphi 0, %s37
      %s54 = sphi 0, %s38
      %s60 = sphi 0, %s62
      %s63 = sphi 0, %s60
      %s64 = sphi 0, %s63
      %s80 = sphi 0, %s64
      %s84 = sphi 0, %s84
      %s86 = sphi 0, %s84
      %s87 = sphi 0, %s86
      %s101 = sphi 0, %s87
      %s107 = sphi 0, %s109
      %s110 = sphi 0, %s107
      %s111 = sphi 0, %s110
      %s127 = sphi 0, %s111
      %s133 = sphi 0, %s135
      %s136 = sphi 0, %s133
      %s137 = sphi 0, %s136
      %s153 = sphi 0, %s137
      %s159 = sphi 0, %s161
      %s162 = sphi 0, %s159
      %s163 = sphi 0, %s162
      %s179 = sphi 0, %s163
    $region4: #{tpu_custom_call.1} parent=1 // loop_header_branch
      %27 = sbr.rel (%p25) target = $region8
    $region5: #{tpu_custom_call.1} parent=1 // loop_body
      %s29 = ssub.s32 %s24, 1
      %s30 = ssub.s32 %s24, 2
      %s31 = sadd.s32 %s24, 1
      %s32 = ssub.s32 %s24, %s31
      %p33 = scmp.eq.s32.totalorder %s32, 0
      %s35 = sadd.s32 %s34, 1
      %s36 = scalar_select %p33, %s34, %s35
      %p39 = pneg %p33
      %p40 = scmp.eq.s32.totalorder %s24, 1
      %p41 = por %p39, %p40
      %p42 = scmp.ne.s32.totalorder %s34, %s37
      %p43 = scmp.eq.s32.totalorder %s24, 0
      %p44 = por %p42, %p43
      %p45 = scmp.ne.s32.totalorder %s34, %s37
      %p46 = scmp.eq.s32.totalorder %s29, 1
      %p47 = por %p45, %p46
      %p48 = scmp.ne.s32.totalorder %s37, %s38
      %p49 = scmp.eq.s32.totalorder %s29, 0
      %p50 = por %p48, %p49
      %p51 = scmp.ne.s32.totalorder %s37, %s38
      %p52 = scmp.eq.s32.totalorder %s30, 1
      %p53 = por %p51, %p52
      %p55 = scmp.ne.s32.totalorder %s38, %s54
      %p56 = scmp.eq.s32.totalorder %s30, 0
      %p57 = por %p55, %p56
      %s58 = ssub.s32 %s24, %s31
      %p59 = scmp.eq.s32.totalorder %s58, 0
      %s61 = sadd.s32 %s60, 1
      %s62 = scalar_select %p59, %s60, %s61
      %p65 = pneg %p59
      %p66 = scmp.eq.s32.totalorder %s24, 1
      %p67 = por %p65, %p66
      %p68 = scmp.ne.s32.totalorder %s60, %s63
      %p69 = scmp.eq.s32.totalorder %s24, 0
      %p70 = por %p68, %p69
      %p71 = scmp.ne.s32.totalorder %s60, %s63
      %p72 = scmp.eq.s32.totalorder %s29, 1
      %p73 = por %p71, %p72
      %p74 = scmp.ne.s32.totalorder %s63, %s64
      %p75 = scmp.eq.s32.totalorder %s29, 0
      %p76 = por %p74, %p75
      %p77 = scmp.ne.s32.totalorder %s63, %s64
      %p78 = scmp.eq.s32.totalorder %s30, 1
      %p79 = por %p77, %p78
      %p81 = scmp.ne.s32.totalorder %s64, %s80
      %p82 = scmp.eq.s32.totalorder %s30, 0
      %p83 = por %p81, %p82
      %s85 = sadd.s32 %s84, 1
      %p88 = scmp.eq.s32.totalorder %s24, 1
      %p89 = scmp.ne.s32.totalorder %s84, %s86
      %p90 = scmp.eq.s32.totalorder %s24, 0
      %p91 = por %p89, %p90
      %p92 = scmp.ne.s32.totalorder %s84, %s86
      %p93 = scmp.eq.s32.totalorder %s29, 1
      %p94 = por %p92, %p93
      %p95 = scmp.ne.s32.totalorder %s86, %s87
      %p96 = scmp.eq.s32.totalorder %s29, 0
      %p97 = por %p95, %p96
      %p98 = scmp.ne.s32.totalorder %s86, %s87
      %p99 = scmp.eq.s32.totalorder %s30, 1
      %p100 = por %p98, %p99
      %p102 = scmp.ne.s32.totalorder %s87, %s101
      %p103 = scmp.eq.s32.totalorder %s30, 0
      %p104 = por %p102, %p103
      %s105 = ssub.s32 %s24, %s31
      %p106 = scmp.eq.s32.totalorder %s105, 0
      %s108 = sadd.s32 %s107, 1
      %s109 = scalar_select %p106, %s107, %s108
      %p112 = pneg %p106
      %p113 = scmp.eq.s32.totalorder %s24, 1
      %p114 = por %p112, %p113
      %p115 = scmp.ne.s32.totalorder %s107, %s110
      %p116 = scmp.eq.s32.totalorder %s24, 0
      %p117 = por %p115, %p116
      %p118 = scmp.ne.s32.totalorder %s107, %s110
      %p119 = scmp.eq.s32.totalorder %s29, 1
      %p120 = por %p118, %p119
      %p121 = scmp.ne.s32.totalorder %s110, %s111
      %p122 = scmp.eq.s32.totalorder %s29, 0
      %p123 = por %p121, %p122
      %p124 = scmp.ne.s32.totalorder %s110, %s111
      %p125 = scmp.eq.s32.totalorder %s30, 1
      %p126 = por %p124, %p125
      %p128 = scmp.ne.s32.totalorder %s111, %s127
      %p129 = scmp.eq.s32.totalorder %s30, 0
      %p130 = por %p128, %p129
      %s131 = ssub.s32 %s24, %s31
      %p132 = scmp.eq.s32.totalorder %s131, 0
      %s134 = sadd.s32 %s133, 1
      %s135 = scalar_select %p132, %s133, %s134
      %p138 = pneg %p132
      %p139 = scmp.eq.s32.totalorder %s24, 1
      %p140 = por %p138, %p139
      %p141 = scmp.ne.s32.totalorder %s133, %s136
      %p142 = scmp.eq.s32.totalorder %s24, 0
      %p143 = por %p141, %p142
      %p144 = scmp.ne.s32.totalorder %s133, %s136
      %p145 = scmp.eq.s32.totalorder %s29, 1
      %p146 = por %p144, %p145
      %p147 = scmp.ne.s32.totalorder %s136, %s137
      %p148 = scmp.eq.s32.totalorder %s29, 0
      %p149 = por %p147, %p148
      %p150 = scmp.ne.s32.totalorder %s136, %s137
      %p151 = scmp.eq.s32.totalorder %s30, 1
      %p152 = por %p150, %p151
      %p154 = scmp.ne.s32.totalorder %s137, %s153
      %p155 = scmp.eq.s32.totalorder %s30, 0
      %p156 = por %p154, %p155
      %s157 = ssub.s32 %s24, %s31
      %p158 = scmp.eq.s32.totalorder %s157, 0
      %s160 = sadd.s32 %s159, 1
      %s161 = scalar_select %p158, %s159, %s160
      %p164 = pneg %p158
      %p165 = scmp.eq.s32.totalorder %s24, 1
      %p166 = por %p164, %p165
      %p167 = scmp.ne.s32.totalorder %s159, %s162
      %p168 = scmp.eq.s32.totalorder %s24, 0
      %p169 = por %p167, %p168
      %p170 = scmp.ne.s32.totalorder %s159, %s162
      %p171 = scmp.eq.s32.totalorder %s29, 1
      %p172 = por %p170, %p171
      %p173 = scmp.ne.s32.totalorder %s162, %s163
      %p174 = scmp.eq.s32.totalorder %s29, 0
      %p175 = por %p173, %p174
      %p176 = scmp.ne.s32.totalorder %s162, %s163
      %p177 = scmp.eq.s32.totalorder %s30, 1
      %p178 = por %p176, %p177
      %p180 = scmp.ne.s32.totalorder %s163, %s179
      %p181 = scmp.eq.s32.totalorder %s30, 0
      %p182 = por %p180, %p181
      %p183 = scmp.le.s32.totalorder 1, %s24
      %p184 = scmp.lt.s32.totalorder %s24, 3
      %p185 = pnand %p183, %p184
      %p186 = pneg %p185
      // Predicated region
      $region9: #{tpu_custom_call.1} parent=5 // pred_check
        _
      $region10: #{tpu_custom_call.1} parent=5 // pred_check_branch
        %188 = sbr.rel (%p185) target = $region12
      $region11: #{tpu_custom_call.1} parent=5 // pred_region
        %s189 = ssub.s32 %s24, 1
        // Predicated region
        $region13: #{tpu_custom_call.1} parent=11 // pred_check
          %p190 = pneg %p97
        $region14: #{tpu_custom_call.1} parent=11 // pred_check_branch
          %192 = sbr.rel (%p190) target = $region16
        $region15: #{tpu_custom_call.1} parent=11 // pred_region
          %194 = vsyncadd [#allocation6], 0
          %s195 = sshll.u32 %s2, 4
          %s196 = int_to_ptr.hbm [resolvable:$true] %s195
          %s197 = sshll.u32 [#allocation7], 4
          %s198 = int_to_ptr.vmem [resolvable:$true] %s197
          %203 = dma.hbm_to_vmem [thread:$0]  %s196, 4096, %s198, [#allocation6], 256, 256, 16
        $region16: #{tpu_custom_call.1} parent=11 // pred_fallthru
          _
      $region12: #{tpu_custom_call.1} parent=5 // pred_fallthru
        _
      %p204 = scmp.lt.s32.totalorder %s24, 2
      // Predicated region
      $region17: #{tpu_custom_call.1} parent=5 // pred_check
        %p205 = pneg %p204
      $region18: #{tpu_custom_call.1} parent=5 // pred_check_branch
        %207 = sbr.rel (%p205) target = $region20
      $region19: #{tpu_custom_call.1} parent=5 // pred_region
        // Predicated region
        $region21: #{tpu_custom_call.1} parent=19 // pred_check
          %p208 = pneg %p44
        $region22: #{tpu_custom_call.1} parent=19 // pred_check_branch
          %210 = sbr.rel (%p208) target = $region24
        $region23: #{tpu_custom_call.1} parent=19 // pred_region
          %s211 = sand.u32 %s34, 1
          %s212 = scalar_lea.sflag [#allocation3], %s211
          %s213 = sand.u32 %s34, 1
          %s214 = smul.addr %s213, 256
          %s215 = scalar_lea.vmem [#allocation2], %s214
          %s216 = smul.u32 2, %s24
          %218 = vsyncadd %s212, 0
          %s219 = smul.addr %s216, 16
          %s220 = smul.addr %s219, 8
          %s221 = scalar_lea.hbm %s0, %s220
          %s222 = sshll.u32 %s221, 4
          %s223 = int_to_ptr.hbm [resolvable:$true] %s222
          %s224 = sshll.u32 %s215, 4
          %s225 = int_to_ptr.vmem [resolvable:$true] %s224
          %230 = dma.hbm_to_vmem [thread:$0]  %s223, 4096, %s225, %s212, 128, 128, 8
        $region24: #{tpu_custom_call.1} parent=19 // pred_fallthru
          _
        // Predicated region
        $region25: #{tpu_custom_call.1} parent=19 // pred_check
          %p231 = pneg %p70
        $region26: #{tpu_custom_call.1} parent=19 // pred_check_branch
          %233 = sbr.rel (%p231) target = $region28
        $region27: #{tpu_custom_call.1} parent=19 // pred_region
          %s234 = sand.u32 %s24, 1
          %s235 = scalar_lea.sflag [#allocation6], %s234
          %s236 = sand.u32 %s60, 1
          %s237 = smul.addr %s236, 256
          %s238 = scalar_lea.vmem [#allocation5], %s237
          %s239 = smul.u32 2, %s24
          %241 = vsyncadd %s235, 0
          %s242 = smul.addr %s239, 16
          %s243 = smul.addr %s242, 8
          %s244 = scalar_lea.hbm %s1, %s243
          %s245 = sshll.u32 %s244, 4
          %s246 = int_to_ptr.hbm [resolvable:$true] %s245
          %s247 = sshll.u32 %s238, 4
          %s248 = int_to_ptr.vmem [resolvable:$true] %s247
          %253 = dma.hbm_to_vmem [thread:$0]  %s246, 4096, %s248, %s235, 128, 128, 8
        $region28: #{tpu_custom_call.1} parent=19 // pred_fallthru
          _
      $region20: #{tpu_custom_call.1} parent=5 // pred_fallthru
        _
      %p254 = scmp.le.s32.totalorder 1, %s24
      %p255 = scmp.lt.s32.totalorder %s24, 3
      %p256 = pnand %p254, %p255
      %p257 = pneg %p256
      // Predicated region
      $region29: #{tpu_custom_call.1} parent=5 // pred_check
        _
      $region30: #{tpu_custom_call.1} parent=5 // pred_check_branch
        %259 = sbr.rel (%p256) target = $region32
      $region31: #{tpu_custom_call.1} parent=5 // pred_region
        %s260 = ssub.s32 %s24, 1
        %s261 = sand.u32 %s37, 1
        %s262 = scalar_lea.sflag [#allocation3], %s261
        %s263 = sand.u32 %s37, 1
        %s264 = smul.addr %s263, 256
        %s265 = scalar_lea.vmem [#allocation2], %s264
        // Predicated region
        $region33: #{tpu_custom_call.1} parent=31 // pred_check
          %p266 = pneg %p50
        $region34: #{tpu_custom_call.1} parent=31 // pred_check_branch
          %268 = sbr.rel (%p266) target = $region36
        $region35: #{tpu_custom_call.1} parent=31 // pred_region
          %270 = dma.done %s262, 4096
        $region36: #{tpu_custom_call.1} parent=31 // pred_fallthru
          _
        %s271 = sand.u32 %s29, 1
        %s272 = scalar_lea.sflag [#allocation6], %s271
        %s273 = sand.u32 %s63, 1
        %s274 = smul.addr %s273, 256
        %s275 = scalar_lea.vmem [#allocation5], %s274
        // Predicated region
        $region37: #{tpu_custom_call.1} parent=31 // pred_check
          %p276 = pneg %p76
        $region38: #{tpu_custom_call.1} parent=31 // pred_check_branch
          %278 = sbr.rel (%p276) target = $region40
        $region39: #{tpu_custom_call.1} parent=31 // pred_region
          %280 = dma.done %s272, 4096
        $region40: #{tpu_custom_call.1} parent=31 // pred_fallthru
          _
        // Predicated region
        $region41: #{tpu_custom_call.1} parent=31 // pred_check
          %p281 = pneg %p97
        $region42: #{tpu_custom_call.1} parent=31 // pred_check_branch
          %283 = sbr.rel (%p281) target = $region44
        $region43: #{tpu_custom_call.1} parent=31 // pred_region
          %285 = dma.done [#allocation6], 4096
        $region44: #{tpu_custom_call.1} parent=31 // pred_fallthru
          _
        %s286 = sand.u32 %s37, 1
        %s287 = scalar_lea.sflag [#allocation3], %s286
        %s288 = sand.u32 %s37, 1
        %s289 = smul.addr %s288, 256
        %s290 = scalar_lea.vmem [#allocation2], %s289
        %p291 = pneg %p50
        %p292 = pneg %p47
        %s293 = sand.u32 %s29, 1
        %s294 = scalar_lea.sflag [#allocation6], %s293
        %s295 = sand.u32 %s63, 1
        %s296 = smul.addr %s295, 256
        %s297 = scalar_lea.vmem [#allocation5], %s296
        %p298 = pneg %p76
        %p299 = pneg %p73
        %p300 = pneg %p97
        %p301 = pneg %p94
        %p302 = pneg %p123
        %p303 = pneg %p120
        %s304 = sand.u32 %s110, 1
        %s305 = scalar_lea.sflag [#allocation4], %s304
        %s306 = sand.u32 %s110, 1
        %s307 = smul.addr %s306, 512
        %s308 = scalar_lea.vmem [#allocation8], %s307
        %p309 = pneg %p149
        %p310 = pneg %p146
        %s311 = sand.u32 %s29, 1
        %s312 = scalar_lea.sflag [#allocation10], %s311
        %s313 = sand.u32 %s136, 1
        %s314 = smul.addr %s313, 2
        %s315 = scalar_lea.vmem [#allocation9], %s314
        %p316 = pneg %p175
        %p317 = pneg %p172
        %s318 = sand.u32 %s29, 1
        %s319 = scalar_lea.sflag [#allocation10], %s318
        %s320 = sand.u32 %s162, 1
        %s321 = smul.addr %s320, 2
        %s322 = scalar_lea.vmem [#allocation11], %s321
        %s323 = smul.u32 2, %s29
        %s324 = smul.u32 2, %s29
        %s325 = smul.u32 2, %s29
        %v326 = vld [vmem:[%s265] sm:$0xff]
        %v327 = vld [vmem:[%s265 + $0x8] sm:$0xff]
        %v328 = vld [vmem:[%s265 + $0x10] sm:$0xff]
        %v329 = vld [vmem:[%s265 + $0x18] sm:$0xff]
        %v330 = vld [vmem:[%s265 + $0x20] sm:$0xff]
        %v331 = vld [vmem:[%s265 + $0x28] sm:$0xff]
        %v332 = vld [vmem:[%s265 + $0x30] sm:$0xff]
        %v333 = vld [vmem:[%s265 + $0x38] sm:$0xff]
        %v334 = vld [vmem:[%s265 + $0x40] sm:$0xff]
        %v335 = vld [vmem:[%s265 + $0x48] sm:$0xff]
        %v336 = vld [vmem:[%s265 + $0x50] sm:$0xff]
        %v337 = vld [vmem:[%s265 + $0x58] sm:$0xff]
        %v338 = vld [vmem:[%s265 + $0x60] sm:$0xff]
        %v339 = vld [vmem:[%s265 + $0x68] sm:$0xff]
        %v340 = vld [vmem:[%s265 + $0x70] sm:$0xff]
        %v341 = vld [vmem:[%s265 + $0x78] sm:$0xff]
        %v342 = vld [vmem:[%s265 + $0x80] sm:$0xff]
        %v343 = vld [vmem:[%s265 + $0x88] sm:$0xff]
        %v344 = vld [vmem:[%s265 + $0x90] sm:$0xff]
        %v345 = vld [vmem:[%s265 + $0x98] sm:$0xff]
        %v346 = vld [vmem:[%s265 + $0xa0] sm:$0xff]
        %v347 = vld [vmem:[%s265 + $0xa8] sm:$0xff]
        %v348 = vld [vmem:[%s265 + $0xb0] sm:$0xff]
        %v349 = vld [vmem:[%s265 + $0xb8] sm:$0xff]
        %v350 = vld [vmem:[%s265 + $0xc0] sm:$0xff]
        %v351 = vld [vmem:[%s265 + $0xc8] sm:$0xff]
        %v352 = vld [vmem:[%s265 + $0xd0] sm:$0xff]
        %v353 = vld [vmem:[%s265 + $0xd8] sm:$0xff]
        %v354 = vld [vmem:[%s265 + $0xe0] sm:$0xff]
        %v355 = vld [vmem:[%s265 + $0xe8] sm:$0xff]
        %v356 = vld [vmem:[%s265 + $0xf0] sm:$0xff]
        %v357 = vld [vmem:[%s265 + $0xf8] sm:$0xff]
        %v358 = vld [vmem:[%s275] sm:$0xff]
        %v359 = vld [vmem:[%s275 + $0x8] sm:$0xff]
        %v360 = vld [vmem:[%s275 + $0x10] sm:$0xff]
        %v361 = vld [vmem:[%s275 + $0x18] sm:$0xff]
        %v362 = vld [vmem:[%s275 + $0x20] sm:$0xff]
        %v363 = vld [vmem:[%s275 + $0x28] sm:$0xff]
        %v364 = vld [vmem:[%s275 + $0x30] sm:$0xff]
        %v365 = vld [vmem:[%s275 + $0x38] sm:$0xff]
        %v366 = vld [vmem:[%s275 + $0x40] sm:$0xff]
        %v367 = vld [vmem:[%s275 + $0x48] sm:$0xff]
        %v368 = vld [vmem:[%s275 + $0x50] sm:$0xff]
        %v369 = vld [vmem:[%s275 + $0x58] sm:$0xff]
        %v370 = vld [vmem:[%s275 + $0x60] sm:$0xff]
        %v371 = vld [vmem:[%s275 + $0x68] sm:$0xff]
        %v372 = vld [vmem:[%s275 + $0x70] sm:$0xff]
        %v373 = vld [vmem:[%s275 + $0x78] sm:$0xff]
        %v374 = vld [vmem:[%s275 + $0x80] sm:$0xff]
        %v375 = vld [vmem:[%s275 + $0x88] sm:$0xff]
        %v376 = vld [vmem:[%s275 + $0x90] sm:$0xff]
        %v377 = vld [vmem:[%s275 + $0x98] sm:$0xff]
        %v378 = vld [vmem:[%s275 + $0xa0] sm:$0xff]
        %v379 = vld [vmem:[%s275 + $0xa8] sm:$0xff]
        %v380 = vld [vmem:[%s275 + $0xb0] sm:$0xff]
        %v381 = vld [vmem:[%s275 + $0xb8] sm:$0xff]
        %v382 = vld [vmem:[%s275 + $0xc0] sm:$0xff]
        %v383 = vld [vmem:[%s275 + $0xc8] sm:$0xff]
        %v384 = vld [vmem:[%s275 + $0xd0] sm:$0xff]
        %v385 = vld [vmem:[%s275 + $0xd8] sm:$0xff]
        %v386 = vld [vmem:[%s275 + $0xe0] sm:$0xff]
        %v387 = vld [vmem:[%s275 + $0xe8] sm:$0xff]
        %v388 = vld [vmem:[%s275 + $0xf0] sm:$0xff]
        %v389 = vld [vmem:[%s275 + $0xf8] sm:$0xff]
        %v390 = vld [vmem:[#allocation7] sm:$0xff]
        %v391 = vld [vmem:[#allocation7 + $0x8] sm:$0xff]
        %v392 = vld [vmem:[#allocation7 + $0x10] sm:$0xff]
        %v393 = vld [vmem:[#allocation7 + $0x18] sm:$0xff]
        %v394 = vld [vmem:[#allocation7 + $0x20] sm:$0xff]
        %v395 = vld [vmem:[#allocation7 + $0x28] sm:$0xff]
        %v396 = vld [vmem:[#allocation7 + $0x30] sm:$0xff]
        %v397 = vld [vmem:[#allocation7 + $0x38] sm:$0xff]
        %v398 = vld [vmem:[#allocation7 + $0x40] sm:$0xff]
        %v399 = vld [vmem:[#allocation7 + $0x48] sm:$0xff]
        %v400 = vld [vmem:[#allocation7 + $0x50] sm:$0xff]
        %v401 = vld [vmem:[#allocation7 + $0x58] sm:$0xff]
        %v402 = vld [vmem:[#allocation7 + $0x60] sm:$0xff]
        %v403 = vld [vmem:[#allocation7 + $0x68] sm:$0xff]
        %v404 = vld [vmem:[#allocation7 + $0x70] sm:$0xff]
        %v405 = vld [vmem:[#allocation7 + $0x78] sm:$0xff]
        %v406 = vld [vmem:[#allocation7 + $0x80] sm:$0xff]
        %v407 = vld [vmem:[#allocation7 + $0x88] sm:$0xff]
        %v408 = vld [vmem:[#allocation7 + $0x90] sm:$0xff]
        %v409 = vld [vmem:[#allocation7 + $0x98] sm:$0xff]
        %v410 = vld [vmem:[#allocation7 + $0xa0] sm:$0xff]
        %v411 = vld [vmem:[#allocation7 + $0xa8] sm:$0xff]
        %v412 = vld [vmem:[#allocation7 + $0xb0] sm:$0xff]
        %v413 = vld [vmem:[#allocation7 + $0xb8] sm:$0xff]
        %v414 = vld [vmem:[#allocation7 + $0xc0] sm:$0xff]
        %v415 = vld [vmem:[#allocation7 + $0xc8] sm:$0xff]
        %v416 = vld [vmem:[#allocation7 + $0xd0] sm:$0xff]
        %v417 = vld [vmem:[#allocation7 + $0xd8] sm:$0xff]
        %v418 = vld [vmem:[#allocation7 + $0xe0] sm:$0xff]
        %v419 = vld [vmem:[#allocation7 + $0xe8] sm:$0xff]
        %v420 = vld [vmem:[#allocation7 + $0xf0] sm:$0xff]
        %v421 = vld [vmem:[#allocation7 + $0xf8] sm:$0xff]
        %v422 = vand.u32 %v341, 4294901760
        %423 = vmatpush.msra.mxu0 %v422
        %v424 = vand.u32 %v340, 4294901760
        %425 = vmatpush.msra.mxu0 %v424
        %v426 = vand.u32 %v339, 4294901760
        %427 = vmatpush.msra.mxu0 %v426
        %v428 = vand.u32 %v338, 4294901760
        %429 = vmatpush.msra.mxu0 %v428
        %v430 = vand.u32 %v337, 4294901760
        %431 = vmatpush.msra.mxu0 %v430
        %v432 = vand.u32 %v336, 4294901760
        %433 = vmatpush.msra.mxu0 %v432
        %v434 = vand.u32 %v335, 4294901760
        %435 = vmatpush.msra.mxu0 %v434
        %v436 = vand.u32 %v334, 4294901760
        %437 = vmatpush.msra.mxu0 %v436
        %v438 = vand.u32 %v333, 4294901760
        %439 = vmatpush.msra.mxu0 %v438
        %v440 = vand.u32 %v332, 4294901760
        %441 = vmatpush.msra.mxu0 %v440
        %v442 = vand.u32 %v331, 4294901760
        %443 = vmatpush.msra.mxu0 %v442
        %v444 = vand.u32 %v330, 4294901760
        %445 = vmatpush.msra.mxu0 %v444
        %v446 = vand.u32 %v329, 4294901760
        %447 = vmatpush.msra.mxu0 %v446
        %v448 = vand.u32 %v328, 4294901760
        %449 = vmatpush.msra.mxu0 %v448
        %v450 = vand.u32 %v327, 4294901760
        %451 = vmatpush.msra.mxu0 %v450
        %v452 = vand.u32 %v326, 4294901760
        %453 = vmatpush.msra.mxu0 %v452
        %v454 = vand.u32 %v358, 4294901760
        %v455 = vsub.f32 %v358, %v454
        %v456 = vand.u32 %v455, 4294901760
        %v457 = vsub.f32 %v455, %v456
        %v458 = vand.u32 %v457, 4294901760
        %459 = vmatmul.f32.gmra.mxu0 %v458
        %v460 = vpop.f32.mrf.mxu0
        %v461 = vadd.f32 0.0, %v460
        %v462 = vand.u32 %v359, 4294901760
        %v463 = vsub.f32 %v359, %v462
        %v464 = vand.u32 %v463, 4294901760
        %v465 = vsub.f32 %v463, %v464
        %v466 = vand.u32 %v465, 4294901760
        %467 = vmatmul.f32.gmra.mxu0 %v466
        %v468 = vpop.f32.mrf.mxu0
        %v469 = vadd.f32 0.0, %v468
        %v470 = vand.u32 %v360, 4294901760
        %v471 = vsub.f32 %v360, %v470
        %v472 = vand.u32 %v471, 4294901760
        %v473 = vsub.f32 %v471, %v472
        %v474 = vand.u32 %v473, 4294901760
        %475 = vmatmul.f32.gmra.mxu0 %v474
        %v476 = vpop.f32.mrf.mxu0
        %v477 = vadd.f32 0.0, %v476
        %v478 = vand.u32 %v361, 4294901760
        %v479 = vsub.f32 %v361, %v478
        %v480 = vand.u32 %v479, 4294901760
        %v481 = vsub.f32 %v479, %v480
        %v482 = vand.u32 %v481, 4294901760
        %483 = vmatmul.f32.gmra.mxu0 %v482
        %v484 = vpop.f32.mrf.mxu0
        %v485 = vadd.f32 0.0, %v484
        %v486 = vand.u32 %v362, 4294901760
        %v487 = vsub.f32 %v362, %v486
        %v488 = vand.u32 %v487, 4294901760
        %v489 = vsub.f32 %v487, %v488
        %v490 = vand.u32 %v489, 4294901760
        %491 = vmatmul.f32.gmra.mxu0 %v490
        %v492 = vpop.f32.mrf.mxu0
        %v493 = vadd.f32 0.0, %v492
        %v494 = vand.u32 %v363, 4294901760
        %v495 = vsub.f32 %v363, %v494
        %v496 = vand.u32 %v495, 4294901760
        %v497 = vsub.f32 %v495, %v496
        %v498 = vand.u32 %v497, 4294901760
        %499 = vmatmul.f32.gmra.mxu0 %v498
        %v500 = vpop.f32.mrf.mxu0
        %v501 = vadd.f32 0.0, %v500
        %v502 = vand.u32 %v364, 4294901760
        %v503 = vsub.f32 %v364, %v502
        %v504 = vand.u32 %v503, 4294901760
        %v505 = vsub.f32 %v503, %v504
        %v506 = vand.u32 %v505, 4294901760
        %507 = vmatmul.f32.gmra.mxu0 %v506
        %v508 = vpop.f32.mrf.mxu0
        %v509 = vadd.f32 0.0, %v508
        %v510 = vand.u32 %v365, 4294901760
        %v511 = vsub.f32 %v365, %v510
        %v512 = vand.u32 %v511, 4294901760
        %v513 = vsub.f32 %v511, %v512
        %v514 = vand.u32 %v513, 4294901760
        %515 = vmatmul.f32.gmra.mxu0 %v514
        %v516 = vpop.f32.mrf.mxu0
        %v517 = vadd.f32 0.0, %v516
        %v518 = vand.u32 %v366, 4294901760
        %v519 = vsub.f32 %v366, %v518
        %v520 = vand.u32 %v519, 4294901760
        %v521 = vsub.f32 %v519, %v520
        %v522 = vand.u32 %v521, 4294901760
        %523 = vmatmul.f32.gmra.mxu0 %v522
        %v524 = vpop.f32.mrf.mxu0
        %v525 = vadd.f32 0.0, %v524
        %v526 = vand.u32 %v367, 4294901760
        %v527 = vsub.f32 %v367, %v526
        %v528 = vand.u32 %v527, 4294901760
        %v529 = vsub.f32 %v527, %v528
        %v530 = vand.u32 %v529, 4294901760
        %531 = vmatmul.f32.gmra.mxu0 %v530
        %v532 = vpop.f32.mrf.mxu0
        %v533 = vadd.f32 0.0, %v532
        %v534 = vand.u32 %v368, 4294901760
        %v535 = vsub.f32 %v368, %v534
        %v536 = vand.u32 %v535, 4294901760
        %v537 = vsub.f32 %v535, %v536
        %v538 = vand.u32 %v537, 4294901760
        %539 = vmatmul.f32.gmra.mxu0 %v538
        %v540 = vpop.f32.mrf.mxu0
        %v541 = vadd.f32 0.0, %v540
        %v542 = vand.u32 %v369, 4294901760
        %v543 = vsub.f32 %v369, %v542
        %v544 = vand.u32 %v543, 4294901760
        %v545 = vsub.f32 %v543, %v544
        %v546 = vand.u32 %v545, 4294901760
        %547 = vmatmul.f32.gmra.mxu0 %v546
        %v548 = vpop.f32.mrf.mxu0
        %v549 = vadd.f32 0.0, %v548
        %v550 = vand.u32 %v370, 4294901760
        %v551 = vsub.f32 %v370, %v550
        %v552 = vand.u32 %v551, 4294901760
        %v553 = vsub.f32 %v551, %v552
        %v554 = vand.u32 %v553, 4294901760
        %555 = vmatmul.f32.gmra.mxu0 %v554
        %v556 = vpop.f32.mrf.mxu0
        %v557 = vadd.f32 0.0, %v556
        %v558 = vand.u32 %v371, 4294901760
        %v559 = vsub.f32 %v371, %v558
        %v560 = vand.u32 %v559, 4294901760
        %v561 = vsub.f32 %v559, %v560
        %v562 = vand.u32 %v561, 4294901760
        %563 = vmatmul.f32.gmra.mxu0 %v562
        %v564 = vpop.f32.mrf.mxu0
        %v565 = vadd.f32 0.0, %v564
        %v566 = vand.u32 %v372, 4294901760
        %v567 = vsub.f32 %v372, %v566
        %v568 = vand.u32 %v567, 4294901760
        %v569 = vsub.f32 %v567, %v568
        %v570 = vand.u32 %v569, 4294901760
        %571 = vmatmul.f32.gmra.mxu0 %v570
        %v572 = vpop.f32.mrf.mxu0
        %v573 = vadd.f32 0.0, %v572
        %v574 = vand.u32 %v373, 4294901760
        %v575 = vsub.f32 %v373, %v574
        %v576 = vand.u32 %v575, 4294901760
        %v577 = vsub.f32 %v575, %v576
        %v578 = vand.u32 %v577, 4294901760
        %579 = vmatmul.f32.gmra.mxu0 %v578
        %v580 = vpop.f32.mrf.mxu0
        %v581 = vadd.f32 0.0, %v580
        %582 = vdwg.mxu0
        %v583 = vand.u32 %v341, 4294901760
        %v584 = vsub.f32 %v341, %v583
        %v585 = vand.u32 %v584, 4294901760
        %v586 = vsub.f32 %v584, %v585
        %v587 = vand.u32 %v586, 4294901760
        %588 = vmatpush.msra.mxu0 %v587
        %v589 = vand.u32 %v340, 4294901760
        %v590 = vsub.f32 %v340, %v589
        %v591 = vand.u32 %v590, 4294901760
        %v592 = vsub.f32 %v590, %v591
        %v593 = vand.u32 %v592, 4294901760
        %594 = vmatpush.msra.mxu0 %v593
        %v595 = vand.u32 %v339, 4294901760
        %v596 = vsub.f32 %v339, %v595
        %v597 = vand.u32 %v596, 4294901760
        %v598 = vsub.f32 %v596, %v597
        %v599 = vand.u32 %v598, 4294901760
        %600 = vmatpush.msra.mxu0 %v599
        %v601 = vand.u32 %v338, 4294901760
        %v602 = vsub.f32 %v338, %v601
        %v603 = vand.u32 %v602, 4294901760
        %v604 = vsub.f32 %v602, %v603
        %v605 = vand.u32 %v604, 4294901760
        %606 = vmatpush.msra.mxu0 %v605
        %v607 = vand.u32 %v337, 4294901760
        %v608 = vsub.f32 %v337, %v607
        %v609 = vand.u32 %v608, 4294901760
        %v610 = vsub.f32 %v608, %v609
        %v611 = vand.u32 %v610, 4294901760
        %612 = vmatpush.msra.mxu0 %v611
        %v613 = vand.u32 %v336, 4294901760
        %v614 = vsub.f32 %v336, %v613
        %v615 = vand.u32 %v614, 4294901760
        %v616 = vsub.f32 %v614, %v615
        %v617 = vand.u32 %v616, 4294901760
        %618 = vmatpush.msra.mxu0 %v617
        %v619 = vand.u32 %v335, 4294901760
        %v620 = vsub.f32 %v335, %v619
        %v621 = vand.u32 %v620, 4294901760
        %v622 = vsub.f32 %v620, %v621
        %v623 = vand.u32 %v622, 4294901760
        %624 = vmatpush.msra.mxu0 %v623
        %v625 = vand.u32 %v334, 4294901760
        %v626 = vsub.f32 %v334, %v625
        %v627 = vand.u32 %v626, 4294901760
        %v628 = vsub.f32 %v626, %v627
        %v629 = vand.u32 %v628, 4294901760
        %630 = vmatpush.msra.mxu0 %v629
        %v631 = vand.u32 %v333, 4294901760
        %v632 = vsub.f32 %v333, %v631
        %v633 = vand.u32 %v632, 4294901760
        %v634 = vsub.f32 %v632, %v633
        %v635 = vand.u32 %v634, 4294901760
        %636 = vmatpush.msra.mxu0 %v635
        %v637 = vand.u32 %v332, 4294901760
        %v638 = vsub.f32 %v332, %v637
        %v639 = vand.u32 %v638, 4294901760
        %v640 = vsub.f32 %v638, %v639
        %v641 = vand.u32 %v640, 4294901760
        %642 = vmatpush.msra.mxu0 %v641
        %v643 = vand.u32 %v331, 4294901760
        %v644 = vsub.f32 %v331, %v643
        %v645 = vand.u32 %v644, 4294901760
        %v646 = vsub.f32 %v644, %v645
        %v647 = vand.u32 %v646, 4294901760
        %648 = vmatpush.msra.mxu0 %v647
        %v649 = vand.u32 %v330, 4294901760
        %v650 = vsub.f32 %v330, %v649
        %v651 = vand.u32 %v650, 4294901760
        %v652 = vsub.f32 %v650, %v651
        %v653 = vand.u32 %v652, 4294901760
        %654 = vmatpush.msra.mxu0 %v653
        %v655 = vand.u32 %v329, 4294901760
        %v656 = vsub.f32 %v329, %v655
        %v657 = vand.u32 %v656, 4294901760
        %v658 = vsub.f32 %v656, %v657
        %v659 = vand.u32 %v658, 4294901760
        %660 = vmatpush.msra.mxu0 %v659
        %v661 = vand.u32 %v328, 4294901760
        %v662 = vsub.f32 %v328, %v661
        %v663 = vand.u32 %v662, 4294901760
        %v664 = vsub.f32 %v662, %v663
        %v665 = vand.u32 %v664, 4294901760
        %666 = vmatpush.msra.mxu0 %v665
        %v667 = vand.u32 %v327, 4294901760
        %v668 = vsub.f32 %v327, %v667
        %v669 = vand.u32 %v668, 4294901760
        %v670 = vsub.f32 %v668, %v669
        %v671 = vand.u32 %v670, 4294901760
        %672 = vmatpush.msra.mxu0 %v671
        %v673 = vand.u32 %v326, 4294901760
        %v674 = vsub.f32 %v326, %v673
        %v675 = vand.u32 %v674, 4294901760
        %v676 = vsub.f32 %v674, %v675
        %v677 = vand.u32 %v676, 4294901760
        %678 = vmatpush.msra.mxu0 %v677
        %v679 = vand.u32 %v358, 4294901760
        %680 = vmatmul.f32.gmra.mxu0 %v679
        %v681 = vpop.f32.mrf.mxu0
        %v682 = vadd.f32 %v461, %v681
        %v683 = vand.u32 %v359, 4294901760
        %684 = vmatmul.f32.gmra.mxu0 %v683
        %v685 = vpop.f32.mrf.mxu0
        %v686 = vadd.f32 %v469, %v685
        %v687 = vand.u32 %v360, 4294901760
        %688 = vmatmul.f32.gmra.mxu0 %v687
        %v689 = vpop.f32.mrf.mxu0
        %v690 = vadd.f32 %v477, %v689
        %v691 = vand.u32 %v361, 4294901760
        %692 = vmatmul.f32.gmra.mxu0 %v691
        %v693 = vpop.f32.mrf.mxu0
        %v694 = vadd.f32 %v485, %v693
        %v695 = vand.u32 %v362, 4294901760
        %696 = vmatmul.f32.gmra.mxu0 %v695
        %v697 = vpop.f32.mrf.mxu0
        %v698 = vadd.f32 %v493, %v697
        %v699 = vand.u32 %v363, 4294901760
        %700 = vmatmul.f32.gmra.mxu0 %v699
        %v701 = vpop.f32.mrf.mxu0
        %v702 = vadd.f32 %v501, %v701
        %v703 = vand.u32 %v364, 4294901760
        %704 = vmatmul.f32.gmra.mxu0 %v703
        %v705 = vpop.f32.mrf.mxu0
        %v706 = vadd.f32 %v509, %v705
        %v707 = vand.u32 %v365, 4294901760
        %708 = vmatmul.f32.gmra.mxu0 %v707
        %v709 = vpop.f32.mrf.mxu0
        %v710 = vadd.f32 %v517, %v709
        %v711 = vand.u32 %v366, 4294901760
        %712 = vmatmul.f32.gmra.mxu0 %v711
        %v713 = vpop.f32.mrf.mxu0
        %v714 = vadd.f32 %v525, %v713
        %v715 = vand.u32 %v367, 4294901760
        %716 = vmatmul.f32.gmra.mxu0 %v715
        %v717 = vpop.f32.mrf.mxu0
        %v718 = vadd.f32 %v533, %v717
        %v719 = vand.u32 %v368, 4294901760
        %720 = vmatmul.f32.gmra.mxu0 %v719
        %v721 = vpop.f32.mrf.mxu0
        %v722 = vadd.f32 %v541, %v721
        %v723 = vand.u32 %v369, 4294901760
        %724 = vmatmul.f32.gmra.mxu0 %v723
        %v725 = vpop.f32.mrf.mxu0
        %v726 = vadd.f32 %v549, %v725
        %v727 = vand.u32 %v370, 4294901760
        %728 = vmatmul.f32.gmra.mxu0 %v727
        %v729 = vpop.f32.mrf.mxu0
        %v730 = vadd.f32 %v557, %v729
        %v731 = vand.u32 %v371, 4294901760
        %732 = vmatmul.f32.gmra.mxu0 %v731
        %v733 = vpop.f32.mrf.mxu0
        %v734 = vadd.f32 %v565, %v733
        %v735 = vand.u32 %v372, 4294901760
        %736 = vmatmul.f32.gmra.mxu0 %v735
        %v737 = vpop.f32.mrf.mxu0
        %v738 = vadd.f32 %v573, %v737
        %v739 = vand.u32 %v373, 4294901760
        %740 = vmatmul.f32.gmra.mxu0 %v739
        %v741 = vpop.f32.mrf.mxu0
        %v742 = vadd.f32 %v581, %v741
        %743 = vdwg.mxu0
        %v744 = vand.u32 %v341, 4294901760
        %v745 = vsub.f32 %v341, %v744
        %746 = vmatpush.msra.mxu0 %v745
        %v747 = vand.u32 %v340, 4294901760
        %v748 = vsub.f32 %v340, %v747
        %749 = vmatpush.msra.mxu0 %v748
        %v750 = vand.u32 %v339, 4294901760
        %v751 = vsub.f32 %v339, %v750
        %752 = vmatpush.msra.mxu0 %v751
        %v753 = vand.u32 %v338, 4294901760
        %v754 = vsub.f32 %v338, %v753
        %755 = vmatpush.msra.mxu0 %v754
        %v756 = vand.u32 %v337, 4294901760
        %v757 = vsub.f32 %v337, %v756
        %758 = vmatpush.msra.mxu0 %v757
        %v759 = vand.u32 %v336, 4294901760
        %v760 = vsub.f32 %v336, %v759
        %761 = vmatpush.msra.mxu0 %v760
        %v762 = vand.u32 %v335, 4294901760
        %v763 = vsub.f32 %v335, %v762
        %764 = vmatpush.msra.mxu0 %v763
        %v765 = vand.u32 %v334, 4294901760
        %v766 = vsub.f32 %v334, %v765
        %767 = vmatpush.msra.mxu0 %v766
        %v768 = vand.u32 %v333, 4294901760
        %v769 = vsub.f32 %v333, %v768
        %770 = vmatpush.msra.mxu0 %v769
        %v771 = vand.u32 %v332, 4294901760
        %v772 = vsub.f32 %v332, %v771
        %773 = vmatpush.msra.mxu0 %v772
        %v774 = vand.u32 %v331, 4294901760
        %v775 = vsub.f32 %v331, %v774
        %776 = vmatpush.msra.mxu0 %v775
        %v777 = vand.u32 %v330, 4294901760
        %v778 = vsub.f32 %v330, %v777
        %779 = vmatpush.msra.mxu0 %v778
        %v780 = vand.u32 %v329, 4294901760
        %v781 = vsub.f32 %v329, %v780
        %782 = vmatpush.msra.mxu0 %v781
        %v783 = vand.u32 %v328, 4294901760
        %v784 = vsub.f32 %v328, %v783
        %785 = vmatpush.msra.mxu0 %v784
        %v786 = vand.u32 %v327, 4294901760
        %v787 = vsub.f32 %v327, %v786
        %788 = vmatpush.msra.mxu0 %v787
        %v789 = vand.u32 %v326, 4294901760
        %v790 = vsub.f32 %v326, %v789
        %791 = vmatpush.msra.mxu0 %v790
        %v792 = vand.u32 %v358, 4294901760
        %v793 = vsub.f32 %v358, %v792
        %794 = vmatmul.f32.gmra.mxu0 %v793
        %v795 = vpop.f32.mrf.mxu0
        %v796 = vadd.f32 %v682, %v795
        %v797 = vand.u32 %v359, 4294901760
        %v798 = vsub.f32 %v359, %v797
        %799 = vmatmul.f32.gmra.mxu0 %v798
        %v800 = vpop.f32.mrf.mxu0
        %v801 = vadd.f32 %v686, %v800
        %v802 = vand.u32 %v360, 4294901760
        %v803 = vsub.f32 %v360, %v802
        %804 = vmatmul.f32.gmra.mxu0 %v803
        %v805 = vpop.f32.mrf.mxu0
        %v806 = vadd.f32 %v690, %v805
        %v807 = vand.u32 %v361, 4294901760
        %v808 = vsub.f32 %v361, %v807
        %809 = vmatmul.f32.gmra.mxu0 %v808
        %v810 = vpop.f32.mrf.mxu0
        %v811 = vadd.f32 %v694, %v810
        %v812 = vand.u32 %v362, 4294901760
        %v813 = vsub.f32 %v362, %v812
        %814 = vmatmul.f32.gmra.mxu0 %v813
        %v815 = vpop.f32.mrf.mxu0
        %v816 = vadd.f32 %v698, %v815
        %v817 = vand.u32 %v363, 4294901760
        %v818 = vsub.f32 %v363, %v817
        %819 = vmatmul.f32.gmra.mxu0 %v818
        %v820 = vpop.f32.mrf.mxu0
        %v821 = vadd.f32 %v702, %v820
        %v822 = vand.u32 %v364, 4294901760
        %v823 = vsub.f32 %v364, %v822
        %824 = vmatmul.f32.gmra.mxu0 %v823
        %v825 = vpop.f32.mrf.mxu0
        %v826 = vadd.f32 %v706, %v825
        %v827 = vand.u32 %v365, 4294901760
        %v828 = vsub.f32 %v365, %v827
        %829 = vmatmul.f32.gmra.mxu0 %v828
        %v830 = vpop.f32.mrf.mxu0
        %v831 = vadd.f32 %v710, %v830
        %v832 = vand.u32 %v366, 4294901760
        %v833 = vsub.f32 %v366, %v832
        %834 = vmatmul.f32.gmra.mxu0 %v833
        %v835 = vpop.f32.mrf.mxu0
        %v836 = vadd.f32 %v714, %v835
        %v837 = vand.u32 %v367, 4294901760
        %v838 = vsub.f32 %v367, %v837
        %839 = vmatmul.f32.gmra.mxu0 %v838
        %v840 = vpop.f32.mrf.mxu0
        %v841 = vadd.f32 %v718, %v840
        %v842 = vand.u32 %v368, 4294901760
        %v843 = vsub.f32 %v368, %v842
        %844 = vmatmul.f32.gmra.mxu0 %v843
        %v845 = vpop.f32.mrf.mxu0
        %v846 = vadd.f32 %v722, %v845
        %v847 = vand.u32 %v369, 4294901760
        %v848 = vsub.f32 %v369, %v847
        %849 = vmatmul.f32.gmra.mxu0 %v848
        %v850 = vpop.f32.mrf.mxu0
        %v851 = vadd.f32 %v726, %v850
        %v852 = vand.u32 %v370, 4294901760
        %v853 = vsub.f32 %v370, %v852
        %854 = vmatmul.f32.gmra.mxu0 %v853
        %v855 = vpop.f32.mrf.mxu0
        %v856 = vadd.f32 %v730, %v855
        %v857 = vand.u32 %v371, 4294901760
        %v858 = vsub.f32 %v371, %v857
        %859 = vmatmul.f32.gmra.mxu0 %v858
        %v860 = vpop.f32.mrf.mxu0
        %v861 = vadd.f32 %v734, %v860
        %v862 = vand.u32 %v372, 4294901760
        %v863 = vsub.f32 %v372, %v862
        %864 = vmatmul.f32.gmra.mxu0 %v863
        %v865 = vpop.f32.mrf.mxu0
        %v866 = vadd.f32 %v738, %v865
        %v867 = vand.u32 %v373, 4294901760
        %v868 = vsub.f32 %v373, %v867
        %869 = vmatmul.f32.gmra.mxu0 %v868
        %v870 = vpop.f32.mrf.mxu0
        %v871 = vadd.f32 %v742, %v870
        %872 = vdwg.mxu0
        %v873 = vand.u32 %v341, 4294901760
        %874 = vmatpush.msra.mxu0 %v873
        %v875 = vand.u32 %v340, 4294901760
        %876 = vmatpush.msra.mxu0 %v875
        %v877 = vand.u32 %v339, 4294901760
        %878 = vmatpush.msra.mxu0 %v877
        %v879 = vand.u32 %v338, 4294901760
        %880 = vmatpush.msra.mxu0 %v879
        %v881 = vand.u32 %v337, 4294901760
        %882 = vmatpush.msra.mxu0 %v881
        %v883 = vand.u32 %v336, 4294901760
        %884 = vmatpush.msra.mxu0 %v883
        %v885 = vand.u32 %v335, 4294901760
        %886 = vmatpush.msra.mxu0 %v885
        %v887 = vand.u32 %v334, 4294901760
        %888 = vmatpush.msra.mxu0 %v887
        %v889 = vand.u32 %v333, 4294901760
        %890 = vmatpush.msra.mxu0 %v889
        %v891 = vand.u32 %v332, 4294901760
        %892 = vmatpush.msra.mxu0 %v891
        %v893 = vand.u32 %v331, 4294901760
        %894 = vmatpush.msra.mxu0 %v893
        %v895 = vand.u32 %v330, 4294901760
        %896 = vmatpush.msra.mxu0 %v895
        %v897 = vand.u32 %v329, 4294901760
        %898 = vmatpush.msra.mxu0 %v897
        %v899 = vand.u32 %v328, 4294901760
        %900 = vmatpush.msra.mxu0 %v899
        %v901 = vand.u32 %v327, 4294901760
        %902 = vmatpush.msra.mxu0 %v901
        %v903 = vand.u32 %v326, 4294901760
        %904 = vmatpush.msra.mxu0 %v903
        %v905 = vand.u32 %v358, 4294901760
        %v906 = vsub.f32 %v358, %v905
        %v907 = vand.u32 %v906, 4294901760
        %908 = vmatmul.f32.gmra.mxu0 %v907
        %v909 = vpop.f32.mrf.mxu0
        %v910 = vadd.f32 %v796, %v909
        %v911 = vand.u32 %v359, 4294901760
        %v912 = vsub.f32 %v359, %v911
        %v913 = vand.u32 %v912, 4294901760
        %914 = vmatmul.f32.gmra.mxu0 %v913
        %v915 = vpop.f32.mrf.mxu0
        %v916 = vadd.f32 %v801, %v915
        %v917 = vand.u32 %v360, 4294901760
        %v918 = vsub.f32 %v360, %v917
        %v919 = vand.u32 %v918, 4294901760
        %920 = vmatmul.f32.gmra.mxu0 %v919
        %v921 = vpop.f32.mrf.mxu0
        %v922 = vadd.f32 %v806, %v921
        %v923 = vand.u32 %v361, 4294901760
        %v924 = vsub.f32 %v361, %v923
        %v925 = vand.u32 %v924, 4294901760
        %926 = vmatmul.f32.gmra.mxu0 %v925
        %v927 = vpop.f32.mrf.mxu0
        %v928 = vadd.f32 %v811, %v927
        %v929 = vand.u32 %v362, 4294901760
        %v930 = vsub.f32 %v362, %v929
        %v931 = vand.u32 %v930, 4294901760
        %932 = vmatmul.f32.gmra.mxu0 %v931
        %v933 = vpop.f32.mrf.mxu0
        %v934 = vadd.f32 %v816, %v933
        %v935 = vand.u32 %v363, 4294901760
        %v936 = vsub.f32 %v363, %v935
        %v937 = vand.u32 %v936, 4294901760
        %938 = vmatmul.f32.gmra.mxu0 %v937
        %v939 = vpop.f32.mrf.mxu0
        %v940 = vadd.f32 %v821, %v939
        %v941 = vand.u32 %v364, 4294901760
        %v942 = vsub.f32 %v364, %v941
        %v943 = vand.u32 %v942, 4294901760
        %944 = vmatmul.f32.gmra.mxu0 %v943
        %v945 = vpop.f32.mrf.mxu0
        %v946 = vadd.f32 %v826, %v945
        %v947 = vand.u32 %v365, 4294901760
        %v948 = vsub.f32 %v365, %v947
        %v949 = vand.u32 %v948, 4294901760
        %950 = vmatmul.f32.gmra.mxu0 %v949
        %v951 = vpop.f32.mrf.mxu0
        %v952 = vadd.f32 %v831, %v951
        %v953 = vand.u32 %v366, 4294901760
        %v954 = vsub.f32 %v366, %v953
        %v955 = vand.u32 %v954, 4294901760
        %956 = vmatmul.f32.gmra.mxu0 %v955
        %v957 = vpop.f32.mrf.mxu0
        %v958 = vadd.f32 %v836, %v957
        %v959 = vand.u32 %v367, 4294901760
        %v960 = vsub.f32 %v367, %v959
        %v961 = vand.u32 %v960, 4294901760
        %962 = vmatmul.f32.gmra.mxu0 %v961
        %v963 = vpop.f32.mrf.mxu0
        %v964 = vadd.f32 %v841, %v963
        %v965 = vand.u32 %v368, 4294901760
        %v966 = vsub.f32 %v368, %v965
        %v967 = vand.u32 %v966, 4294901760
        %968 = vmatmul.f32.gmra.mxu0 %v967
        %v969 = vpop.f32.mrf.mxu0
        %v970 = vadd.f32 %v846, %v969
        %v971 = vand.u32 %v369, 4294901760
        %v972 = vsub.f32 %v369, %v971
        %v973 = vand.u32 %v972, 4294901760
        %974 = vmatmul.f32.gmra.mxu0 %v973
        %v975 = vpop.f32.mrf.mxu0
        %v976 = vadd.f32 %v851, %v975
        %v977 = vand.u32 %v370, 4294901760
        %v978 = vsub.f32 %v370, %v977
        %v979 = vand.u32 %v978, 4294901760
        %980 = vmatmul.f32.gmra.mxu0 %v979
        %v981 = vpop.f32.mrf.mxu0
        %v982 = vadd.f32 %v856, %v981
        %v983 = vand.u32 %v371, 4294901760
        %v984 = vsub.f32 %v371, %v983
        %v985 = vand.u32 %v984, 4294901760
        %986 = vmatmul.f32.gmra.mxu0 %v985
        %v987 = vpop.f32.mrf.mxu0
        %v988 = vadd.f32 %v861, %v987
        %v989 = vand.u32 %v372, 4294901760
        %v990 = vsub.f32 %v372, %v989
        %v991 = vand.u32 %v990, 4294901760
        %992 = vmatmul.f32.gmra.mxu0 %v991
        %v993 = vpop.f32.mrf.mxu0
        %v994 = vadd.f32 %v866, %v993
        %v995 = vand.u32 %v373, 4294901760
        %v996 = vsub.f32 %v373, %v995
        %v997 = vand.u32 %v996, 4294901760
        %998 = vmatmul.f32.gmra.mxu0 %v997
        %v999 = vpop.f32.mrf.mxu0
        %v1000 = vadd.f32 %v871, %v999
        %1001 = vdwg.mxu0
        %v1002 = vand.u32 %v341, 4294901760
        %v1003 = vsub.f32 %v341, %v1002
        %v1004 = vand.u32 %v1003, 4294901760
        %1005 = vmatpush.msra.mxu0 %v1004
        %v1006 = vand.u32 %v340, 4294901760
        %v1007 = vsub.f32 %v340, %v1006
        %v1008 = vand.u32 %v1007, 4294901760
        %1009 = vmatpush.msra.mxu0 %v1008
        %v1010 = vand.u32 %v339, 4294901760
        %v1011 = vsub.f32 %v339, %v1010
        %v1012 = vand.u32 %v1011, 4294901760
        %1013 = vmatpush.msra.mxu0 %v1012
        %v1014 = vand.u32 %v338, 4294901760
        %v1015 = vsub.f32 %v338, %v1014
        %v1016 = vand.u32 %v1015, 4294901760
        %1017 = vmatpush.msra.mxu0 %v1016
        %v1018 = vand.u32 %v337, 4294901760
        %v1019 = vsub.f32 %v337, %v1018
        %v1020 = vand.u32 %v1019, 4294901760
        %1021 = vmatpush.msra.mxu0 %v1020
        %v1022 = vand.u32 %v336, 4294901760
        %v1023 = vsub.f32 %v336, %v1022
        %v1024 = vand.u32 %v1023, 4294901760
        %1025 = vmatpush.msra.mxu0 %v1024
        %v1026 = vand.u32 %v335, 4294901760
        %v1027 = vsub.f32 %v335, %v1026
        %v1028 = vand.u32 %v1027, 4294901760
        %1029 = vmatpush.msra.mxu0 %v1028
        %v1030 = vand.u32 %v334, 4294901760
        %v1031 = vsub.f32 %v334, %v1030
        %v1032 = vand.u32 %v1031, 4294901760
        %1033 = vmatpush.msra.mxu0 %v1032
        %v1034 = vand.u32 %v333, 4294901760
        %v1035 = vsub.f32 %v333, %v1034
        %v1036 = vand.u32 %v1035, 4294901760
        %1037 = vmatpush.msra.mxu0 %v1036
        %v1038 = vand.u32 %v332, 4294901760
        %v1039 = vsub.f32 %v332, %v1038
        %v1040 = vand.u32 %v1039, 4294901760
        %1041 = vmatpush.msra.mxu0 %v1040
        %v1042 = vand.u32 %v331, 4294901760
        %v1043 = vsub.f32 %v331, %v1042
        %v1044 = vand.u32 %v1043, 4294901760
        %1045 = vmatpush.msra.mxu0 %v1044
        %v1046 = vand.u32 %v330, 4294901760
        %v1047 = vsub.f32 %v330, %v1046
        %v1048 = vand.u32 %v1047, 4294901760
        %1049 = vmatpush.msra.mxu0 %v1048
        %v1050 = vand.u32 %v329, 4294901760
        %v1051 = vsub.f32 %v329, %v1050
        %v1052 = vand.u32 %v1051, 4294901760
        %1053 = vmatpush.msra.mxu0 %v1052
        %v1054 = vand.u32 %v328, 4294901760
        %v1055 = vsub.f32 %v328, %v1054
        %v1056 = vand.u32 %v1055, 4294901760
        %1057 = vmatpush.msra.mxu0 %v1056
        %v1058 = vand.u32 %v327, 4294901760
        %v1059 = vsub.f32 %v327, %v1058
        %v1060 = vand.u32 %v1059, 4294901760
        %1061 = vmatpush.msra.mxu0 %v1060
        %v1062 = vand.u32 %v326, 4294901760
        %v1063 = vsub.f32 %v326, %v1062
        %v1064 = vand.u32 %v1063, 4294901760
        %1065 = vmatpush.msra.mxu0 %v1064
        %v1066 = vand.u32 %v358, 4294901760
        %1067 = vmatmul.f32.gmra.mxu0 %v1066
        %v1068 = vpop.f32.mrf.mxu0
        %v1069 = vadd.f32 %v910, %v1068
        %v1070 = vand.u32 %v359, 4294901760
        %1071 = vmatmul.f32.gmra.mxu0 %v1070
        %v1072 = vpop.f32.mrf.mxu0
        %v1073 = vadd.f32 %v916, %v1072
        %v1074 = vand.u32 %v360, 4294901760
        %1075 = vmatmul.f32.gmra.mxu0 %v1074
        %v1076 = vpop.f32.mrf.mxu0
        %v1077 = vadd.f32 %v922, %v1076
        %v1078 = vand.u32 %v361, 4294901760
        %1079 = vmatmul.f32.gmra.mxu0 %v1078
        %v1080 = vpop.f32.mrf.mxu0
        %v1081 = vadd.f32 %v928, %v1080
        %v1082 = vand.u32 %v362, 4294901760
        %1083 = vmatmul.f32.gmra.mxu0 %v1082
        %v1084 = vpop.f32.mrf.mxu0
        %v1085 = vadd.f32 %v934, %v1084
        %v1086 = vand.u32 %v363, 4294901760
        %1087 = vmatmul.f32.gmra.mxu0 %v1086
        %v1088 = vpop.f32.mrf.mxu0
        %v1089 = vadd.f32 %v940, %v1088
        %v1090 = vand.u32 %v364, 4294901760
        %1091 = vmatmul.f32.gmra.mxu0 %v1090
        %v1092 = vpop.f32.mrf.mxu0
        %v1093 = vadd.f32 %v946, %v1092
        %v1094 = vand.u32 %v365, 4294901760
        %1095 = vmatmul.f32.gmra.mxu0 %v1094
        %v1096 = vpop.f32.mrf.mxu0
        %v1097 = vadd.f32 %v952, %v1096
        %v1098 = vand.u32 %v366, 4294901760
        %1099 = vmatmul.f32.gmra.mxu0 %v1098
        %v1100 = vpop.f32.mrf.mxu0
        %v1101 = vadd.f32 %v958, %v1100
        %v1102 = vand.u32 %v367, 4294901760
        %1103 = vmatmul.f32.gmra.mxu0 %v1102
        %v1104 = vpop.f32.mrf.mxu0
        %v1105 = vadd.f32 %v964, %v1104
        %v1106 = vand.u32 %v368, 4294901760
        %1107 = vmatmul.f32.gmra.mxu0 %v1106
        %v1108 = vpop.f32.mrf.mxu0
        %v1109 = vadd.f32 %v970, %v1108
        %v1110 = vand.u32 %v369, 4294901760
        %1111 = vmatmul.f32.gmra.mxu0 %v1110
        %v1112 = vpop.f32.mrf.mxu0
        %v1113 = vadd.f32 %v976, %v1112
        %v1114 = vand.u32 %v370, 4294901760
        %1115 = vmatmul.f32.gmra.mxu0 %v1114
        %v1116 = vpop.f32.mrf.mxu0
        %v1117 = vadd.f32 %v982, %v1116
        %v1118 = vand.u32 %v371, 4294901760
        %1119 = vmatmul.f32.gmra.mxu0 %v1118
        %v1120 = vpop.f32.mrf.mxu0
        %v1121 = vadd.f32 %v988, %v1120
        %v1122 = vand.u32 %v372, 4294901760
        %1123 = vmatmul.f32.gmra.mxu0 %v1122
        %v1124 = vpop.f32.mrf.mxu0
        %v1125 = vadd.f32 %v994, %v1124
        %v1126 = vand.u32 %v373, 4294901760
        %1127 = vmatmul.f32.gmra.mxu0 %v1126
        %v1128 = vpop.f32.mrf.mxu0
        %v1129 = vadd.f32 %v1000, %v1128
        %1130 = vdwg.mxu0
        %v1131 = vand.u32 %v341, 4294901760
        %1132 = vmatpush.msra.mxu0 %v1131
        %v1133 = vand.u32 %v340, 4294901760
        %1134 = vmatpush.msra.mxu0 %v1133
        %v1135 = vand.u32 %v339, 4294901760
        %1136 = vmatpush.msra.mxu0 %v1135
        %v1137 = vand.u32 %v338, 4294901760
        %1138 = vmatpush.msra.mxu0 %v1137
        %v1139 = vand.u32 %v337, 4294901760
        %1140 = vmatpush.msra.mxu0 %v1139
        %v1141 = vand.u32 %v336, 4294901760
        %1142 = vmatpush.msra.mxu0 %v1141
        %v1143 = vand.u32 %v335, 4294901760
        %1144 = vmatpush.msra.mxu0 %v1143
        %v1145 = vand.u32 %v334, 4294901760
        %1146 = vmatpush.msra.mxu0 %v1145
        %v1147 = vand.u32 %v333, 4294901760
        %1148 = vmatpush.msra.mxu0 %v1147
        %v1149 = vand.u32 %v332, 4294901760
        %1150 = vmatpush.msra.mxu0 %v1149
        %v1151 = vand.u32 %v331, 4294901760
        %1152 = vmatpush.msra.mxu0 %v1151
        %v1153 = vand.u32 %v330, 4294901760
        %1154 = vmatpush.msra.mxu0 %v1153
        %v1155 = vand.u32 %v329, 4294901760
        %1156 = vmatpush.msra.mxu0 %v1155
        %v1157 = vand.u32 %v328, 4294901760
        %1158 = vmatpush.msra.mxu0 %v1157
        %v1159 = vand.u32 %v327, 4294901760
        %1160 = vmatpush.msra.mxu0 %v1159
        %v1161 = vand.u32 %v326, 4294901760
        %1162 = vmatpush.msra.mxu0 %v1161
        %v1163 = vand.u32 %v358, 4294901760
        %1164 = vmatmul.f32.gmra.mxu0 %v1163
        %v1165 = vpop.f32.mrf.mxu0
        %v1166 = vadd.f32 %v1069, %v1165
        %v1167 = vand.u32 %v359, 4294901760
        %1168 = vmatmul.f32.gmra.mxu0 %v1167
        %v1169 = vpop.f32.mrf.mxu0
        %v1170 = vadd.f32 %v1073, %v1169
        %v1171 = vand.u32 %v360, 4294901760
        %1172 = vmatmul.f32.gmra.mxu0 %v1171
        %v1173 = vpop.f32.mrf.mxu0
        %v1174 = vadd.f32 %v1077, %v1173
        %v1175 = vand.u32 %v361, 4294901760
        %1176 = vmatmul.f32.gmra.mxu0 %v1175
        %v1177 = vpop.f32.mrf.mxu0
        %v1178 = vadd.f32 %v1081, %v1177
        %v1179 = vand.u32 %v362, 4294901760
        %1180 = vmatmul.f32.gmra.mxu0 %v1179
        %v1181 = vpop.f32.mrf.mxu0
        %v1182 = vadd.f32 %v1085, %v1181
        %v1183 = vand.u32 %v363, 4294901760
        %1184 = vmatmul.f32.gmra.mxu0 %v1183
        %v1185 = vpop.f32.mrf.mxu0
        %v1186 = vadd.f32 %v1089, %v1185
        %v1187 = vand.u32 %v364, 4294901760
        %1188 = vmatmul.f32.gmra.mxu0 %v1187
        %v1189 = vpop.f32.mrf.mxu0
        %v1190 = vadd.f32 %v1093, %v1189
        %v1191 = vand.u32 %v365, 4294901760
        %1192 = vmatmul.f32.gmra.mxu0 %v1191
        %v1193 = vpop.f32.mrf.mxu0
        %v1194 = vadd.f32 %v1097, %v1193
        %v1195 = vand.u32 %v366, 4294901760
        %1196 = vmatmul.f32.gmra.mxu0 %v1195
        %v1197 = vpop.f32.mrf.mxu0
        %v1198 = vadd.f32 %v1101, %v1197
        %v1199 = vand.u32 %v367, 4294901760
        %1200 = vmatmul.f32.gmra.mxu0 %v1199
        %v1201 = vpop.f32.mrf.mxu0
        %v1202 = vadd.f32 %v1105, %v1201
        %v1203 = vand.u32 %v368, 4294901760
        %1204 = vmatmul.f32.gmra.mxu0 %v1203
        %v1205 = vpop.f32.mrf.mxu0
        %v1206 = vadd.f32 %v1109, %v1205
        %v1207 = vand.u32 %v369, 4294901760
        %1208 = vmatmul.f32.gmra.mxu0 %v1207
        %v1209 = vpop.f32.mrf.mxu0
        %v1210 = vadd.f32 %v1113, %v1209
        %v1211 = vand.u32 %v370, 4294901760
        %1212 = vmatmul.f32.gmra.mxu0 %v1211
        %v1213 = vpop.f32.mrf.mxu0
        %v1214 = vadd.f32 %v1117, %v1213
        %v1215 = vand.u32 %v371, 4294901760
        %1216 = vmatmul.f32.gmra.mxu0 %v1215
        %v1217 = vpop.f32.mrf.mxu0
        %v1218 = vadd.f32 %v1121, %v1217
        %v1219 = vand.u32 %v372, 4294901760
        %1220 = vmatmul.f32.gmra.mxu0 %v1219
        %v1221 = vpop.f32.mrf.mxu0
        %v1222 = vadd.f32 %v1125, %v1221
        %v1223 = vand.u32 %v373, 4294901760
        %1224 = vmatmul.f32.gmra.mxu0 %v1223
        %v1225 = vpop.f32.mrf.mxu0
        %v1226 = vadd.f32 %v1129, %v1225
        %1227 = vdwg.mxu0
        %v1228 = vand.u32 %v357, 4294901760
        %1229 = vmatpush.msra.mxu0 %v1228
        %v1230 = vand.u32 %v356, 4294901760
        %1231 = vmatpush.msra.mxu0 %v1230
        %v1232 = vand.u32 %v355, 4294901760
        %1233 = vmatpush.msra.mxu0 %v1232
        %v1234 = vand.u32 %v354, 4294901760
        %1235 = vmatpush.msra.mxu0 %v1234
        %v1236 = vand.u32 %v353, 4294901760
        %1237 = vmatpush.msra.mxu0 %v1236
        %v1238 = vand.u32 %v352, 4294901760
        %1239 = vmatpush.msra.mxu0 %v1238
        %v1240 = vand.u32 %v351, 4294901760
        %1241 = vmatpush.msra.mxu0 %v1240
        %v1242 = vand.u32 %v350, 4294901760
        %1243 = vmatpush.msra.mxu0 %v1242
        %v1244 = vand.u32 %v349, 4294901760
        %1245 = vmatpush.msra.mxu0 %v1244
        %v1246 = vand.u32 %v348, 4294901760
        %1247 = vmatpush.msra.mxu0 %v1246
        %v1248 = vand.u32 %v347, 4294901760
        %1249 = vmatpush.msra.mxu0 %v1248
        %v1250 = vand.u32 %v346, 4294901760
        %1251 = vmatpush.msra.mxu0 %v1250
        %v1252 = vand.u32 %v345, 4294901760
        %1253 = vmatpush.msra.mxu0 %v1252
        %v1254 = vand.u32 %v344, 4294901760
        %1255 = vmatpush.msra.mxu0 %v1254
        %v1256 = vand.u32 %v343, 4294901760
        %1257 = vmatpush.msra.mxu0 %v1256
        %v1258 = vand.u32 %v342, 4294901760
        %1259 = vmatpush.msra.mxu0 %v1258
        %v1260 = vand.u32 %v374, 4294901760
        %v1261 = vsub.f32 %v374, %v1260
        %v1262 = vand.u32 %v1261, 4294901760
        %v1263 = vsub.f32 %v1261, %v1262
        %v1264 = vand.u32 %v1263, 4294901760
        %1265 = vmatmul.f32.gmra.mxu0 %v1264
        %v1266 = vpop.f32.mrf.mxu0
        %v1267 = vadd.f32 0.0, %v1266
        %v1268 = vand.u32 %v375, 4294901760
        %v1269 = vsub.f32 %v375, %v1268
        %v1270 = vand.u32 %v1269, 4294901760
        %v1271 = vsub.f32 %v1269, %v1270
        %v1272 = vand.u32 %v1271, 4294901760
        %1273 = vmatmul.f32.gmra.mxu0 %v1272
        %v1274 = vpop.f32.mrf.mxu0
        %v1275 = vadd.f32 0.0, %v1274
        %v1276 = vand.u32 %v376, 4294901760
        %v1277 = vsub.f32 %v376, %v1276
        %v1278 = vand.u32 %v1277, 4294901760
        %v1279 = vsub.f32 %v1277, %v1278
        %v1280 = vand.u32 %v1279, 4294901760
        %1281 = vmatmul.f32.gmra.mxu0 %v1280
        %v1282 = vpop.f32.mrf.mxu0
        %v1283 = vadd.f32 0.0, %v1282
        %v1284 = vand.u32 %v377, 4294901760
        %v1285 = vsub.f32 %v377, %v1284
        %v1286 = vand.u32 %v1285, 4294901760
        %v1287 = vsub.f32 %v1285, %v1286
        %v1288 = vand.u32 %v1287, 4294901760
        %1289 = vmatmul.f32.gmra.mxu0 %v1288
        %v1290 = vpop.f32.mrf.mxu0
        %v1291 = vadd.f32 0.0, %v1290
        %v1292 = vand.u32 %v378, 4294901760
        %v1293 = vsub.f32 %v378, %v1292
        %v1294 = vand.u32 %v1293, 4294901760
        %v1295 = vsub.f32 %v1293, %v1294
        %v1296 = vand.u32 %v1295, 4294901760
        %1297 = vmatmul.f32.gmra.mxu0 %v1296
        %v1298 = vpop.f32.mrf.mxu0
        %v1299 = vadd.f32 0.0, %v1298
        %v1300 = vand.u32 %v379, 4294901760
        %v1301 = vsub.f32 %v379, %v1300
        %v1302 = vand.u32 %v1301, 4294901760
        %v1303 = vsub.f32 %v1301, %v1302
        %v1304 = vand.u32 %v1303, 4294901760
        %1305 = vmatmul.f32.gmra.mxu0 %v1304
        %v1306 = vpop.f32.mrf.mxu0
        %v1307 = vadd.f32 0.0, %v1306
        %v1308 = vand.u32 %v380, 4294901760
        %v1309 = vsub.f32 %v380, %v1308
        %v1310 = vand.u32 %v1309, 4294901760
        %v1311 = vsub.f32 %v1309, %v1310
        %v1312 = vand.u32 %v1311, 4294901760
        %1313 = vmatmul.f32.gmra.mxu0 %v1312
        %v1314 = vpop.f32.mrf.mxu0
        %v1315 = vadd.f32 0.0, %v1314
        %v1316 = vand.u32 %v381, 4294901760
        %v1317 = vsub.f32 %v381, %v1316
        %v1318 = vand.u32 %v1317, 4294901760
        %v1319 = vsub.f32 %v1317, %v1318
        %v1320 = vand.u32 %v1319, 4294901760
        %1321 = vmatmul.f32.gmra.mxu0 %v1320
        %v1322 = vpop.f32.mrf.mxu0
        %v1323 = vadd.f32 0.0, %v1322
        %v1324 = vand.u32 %v382, 4294901760
        %v1325 = vsub.f32 %v382, %v1324
        %v1326 = vand.u32 %v1325, 4294901760
        %v1327 = vsub.f32 %v1325, %v1326
        %v1328 = vand.u32 %v1327, 4294901760
        %1329 = vmatmul.f32.gmra.mxu0 %v1328
        %v1330 = vpop.f32.mrf.mxu0
        %v1331 = vadd.f32 0.0, %v1330
        %v1332 = vand.u32 %v383, 4294901760
        %v1333 = vsub.f32 %v383, %v1332
        %v1334 = vand.u32 %v1333, 4294901760
        %v1335 = vsub.f32 %v1333, %v1334
        %v1336 = vand.u32 %v1335, 4294901760
        %1337 = vmatmul.f32.gmra.mxu0 %v1336
        %v1338 = vpop.f32.mrf.mxu0
        %v1339 = vadd.f32 0.0, %v1338
        %v1340 = vand.u32 %v384, 4294901760
        %v1341 = vsub.f32 %v384, %v1340
        %v1342 = vand.u32 %v1341, 4294901760
        %v1343 = vsub.f32 %v1341, %v1342
        %v1344 = vand.u32 %v1343, 4294901760
        %1345 = vmatmul.f32.gmra.mxu0 %v1344
        %v1346 = vpop.f32.mrf.mxu0
        %v1347 = vadd.f32 0.0, %v1346
        %v1348 = vand.u32 %v385, 4294901760
        %v1349 = vsub.f32 %v385, %v1348
        %v1350 = vand.u32 %v1349, 4294901760
        %v1351 = vsub.f32 %v1349, %v1350
        %v1352 = vand.u32 %v1351, 4294901760
        %1353 = vmatmul.f32.gmra.mxu0 %v1352
        %v1354 = vpop.f32.mrf.mxu0
        %v1355 = vadd.f32 0.0, %v1354
        %v1356 = vand.u32 %v386, 4294901760
        %v1357 = vsub.f32 %v386, %v1356
        %v1358 = vand.u32 %v1357, 4294901760
        %v1359 = vsub.f32 %v1357, %v1358
        %v1360 = vand.u32 %v1359, 4294901760
        %1361 = vmatmul.f32.gmra.mxu0 %v1360
        %v1362 = vpop.f32.mrf.mxu0
        %v1363 = vadd.f32 0.0, %v1362
        %v1364 = vand.u32 %v387, 4294901760
        %v1365 = vsub.f32 %v387, %v1364
        %v1366 = vand.u32 %v1365, 4294901760
        %v1367 = vsub.f32 %v1365, %v1366
        %v1368 = vand.u32 %v1367, 4294901760
        %1369 = vmatmul.f32.gmra.mxu0 %v1368
        %v1370 = vpop.f32.mrf.mxu0
        %v1371 = vadd.f32 0.0, %v1370
        %v1372 = vand.u32 %v388, 4294901760
        %v1373 = vsub.f32 %v388, %v1372
        %v1374 = vand.u32 %v1373, 4294901760
        %v1375 = vsub.f32 %v1373, %v1374
        %v1376 = vand.u32 %v1375, 4294901760
        %1377 = vmatmul.f32.gmra.mxu0 %v1376
        %v1378 = vpop.f32.mrf.mxu0
        %v1379 = vadd.f32 0.0, %v1378
        %v1380 = vand.u32 %v389, 4294901760
        %v1381 = vsub.f32 %v389, %v1380
        %v1382 = vand.u32 %v1381, 4294901760
        %v1383 = vsub.f32 %v1381, %v1382
        %v1384 = vand.u32 %v1383, 4294901760
        %1385 = vmatmul.f32.gmra.mxu0 %v1384
        %v1386 = vpop.f32.mrf.mxu0
        %v1387 = vadd.f32 0.0, %v1386
        %1388 = vdwg.mxu0
        %v1389 = vand.u32 %v357, 4294901760
        %v1390 = vsub.f32 %v357, %v1389
        %v1391 = vand.u32 %v1390, 4294901760
        %v1392 = vsub.f32 %v1390, %v1391
        %v1393 = vand.u32 %v1392, 4294901760
        %1394 = vmatpush.msra.mxu0 %v1393
        %v1395 = vand.u32 %v356, 4294901760
        %v1396 = vsub.f32 %v356, %v1395
        %v1397 = vand.u32 %v1396, 4294901760
        %v1398 = vsub.f32 %v1396, %v1397
        %v1399 = vand.u32 %v1398, 4294901760
        %1400 = vmatpush.msra.mxu0 %v1399
        %v1401 = vand.u32 %v355, 4294901760
        %v1402 = vsub.f32 %v355, %v1401
        %v1403 = vand.u32 %v1402, 4294901760
        %v1404 = vsub.f32 %v1402, %v1403
        %v1405 = vand.u32 %v1404, 4294901760
        %1406 = vmatpush.msra.mxu0 %v1405
        %v1407 = vand.u32 %v354, 4294901760
        %v1408 = vsub.f32 %v354, %v1407
        %v1409 = vand.u32 %v1408, 4294901760
        %v1410 = vsub.f32 %v1408, %v1409
        %v1411 = vand.u32 %v1410, 4294901760
        %1412 = vmatpush.msra.mxu0 %v1411
        %v1413 = vand.u32 %v353, 4294901760
        %v1414 = vsub.f32 %v353, %v1413
        %v1415 = vand.u32 %v1414, 4294901760
        %v1416 = vsub.f32 %v1414, %v1415
        %v1417 = vand.u32 %v1416, 4294901760
        %1418 = vmatpush.msra.mxu0 %v1417
        %v1419 = vand.u32 %v352, 4294901760
        %v1420 = vsub.f32 %v352, %v1419
        %v1421 = vand.u32 %v1420, 4294901760
        %v1422 = vsub.f32 %v1420, %v1421
        %v1423 = vand.u32 %v1422, 4294901760
        %1424 = vmatpush.msra.mxu0 %v1423
        %v1425 = vand.u32 %v351, 4294901760
        %v1426 = vsub.f32 %v351, %v1425
        %v1427 = vand.u32 %v1426, 4294901760
        %v1428 = vsub.f32 %v1426, %v1427
        %v1429 = vand.u32 %v1428, 4294901760
        %1430 = vmatpush.msra.mxu0 %v1429
        %v1431 = vand.u32 %v350, 4294901760
        %v1432 = vsub.f32 %v350, %v1431
        %v1433 = vand.u32 %v1432, 4294901760
        %v1434 = vsub.f32 %v1432, %v1433
        %v1435 = vand.u32 %v1434, 4294901760
        %1436 = vmatpush.msra.mxu0 %v1435
        %v1437 = vand.u32 %v349, 4294901760
        %v1438 = vsub.f32 %v349, %v1437
        %v1439 = vand.u32 %v1438, 4294901760
        %v1440 = vsub.f32 %v1438, %v1439
        %v1441 = vand.u32 %v1440, 4294901760
        %1442 = vmatpush.msra.mxu0 %v1441
        %v1443 = vand.u32 %v348, 4294901760
        %v1444 = vsub.f32 %v348, %v1443
        %v1445 = vand.u32 %v1444, 4294901760
        %v1446 = vsub.f32 %v1444, %v1445
        %v1447 = vand.u32 %v1446, 4294901760
        %1448 = vmatpush.msra.mxu0 %v1447
        %v1449 = vand.u32 %v347, 4294901760
        %v1450 = vsub.f32 %v347, %v1449
        %v1451 = vand.u32 %v1450, 4294901760
        %v1452 = vsub.f32 %v1450, %v1451
        %v1453 = vand.u32 %v1452, 4294901760
        %1454 = vmatpush.msra.mxu0 %v1453
        %v1455 = vand.u32 %v346, 4294901760
        %v1456 = vsub.f32 %v346, %v1455
        %v1457 = vand.u32 %v1456, 4294901760
        %v1458 = vsub.f32 %v1456, %v1457
        %v1459 = vand.u32 %v1458, 4294901760
        %1460 = vmatpush.msra.mxu0 %v1459
        %v1461 = vand.u32 %v345, 4294901760
        %v1462 = vsub.f32 %v345, %v1461
        %v1463 = vand.u32 %v1462, 4294901760
        %v1464 = vsub.f32 %v1462, %v1463
        %v1465 = vand.u32 %v1464, 4294901760
        %1466 = vmatpush.msra.mxu0 %v1465
        %v1467 = vand.u32 %v344, 4294901760
        %v1468 = vsub.f32 %v344, %v1467
        %v1469 = vand.u32 %v1468, 4294901760
        %v1470 = vsub.f32 %v1468, %v1469
        %v1471 = vand.u32 %v1470, 4294901760
        %1472 = vmatpush.msra.mxu0 %v1471
        %v1473 = vand.u32 %v343, 4294901760
        %v1474 = vsub.f32 %v343, %v1473
        %v1475 = vand.u32 %v1474, 4294901760
        %v1476 = vsub.f32 %v1474, %v1475
        %v1477 = vand.u32 %v1476, 4294901760
        %1478 = vmatpush.msra.mxu0 %v1477
        %v1479 = vand.u32 %v342, 4294901760
        %v1480 = vsub.f32 %v342, %v1479
        %v1481 = vand.u32 %v1480, 4294901760
        %v1482 = vsub.f32 %v1480, %v1481
        %v1483 = vand.u32 %v1482, 4294901760
        %1484 = vmatpush.msra.mxu0 %v1483
        %v1485 = vand.u32 %v374, 4294901760
        %1486 = vmatmul.f32.gmra.mxu0 %v1485
        %v1487 = vpop.f32.mrf.mxu0
        %v1488 = vadd.f32 %v1267, %v1487
        %v1489 = vand.u32 %v375, 4294901760
        %1490 = vmatmul.f32.gmra.mxu0 %v1489
        %v1491 = vpop.f32.mrf.mxu0
        %v1492 = vadd.f32 %v1275, %v1491
        %v1493 = vand.u32 %v376, 4294901760
        %1494 = vmatmul.f32.gmra.mxu0 %v1493
        %v1495 = vpop.f32.mrf.mxu0
        %v1496 = vadd.f32 %v1283, %v1495
        %v1497 = vand.u32 %v377, 4294901760
        %1498 = vmatmul.f32.gmra.mxu0 %v1497
        %v1499 = vpop.f32.mrf.mxu0
        %v1500 = vadd.f32 %v1291, %v1499
        %v1501 = vand.u32 %v378, 4294901760
        %1502 = vmatmul.f32.gmra.mxu0 %v1501
        %v1503 = vpop.f32.mrf.mxu0
        %v1504 = vadd.f32 %v1299, %v1503
        %v1505 = vand.u32 %v379, 4294901760
        %1506 = vmatmul.f32.gmra.mxu0 %v1505
        %v1507 = vpop.f32.mrf.mxu0
        %v1508 = vadd.f32 %v1307, %v1507
        %v1509 = vand.u32 %v380, 4294901760
        %1510 = vmatmul.f32.gmra.mxu0 %v1509
        %v1511 = vpop.f32.mrf.mxu0
        %v1512 = vadd.f32 %v1315, %v1511
        %v1513 = vand.u32 %v381, 4294901760
        %1514 = vmatmul.f32.gmra.mxu0 %v1513
        %v1515 = vpop.f32.mrf.mxu0
        %v1516 = vadd.f32 %v1323, %v1515
        %v1517 = vand.u32 %v382, 4294901760
        %1518 = vmatmul.f32.gmra.mxu0 %v1517
        %v1519 = vpop.f32.mrf.mxu0
        %v1520 = vadd.f32 %v1331, %v1519
        %v1521 = vand.u32 %v383, 4294901760
        %1522 = vmatmul.f32.gmra.mxu0 %v1521
        %v1523 = vpop.f32.mrf.mxu0
        %v1524 = vadd.f32 %v1339, %v1523
        %v1525 = vand.u32 %v384, 4294901760
        %1526 = vmatmul.f32.gmra.mxu0 %v1525
        %v1527 = vpop.f32.mrf.mxu0
        %v1528 = vadd.f32 %v1347, %v1527
        %v1529 = vand.u32 %v385, 4294901760
        %1530 = vmatmul.f32.gmra.mxu0 %v1529
        %v1531 = vpop.f32.mrf.mxu0
        %v1532 = vadd.f32 %v1355, %v1531
        %v1533 = vand.u32 %v386, 4294901760
        %1534 = vmatmul.f32.gmra.mxu0 %v1533
        %v1535 = vpop.f32.mrf.mxu0
        %v1536 = vadd.f32 %v1363, %v1535
        %v1537 = vand.u32 %v387, 4294901760
        %1538 = vmatmul.f32.gmra.mxu0 %v1537
        %v1539 = vpop.f32.mrf.mxu0
        %v1540 = vadd.f32 %v1371, %v1539
        %v1541 = vand.u32 %v388, 4294901760
        %1542 = vmatmul.f32.gmra.mxu0 %v1541
        %v1543 = vpop.f32.mrf.mxu0
        %v1544 = vadd.f32 %v1379, %v1543
        %v1545 = vand.u32 %v389, 4294901760
        %1546 = vmatmul.f32.gmra.mxu0 %v1545
        %v1547 = vpop.f32.mrf.mxu0
        %v1548 = vadd.f32 %v1387, %v1547
        %1549 = vdwg.mxu0
        %v1550 = vand.u32 %v357, 4294901760
        %v1551 = vsub.f32 %v357, %v1550
        %1552 = vmatpush.msra.mxu0 %v1551
        %v1553 = vand.u32 %v356, 4294901760
        %v1554 = vsub.f32 %v356, %v1553
        %1555 = vmatpush.msra.mxu0 %v1554
        %v1556 = vand.u32 %v355, 4294901760
        %v1557 = vsub.f32 %v355, %v1556
        %1558 = vmatpush.msra.mxu0 %v1557
        %v1559 = vand.u32 %v354, 4294901760
        %v1560 = vsub.f32 %v354, %v1559
        %1561 = vmatpush.msra.mxu0 %v1560
        %v1562 = vand.u32 %v353, 4294901760
        %v1563 = vsub.f32 %v353, %v1562
        %1564 = vmatpush.msra.mxu0 %v1563
        %v1565 = vand.u32 %v352, 4294901760
        %v1566 = vsub.f32 %v352, %v1565
        %1567 = vmatpush.msra.mxu0 %v1566
        %v1568 = vand.u32 %v351, 4294901760
        %v1569 = vsub.f32 %v351, %v1568
        %1570 = vmatpush.msra.mxu0 %v1569
        %v1571 = vand.u32 %v350, 4294901760
        %v1572 = vsub.f32 %v350, %v1571
        %1573 = vmatpush.msra.mxu0 %v1572
        %v1574 = vand.u32 %v349, 4294901760
        %v1575 = vsub.f32 %v349, %v1574
        %1576 = vmatpush.msra.mxu0 %v1575
        %v1577 = vand.u32 %v348, 4294901760
        %v1578 = vsub.f32 %v348, %v1577
        %1579 = vmatpush.msra.mxu0 %v1578
        %v1580 = vand.u32 %v347, 4294901760
        %v1581 = vsub.f32 %v347, %v1580
        %1582 = vmatpush.msra.mxu0 %v1581
        %v1583 = vand.u32 %v346, 4294901760
        %v1584 = vsub.f32 %v346, %v1583
        %1585 = vmatpush.msra.mxu0 %v1584
        %v1586 = vand.u32 %v345, 4294901760
        %v1587 = vsub.f32 %v345, %v1586
        %1588 = vmatpush.msra.mxu0 %v1587
        %v1589 = vand.u32 %v344, 4294901760
        %v1590 = vsub.f32 %v344, %v1589
        %1591 = vmatpush.msra.mxu0 %v1590
        %v1592 = vand.u32 %v343, 4294901760
        %v1593 = vsub.f32 %v343, %v1592
        %1594 = vmatpush.msra.mxu0 %v1593
        %v1595 = vand.u32 %v342, 4294901760
        %v1596 = vsub.f32 %v342, %v1595
        %1597 = vmatpush.msra.mxu0 %v1596
        %v1598 = vand.u32 %v374, 4294901760
        %v1599 = vsub.f32 %v374, %v1598
        %1600 = vmatmul.f32.gmra.mxu0 %v1599
        %v1601 = vpop.f32.mrf.mxu0
        %v1602 = vadd.f32 %v1488, %v1601
        %v1603 = vand.u32 %v375, 4294901760
        %v1604 = vsub.f32 %v375, %v1603
        %1605 = vmatmul.f32.gmra.mxu0 %v1604
        %v1606 = vpop.f32.mrf.mxu0
        %v1607 = vadd.f32 %v1492, %v1606
        %v1608 = vand.u32 %v376, 4294901760
        %v1609 = vsub.f32 %v376, %v1608
        %1610 = vmatmul.f32.gmra.mxu0 %v1609
        %v1611 = vpop.f32.mrf.mxu0
        %v1612 = vadd.f32 %v1496, %v1611
        %v1613 = vand.u32 %v377, 4294901760
        %v1614 = vsub.f32 %v377, %v1613
        %1615 = vmatmul.f32.gmra.mxu0 %v1614
        %v1616 = vpop.f32.mrf.mxu0
        %v1617 = vadd.f32 %v1500, %v1616
        %v1618 = vand.u32 %v378, 4294901760
        %v1619 = vsub.f32 %v378, %v1618
        %1620 = vmatmul.f32.gmra.mxu0 %v1619
        %v1621 = vpop.f32.mrf.mxu0
        %v1622 = vadd.f32 %v1504, %v1621
        %v1623 = vand.u32 %v379, 4294901760
        %v1624 = vsub.f32 %v379, %v1623
        %1625 = vmatmul.f32.gmra.mxu0 %v1624
        %v1626 = vpop.f32.mrf.mxu0
        %v1627 = vadd.f32 %v1508, %v1626
        %v1628 = vand.u32 %v380, 4294901760
        %v1629 = vsub.f32 %v380, %v1628
        %1630 = vmatmul.f32.gmra.mxu0 %v1629
        %v1631 = vpop.f32.mrf.mxu0
        %v1632 = vadd.f32 %v1512, %v1631
        %v1633 = vand.u32 %v381, 4294901760
        %v1634 = vsub.f32 %v381, %v1633
        %1635 = vmatmul.f32.gmra.mxu0 %v1634
        %v1636 = vpop.f32.mrf.mxu0
        %v1637 = vadd.f32 %v1516, %v1636
        %v1638 = vand.u32 %v382, 4294901760
        %v1639 = vsub.f32 %v382, %v1638
        %1640 = vmatmul.f32.gmra.mxu0 %v1639
        %v1641 = vpop.f32.mrf.mxu0
        %v1642 = vadd.f32 %v1520, %v1641
        %v1643 = vand.u32 %v383, 4294901760
        %v1644 = vsub.f32 %v383, %v1643
        %1645 = vmatmul.f32.gmra.mxu0 %v1644
        %v1646 = vpop.f32.mrf.mxu0
        %v1647 = vadd.f32 %v1524, %v1646
        %v1648 = vand.u32 %v384, 4294901760
        %v1649 = vsub.f32 %v384, %v1648
        %1650 = vmatmul.f32.gmra.mxu0 %v1649
        %v1651 = vpop.f32.mrf.mxu0
        %v1652 = vadd.f32 %v1528, %v1651
        %v1653 = vand.u32 %v385, 4294901760
        %v1654 = vsub.f32 %v385, %v1653
        %1655 = vmatmul.f32.gmra.mxu0 %v1654
        %v1656 = vpop.f32.mrf.mxu0
        %v1657 = vadd.f32 %v1532, %v1656
        %v1658 = vand.u32 %v386, 4294901760
        %v1659 = vsub.f32 %v386, %v1658
        %1660 = vmatmul.f32.gmra.mxu0 %v1659
        %v1661 = vpop.f32.mrf.mxu0
        %v1662 = vadd.f32 %v1536, %v1661
        %v1663 = vand.u32 %v387, 4294901760
        %v1664 = vsub.f32 %v387, %v1663
        %1665 = vmatmul.f32.gmra.mxu0 %v1664
        %v1666 = vpop.f32.mrf.mxu0
        %v1667 = vadd.f32 %v1540, %v1666
        %v1668 = vand.u32 %v388, 4294901760
        %v1669 = vsub.f32 %v388, %v1668
        %1670 = vmatmul.f32.gmra.mxu0 %v1669
        %v1671 = vpop.f32.mrf.mxu0
        %v1672 = vadd.f32 %v1544, %v1671
        %v1673 = vand.u32 %v389, 4294901760
        %v1674 = vsub.f32 %v389, %v1673
        %1675 = vmatmul.f32.gmra.mxu0 %v1674
        %v1676 = vpop.f32.mrf.mxu0
        %v1677 = vadd.f32 %v1548, %v1676
        %1678 = vdwg.mxu0
        %v1679 = vand.u32 %v357, 4294901760
        %1680 = vmatpush.msra.mxu0 %v1679
        %v1681 = vand.u32 %v356, 4294901760
        %1682 = vmatpush.msra.mxu0 %v1681
        %v1683 = vand.u32 %v355, 4294901760
        %1684 = vmatpush.msra.mxu0 %v1683
        %v1685 = vand.u32 %v354, 4294901760
        %1686 = vmatpush.msra.mxu0 %v1685
        %v1687 = vand.u32 %v353, 4294901760
        %1688 = vmatpush.msra.mxu0 %v1687
        %v1689 = vand.u32 %v352, 4294901760
        %1690 = vmatpush.msra.mxu0 %v1689
        %v1691 = vand.u32 %v351, 4294901760
        %1692 = vmatpush.msra.mxu0 %v1691
        %v1693 = vand.u32 %v350, 4294901760
        %1694 = vmatpush.msra.mxu0 %v1693
        %v1695 = vand.u32 %v349, 4294901760
        %1696 = vmatpush.msra.mxu0 %v1695
        %v1697 = vand.u32 %v348, 4294901760
        %1698 = vmatpush.msra.mxu0 %v1697
        %v1699 = vand.u32 %v347, 4294901760
        %1700 = vmatpush.msra.mxu0 %v1699
        %v1701 = vand.u32 %v346, 4294901760
        %1702 = vmatpush.msra.mxu0 %v1701
        %v1703 = vand.u32 %v345, 4294901760
        %1704 = vmatpush.msra.mxu0 %v1703
        %v1705 = vand.u32 %v344, 4294901760
        %1706 = vmatpush.msra.mxu0 %v1705
        %v1707 = vand.u32 %v343, 4294901760
        %1708 = vmatpush.msra.mxu0 %v1707
        %v1709 = vand.u32 %v342, 4294901760
        %1710 = vmatpush.msra.mxu0 %v1709
        %v1711 = vand.u32 %v374, 4294901760
        %v1712 = vsub.f32 %v374, %v1711
        %v1713 = vand.u32 %v1712, 4294901760
        %1714 = vmatmul.f32.gmra.mxu0 %v1713
        %v1715 = vpop.f32.mrf.mxu0
        %v1716 = vadd.f32 %v1602, %v1715
        %v1717 = vand.u32 %v375, 4294901760
        %v1718 = vsub.f32 %v375, %v1717
        %v1719 = vand.u32 %v1718, 4294901760
        %1720 = vmatmul.f32.gmra.mxu0 %v1719
        %v1721 = vpop.f32.mrf.mxu0
        %v1722 = vadd.f32 %v1607, %v1721
        %v1723 = vand.u32 %v376, 4294901760
        %v1724 = vsub.f32 %v376, %v1723
        %v1725 = vand.u32 %v1724, 4294901760
        %1726 = vmatmul.f32.gmra.mxu0 %v1725
        %v1727 = vpop.f32.mrf.mxu0
        %v1728 = vadd.f32 %v1612, %v1727
        %v1729 = vand.u32 %v377, 4294901760
        %v1730 = vsub.f32 %v377, %v1729
        %v1731 = vand.u32 %v1730, 4294901760
        %1732 = vmatmul.f32.gmra.mxu0 %v1731
        %v1733 = vpop.f32.mrf.mxu0
        %v1734 = vadd.f32 %v1617, %v1733
        %v1735 = vand.u32 %v378, 4294901760
        %v1736 = vsub.f32 %v378, %v1735
        %v1737 = vand.u32 %v1736, 4294901760
        %1738 = vmatmul.f32.gmra.mxu0 %v1737
        %v1739 = vpop.f32.mrf.mxu0
        %v1740 = vadd.f32 %v1622, %v1739
        %v1741 = vand.u32 %v379, 4294901760
        %v1742 = vsub.f32 %v379, %v1741
        %v1743 = vand.u32 %v1742, 4294901760
        %1744 = vmatmul.f32.gmra.mxu0 %v1743
        %v1745 = vpop.f32.mrf.mxu0
        %v1746 = vadd.f32 %v1627, %v1745
        %v1747 = vand.u32 %v380, 4294901760
        %v1748 = vsub.f32 %v380, %v1747
        %v1749 = vand.u32 %v1748, 4294901760
        %1750 = vmatmul.f32.gmra.mxu0 %v1749
        %v1751 = vpop.f32.mrf.mxu0
        %v1752 = vadd.f32 %v1632, %v1751
        %v1753 = vand.u32 %v381, 4294901760
        %v1754 = vsub.f32 %v381, %v1753
        %v1755 = vand.u32 %v1754, 4294901760
        %1756 = vmatmul.f32.gmra.mxu0 %v1755
        %v1757 = vpop.f32.mrf.mxu0
        %v1758 = vadd.f32 %v1637, %v1757
        %v1759 = vand.u32 %v382, 4294901760
        %v1760 = vsub.f32 %v382, %v1759
        %v1761 = vand.u32 %v1760, 4294901760
        %1762 = vmatmul.f32.gmra.mxu0 %v1761
        %v1763 = vpop.f32.mrf.mxu0
        %v1764 = vadd.f32 %v1642, %v1763
        %v1765 = vand.u32 %v383, 4294901760
        %v1766 = vsub.f32 %v383, %v1765
        %v1767 = vand.u32 %v1766, 4294901760
        %1768 = vmatmul.f32.gmra.mxu0 %v1767
        %v1769 = vpop.f32.mrf.mxu0
        %v1770 = vadd.f32 %v1647, %v1769
        %v1771 = vand.u32 %v384, 4294901760
        %v1772 = vsub.f32 %v384, %v1771
        %v1773 = vand.u32 %v1772, 4294901760
        %1774 = vmatmul.f32.gmra.mxu0 %v1773
        %v1775 = vpop.f32.mrf.mxu0
        %v1776 = vadd.f32 %v1652, %v1775
        %v1777 = vand.u32 %v385, 4294901760
        %v1778 = vsub.f32 %v385, %v1777
        %v1779 = vand.u32 %v1778, 4294901760
        %1780 = vmatmul.f32.gmra.mxu0 %v1779
        %v1781 = vpop.f32.mrf.mxu0
        %v1782 = vadd.f32 %v1657, %v1781
        %v1783 = vand.u32 %v386, 4294901760
        %v1784 = vsub.f32 %v386, %v1783
        %v1785 = vand.u32 %v1784, 4294901760
        %1786 = vmatmul.f32.gmra.mxu0 %v1785
        %v1787 = vpop.f32.mrf.mxu0
        %v1788 = vadd.f32 %v1662, %v1787
        %v1789 = vand.u32 %v387, 4294901760
        %v1790 = vsub.f32 %v387, %v1789
        %v1791 = vand.u32 %v1790, 4294901760
        %1792 = vmatmul.f32.gmra.mxu0 %v1791
        %v1793 = vpop.f32.mrf.mxu0
        %v1794 = vadd.f32 %v1667, %v1793
        %v1795 = vand.u32 %v388, 4294901760
        %v1796 = vsub.f32 %v388, %v1795
        %v1797 = vand.u32 %v1796, 4294901760
        %1798 = vmatmul.f32.gmra.mxu0 %v1797
        %v1799 = vpop.f32.mrf.mxu0
        %v1800 = vadd.f32 %v1672, %v1799
        %v1801 = vand.u32 %v389, 4294901760
        %v1802 = vsub.f32 %v389, %v1801
        %v1803 = vand.u32 %v1802, 4294901760
        %1804 = vmatmul.f32.gmra.mxu0 %v1803
        %v1805 = vpop.f32.mrf.mxu0
        %v1806 = vadd.f32 %v1677, %v1805
        %1807 = vdwg.mxu0
        %v1808 = vand.u32 %v357, 4294901760
        %v1809 = vsub.f32 %v357, %v1808
        %v1810 = vand.u32 %v1809, 4294901760
        %1811 = vmatpush.msra.mxu0 %v1810
        %v1812 = vand.u32 %v356, 4294901760
        %v1813 = vsub.f32 %v356, %v1812
        %v1814 = vand.u32 %v1813, 4294901760
        %1815 = vmatpush.msra.mxu0 %v1814
        %v1816 = vand.u32 %v355, 4294901760
        %v1817 = vsub.f32 %v355, %v1816
        %v1818 = vand.u32 %v1817, 4294901760
        %1819 = vmatpush.msra.mxu0 %v1818
        %v1820 = vand.u32 %v354, 4294901760
        %v1821 = vsub.f32 %v354, %v1820
        %v1822 = vand.u32 %v1821, 4294901760
        %1823 = vmatpush.msra.mxu0 %v1822
        %v1824 = vand.u32 %v353, 4294901760
        %v1825 = vsub.f32 %v353, %v1824
        %v1826 = vand.u32 %v1825, 4294901760
        %1827 = vmatpush.msra.mxu0 %v1826
        %v1828 = vand.u32 %v352, 4294901760
        %v1829 = vsub.f32 %v352, %v1828
        %v1830 = vand.u32 %v1829, 4294901760
        %1831 = vmatpush.msra.mxu0 %v1830
        %v1832 = vand.u32 %v351, 4294901760
        %v1833 = vsub.f32 %v351, %v1832
        %v1834 = vand.u32 %v1833, 4294901760
        %1835 = vmatpush.msra.mxu0 %v1834
        %v1836 = vand.u32 %v350, 4294901760
        %v1837 = vsub.f32 %v350, %v1836
        %v1838 = vand.u32 %v1837, 4294901760
        %1839 = vmatpush.msra.mxu0 %v1838
        %v1840 = vand.u32 %v349, 4294901760
        %v1841 = vsub.f32 %v349, %v1840
        %v1842 = vand.u32 %v1841, 4294901760
        %1843 = vmatpush.msra.mxu0 %v1842
        %v1844 = vand.u32 %v348, 4294901760
        %v1845 = vsub.f32 %v348, %v1844
        %v1846 = vand.u32 %v1845, 4294901760
        %1847 = vmatpush.msra.mxu0 %v1846
        %v1848 = vand.u32 %v347, 4294901760
        %v1849 = vsub.f32 %v347, %v1848
        %v1850 = vand.u32 %v1849, 4294901760
        %1851 = vmatpush.msra.mxu0 %v1850
        %v1852 = vand.u32 %v346, 4294901760
        %v1853 = vsub.f32 %v346, %v1852
        %v1854 = vand.u32 %v1853, 4294901760
        %1855 = vmatpush.msra.mxu0 %v1854
        %v1856 = vand.u32 %v345, 4294901760
        %v1857 = vsub.f32 %v345, %v1856
        %v1858 = vand.u32 %v1857, 4294901760
        %1859 = vmatpush.msra.mxu0 %v1858
        %v1860 = vand.u32 %v344, 4294901760
        %v1861 = vsub.f32 %v344, %v1860
        %v1862 = vand.u32 %v1861, 4294901760
        %1863 = vmatpush.msra.mxu0 %v1862
        %v1864 = vand.u32 %v343, 4294901760
        %v1865 = vsub.f32 %v343, %v1864
        %v1866 = vand.u32 %v1865, 4294901760
        %1867 = vmatpush.msra.mxu0 %v1866
        %v1868 = vand.u32 %v342, 4294901760
        %v1869 = vsub.f32 %v342, %v1868
        %v1870 = vand.u32 %v1869, 4294901760
        %1871 = vmatpush.msra.mxu0 %v1870
        %v1872 = vand.u32 %v374, 4294901760
        %1873 = vmatmul.f32.gmra.mxu0 %v1872
        %v1874 = vpop.f32.mrf.mxu0
        %v1875 = vadd.f32 %v1716, %v1874
        %v1876 = vand.u32 %v375, 4294901760
        %1877 = vmatmul.f32.gmra.mxu0 %v1876
        %v1878 = vpop.f32.mrf.mxu0
        %v1879 = vadd.f32 %v1722, %v1878
        %v1880 = vand.u32 %v376, 4294901760
        %1881 = vmatmul.f32.gmra.mxu0 %v1880
        %v1882 = vpop.f32.mrf.mxu0
        %v1883 = vadd.f32 %v1728, %v1882
        %v1884 = vand.u32 %v377, 4294901760
        %1885 = vmatmul.f32.gmra.mxu0 %v1884
        %v1886 = vpop.f32.mrf.mxu0
        %v1887 = vadd.f32 %v1734, %v1886
        %v1888 = vand.u32 %v378, 4294901760
        %1889 = vmatmul.f32.gmra.mxu0 %v1888
        %v1890 = vpop.f32.mrf.mxu0
        %v1891 = vadd.f32 %v1740, %v1890
        %v1892 = vand.u32 %v379, 4294901760
        %1893 = vmatmul.f32.gmra.mxu0 %v1892
        %v1894 = vpop.f32.mrf.mxu0
        %v1895 = vadd.f32 %v1746, %v1894
        %v1896 = vand.u32 %v380, 4294901760
        %1897 = vmatmul.f32.gmra.mxu0 %v1896
        %v1898 = vpop.f32.mrf.mxu0
        %v1899 = vadd.f32 %v1752, %v1898
        %v1900 = vand.u32 %v381, 4294901760
        %1901 = vmatmul.f32.gmra.mxu0 %v1900
        %v1902 = vpop.f32.mrf.mxu0
        %v1903 = vadd.f32 %v1758, %v1902
        %v1904 = vand.u32 %v382, 4294901760
        %1905 = vmatmul.f32.gmra.mxu0 %v1904
        %v1906 = vpop.f32.mrf.mxu0
        %v1907 = vadd.f32 %v1764, %v1906
        %v1908 = vand.u32 %v383, 4294901760
        %1909 = vmatmul.f32.gmra.mxu0 %v1908
        %v1910 = vpop.f32.mrf.mxu0
        %v1911 = vadd.f32 %v1770, %v1910
        %v1912 = vand.u32 %v384, 4294901760
        %1913 = vmatmul.f32.gmra.mxu0 %v1912
        %v1914 = vpop.f32.mrf.mxu0
        %v1915 = vadd.f32 %v1776, %v1914
        %v1916 = vand.u32 %v385, 4294901760
        %1917 = vmatmul.f32.gmra.mxu0 %v1916
        %v1918 = vpop.f32.mrf.mxu0
        %v1919 = vadd.f32 %v1782, %v1918
        %v1920 = vand.u32 %v386, 4294901760
        %1921 = vmatmul.f32.gmra.mxu0 %v1920
        %v1922 = vpop.f32.mrf.mxu0
        %v1923 = vadd.f32 %v1788, %v1922
        %v1924 = vand.u32 %v387, 4294901760
        %1925 = vmatmul.f32.gmra.mxu0 %v1924
        %v1926 = vpop.f32.mrf.mxu0
        %v1927 = vadd.f32 %v1794, %v1926
        %v1928 = vand.u32 %v388, 4294901760
        %1929 = vmatmul.f32.gmra.mxu0 %v1928
        %v1930 = vpop.f32.mrf.mxu0
        %v1931 = vadd.f32 %v1800, %v1930
        %v1932 = vand.u32 %v389, 4294901760
        %1933 = vmatmul.f32.gmra.mxu0 %v1932
        %v1934 = vpop.f32.mrf.mxu0
        %v1935 = vadd.f32 %v1806, %v1934
        %1936 = vdwg.mxu0
        %v1937 = vand.u32 %v357, 4294901760
        %1938 = vmatpush.msra.mxu0 %v1937
        %v1939 = vand.u32 %v356, 4294901760
        %1940 = vmatpush.msra.mxu0 %v1939
        %v1941 = vand.u32 %v355, 4294901760
        %1942 = vmatpush.msra.mxu0 %v1941
        %v1943 = vand.u32 %v354, 4294901760
        %1944 = vmatpush.msra.mxu0 %v1943
        %v1945 = vand.u32 %v353, 4294901760
        %1946 = vmatpush.msra.mxu0 %v1945
        %v1947 = vand.u32 %v352, 4294901760
        %1948 = vmatpush.msra.mxu0 %v1947
        %v1949 = vand.u32 %v351, 4294901760
        %1950 = vmatpush.msra.mxu0 %v1949
        %v1951 = vand.u32 %v350, 4294901760
        %1952 = vmatpush.msra.mxu0 %v1951
        %v1953 = vand.u32 %v349, 4294901760
        %1954 = vmatpush.msra.mxu0 %v1953
        %v1955 = vand.u32 %v348, 4294901760
        %1956 = vmatpush.msra.mxu0 %v1955
        %v1957 = vand.u32 %v347, 4294901760
        %1958 = vmatpush.msra.mxu0 %v1957
        %v1959 = vand.u32 %v346, 4294901760
        %1960 = vmatpush.msra.mxu0 %v1959
        %v1961 = vand.u32 %v345, 4294901760
        %1962 = vmatpush.msra.mxu0 %v1961
        %v1963 = vand.u32 %v344, 4294901760
        %1964 = vmatpush.msra.mxu0 %v1963
        %v1965 = vand.u32 %v343, 4294901760
        %1966 = vmatpush.msra.mxu0 %v1965
        %v1967 = vand.u32 %v342, 4294901760
        %1968 = vmatpush.msra.mxu0 %v1967
        %v1969 = vand.u32 %v374, 4294901760
        %1970 = vmatmul.f32.gmra.mxu0 %v1969
        %v1971 = vpop.f32.mrf.mxu0
        %v1972 = vadd.f32 %v1875, %v1971
        %v1973 = vand.u32 %v375, 4294901760
        %1974 = vmatmul.f32.gmra.mxu0 %v1973
        %v1975 = vpop.f32.mrf.mxu0
        %v1976 = vadd.f32 %v1879, %v1975
        %v1977 = vand.u32 %v376, 4294901760
        %1978 = vmatmul.f32.gmra.mxu0 %v1977
        %v1979 = vpop.f32.mrf.mxu0
        %v1980 = vadd.f32 %v1883, %v1979
        %v1981 = vand.u32 %v377, 4294901760
        %1982 = vmatmul.f32.gmra.mxu0 %v1981
        %v1983 = vpop.f32.mrf.mxu0
        %v1984 = vadd.f32 %v1887, %v1983
        %v1985 = vand.u32 %v378, 4294901760
        %1986 = vmatmul.f32.gmra.mxu0 %v1985
        %v1987 = vpop.f32.mrf.mxu0
        %v1988 = vadd.f32 %v1891, %v1987
        %v1989 = vand.u32 %v379, 4294901760
        %1990 = vmatmul.f32.gmra.mxu0 %v1989
        %v1991 = vpop.f32.mrf.mxu0
        %v1992 = vadd.f32 %v1895, %v1991
        %v1993 = vand.u32 %v380, 4294901760
        %1994 = vmatmul.f32.gmra.mxu0 %v1993
        %v1995 = vpop.f32.mrf.mxu0
        %v1996 = vadd.f32 %v1899, %v1995
        %v1997 = vand.u32 %v381, 4294901760
        %1998 = vmatmul.f32.gmra.mxu0 %v1997
        %v1999 = vpop.f32.mrf.mxu0
        %v2000 = vadd.f32 %v1903, %v1999
        %v2001 = vand.u32 %v382, 4294901760
        %2002 = vmatmul.f32.gmra.mxu0 %v2001
        %v2003 = vpop.f32.mrf.mxu0
        %v2004 = vadd.f32 %v1907, %v2003
        %v2005 = vand.u32 %v383, 4294901760
        %2006 = vmatmul.f32.gmra.mxu0 %v2005
        %v2007 = vpop.f32.mrf.mxu0
        %v2008 = vadd.f32 %v1911, %v2007
        %v2009 = vand.u32 %v384, 4294901760
        %2010 = vmatmul.f32.gmra.mxu0 %v2009
        %v2011 = vpop.f32.mrf.mxu0
        %v2012 = vadd.f32 %v1915, %v2011
        %v2013 = vand.u32 %v385, 4294901760
        %2014 = vmatmul.f32.gmra.mxu0 %v2013
        %v2015 = vpop.f32.mrf.mxu0
        %v2016 = vadd.f32 %v1919, %v2015
        %v2017 = vand.u32 %v386, 4294901760
        %2018 = vmatmul.f32.gmra.mxu0 %v2017
        %v2019 = vpop.f32.mrf.mxu0
        %v2020 = vadd.f32 %v1923, %v2019
        %v2021 = vand.u32 %v387, 4294901760
        %2022 = vmatmul.f32.gmra.mxu0 %v2021
        %v2023 = vpop.f32.mrf.mxu0
        %v2024 = vadd.f32 %v1927, %v2023
        %v2025 = vand.u32 %v388, 4294901760
        %2026 = vmatmul.f32.gmra.mxu0 %v2025
        %v2027 = vpop.f32.mrf.mxu0
        %v2028 = vadd.f32 %v1931, %v2027
        %v2029 = vand.u32 %v389, 4294901760
        %2030 = vmatmul.f32.gmra.mxu0 %v2029
        %v2031 = vpop.f32.mrf.mxu0
        %v2032 = vadd.f32 %v1935, %v2031
        %2033 = vdwg.mxu0
        %v2034 = vand.u32 %v420, 4294901760
        %2035 = vmatpush.msra.mxu0 %v2034
        %v2036 = vand.u32 %v418, 4294901760
        %2037 = vmatpush.msra.mxu0 %v2036
        %v2038 = vand.u32 %v416, 4294901760
        %2039 = vmatpush.msra.mxu0 %v2038
        %v2040 = vand.u32 %v414, 4294901760
        %2041 = vmatpush.msra.mxu0 %v2040
        %v2042 = vand.u32 %v412, 4294901760
        %2043 = vmatpush.msra.mxu0 %v2042
        %v2044 = vand.u32 %v410, 4294901760
        %2045 = vmatpush.msra.mxu0 %v2044
        %v2046 = vand.u32 %v408, 4294901760
        %2047 = vmatpush.msra.mxu0 %v2046
        %v2048 = vand.u32 %v406, 4294901760
        %2049 = vmatpush.msra.mxu0 %v2048
        %v2050 = vand.u32 %v404, 4294901760
        %2051 = vmatpush.msra.mxu0 %v2050
        %v2052 = vand.u32 %v402, 4294901760
        %2053 = vmatpush.msra.mxu0 %v2052
        %v2054 = vand.u32 %v400, 4294901760
        %2055 = vmatpush.msra.mxu0 %v2054
        %v2056 = vand.u32 %v398, 4294901760
        %2057 = vmatpush.msra.mxu0 %v2056
        %v2058 = vand.u32 %v396, 4294901760
        %2059 = vmatpush.msra.mxu0 %v2058
        %v2060 = vand.u32 %v394, 4294901760
        %2061 = vmatpush.msra.mxu0 %v2060
        %v2062 = vand.u32 %v392, 4294901760
        %2063 = vmatpush.msra.mxu0 %v2062
        %v2064 = vand.u32 %v390, 4294901760
        %2065 = vmatpush.msra.mxu0 %v2064
        %v2066 = vand.u32 %v1166, 4294901760
        %v2067 = vsub.f32 %v1166, %v2066
        %v2068 = vand.u32 %v2067, 4294901760
        %v2069 = vsub.f32 %v2067, %v2068
        %v2070 = vand.u32 %v2069, 4294901760
        %2071 = vmatmul.f32.gmra.mxu0 %v2070
        %v2072 = vpop.f32.mrf.mxu0
        %v2073 = vadd.f32 0.0, %v2072
        %v2074 = vand.u32 %v1170, 4294901760
        %v2075 = vsub.f32 %v1170, %v2074
        %v2076 = vand.u32 %v2075, 4294901760
        %v2077 = vsub.f32 %v2075, %v2076
        %v2078 = vand.u32 %v2077, 4294901760
        %2079 = vmatmul.f32.gmra.mxu0 %v2078
        %v2080 = vpop.f32.mrf.mxu0
        %v2081 = vadd.f32 0.0, %v2080
        %v2082 = vand.u32 %v1174, 4294901760
        %v2083 = vsub.f32 %v1174, %v2082
        %v2084 = vand.u32 %v2083, 4294901760
        %v2085 = vsub.f32 %v2083, %v2084
        %v2086 = vand.u32 %v2085, 4294901760
        %2087 = vmatmul.f32.gmra.mxu0 %v2086
        %v2088 = vpop.f32.mrf.mxu0
        %v2089 = vadd.f32 0.0, %v2088
        %v2090 = vand.u32 %v1178, 4294901760
        %v2091 = vsub.f32 %v1178, %v2090
        %v2092 = vand.u32 %v2091, 4294901760
        %v2093 = vsub.f32 %v2091, %v2092
        %v2094 = vand.u32 %v2093, 4294901760
        %2095 = vmatmul.f32.gmra.mxu0 %v2094
        %v2096 = vpop.f32.mrf.mxu0
        %v2097 = vadd.f32 0.0, %v2096
        %v2098 = vand.u32 %v1182, 4294901760
        %v2099 = vsub.f32 %v1182, %v2098
        %v2100 = vand.u32 %v2099, 4294901760
        %v2101 = vsub.f32 %v2099, %v2100
        %v2102 = vand.u32 %v2101, 4294901760
        %2103 = vmatmul.f32.gmra.mxu0 %v2102
        %v2104 = vpop.f32.mrf.mxu0
        %v2105 = vadd.f32 0.0, %v2104
        %v2106 = vand.u32 %v1186, 4294901760
        %v2107 = vsub.f32 %v1186, %v2106
        %v2108 = vand.u32 %v2107, 4294901760
        %v2109 = vsub.f32 %v2107, %v2108
        %v2110 = vand.u32 %v2109, 4294901760
        %2111 = vmatmul.f32.gmra.mxu0 %v2110
        %v2112 = vpop.f32.mrf.mxu0
        %v2113 = vadd.f32 0.0, %v2112
        %v2114 = vand.u32 %v1190, 4294901760
        %v2115 = vsub.f32 %v1190, %v2114
        %v2116 = vand.u32 %v2115, 4294901760
        %v2117 = vsub.f32 %v2115, %v2116
        %v2118 = vand.u32 %v2117, 4294901760
        %2119 = vmatmul.f32.gmra.mxu0 %v2118
        %v2120 = vpop.f32.mrf.mxu0
        %v2121 = vadd.f32 0.0, %v2120
        %v2122 = vand.u32 %v1194, 4294901760
        %v2123 = vsub.f32 %v1194, %v2122
        %v2124 = vand.u32 %v2123, 4294901760
        %v2125 = vsub.f32 %v2123, %v2124
        %v2126 = vand.u32 %v2125, 4294901760
        %2127 = vmatmul.f32.gmra.mxu0 %v2126
        %v2128 = vpop.f32.mrf.mxu0
        %v2129 = vadd.f32 0.0, %v2128
        %v2130 = vand.u32 %v1198, 4294901760
        %v2131 = vsub.f32 %v1198, %v2130
        %v2132 = vand.u32 %v2131, 4294901760
        %v2133 = vsub.f32 %v2131, %v2132
        %v2134 = vand.u32 %v2133, 4294901760
        %2135 = vmatmul.f32.gmra.mxu0 %v2134
        %v2136 = vpop.f32.mrf.mxu0
        %v2137 = vadd.f32 0.0, %v2136
        %v2138 = vand.u32 %v1202, 4294901760
        %v2139 = vsub.f32 %v1202, %v2138
        %v2140 = vand.u32 %v2139, 4294901760
        %v2141 = vsub.f32 %v2139, %v2140
        %v2142 = vand.u32 %v2141, 4294901760
        %2143 = vmatmul.f32.gmra.mxu0 %v2142
        %v2144 = vpop.f32.mrf.mxu0
        %v2145 = vadd.f32 0.0, %v2144
        %v2146 = vand.u32 %v1206, 4294901760
        %v2147 = vsub.f32 %v1206, %v2146
        %v2148 = vand.u32 %v2147, 4294901760
        %v2149 = vsub.f32 %v2147, %v2148
        %v2150 = vand.u32 %v2149, 4294901760
        %2151 = vmatmul.f32.gmra.mxu0 %v2150
        %v2152 = vpop.f32.mrf.mxu0
        %v2153 = vadd.f32 0.0, %v2152
        %v2154 = vand.u32 %v1210, 4294901760
        %v2155 = vsub.f32 %v1210, %v2154
        %v2156 = vand.u32 %v2155, 4294901760
        %v2157 = vsub.f32 %v2155, %v2156
        %v2158 = vand.u32 %v2157, 4294901760
        %2159 = vmatmul.f32.gmra.mxu0 %v2158
        %v2160 = vpop.f32.mrf.mxu0
        %v2161 = vadd.f32 0.0, %v2160
        %v2162 = vand.u32 %v1214, 4294901760
        %v2163 = vsub.f32 %v1214, %v2162
        %v2164 = vand.u32 %v2163, 4294901760
        %v2165 = vsub.f32 %v2163, %v2164
        %v2166 = vand.u32 %v2165, 4294901760
        %2167 = vmatmul.f32.gmra.mxu0 %v2166
        %v2168 = vpop.f32.mrf.mxu0
        %v2169 = vadd.f32 0.0, %v2168
        %v2170 = vand.u32 %v1218, 4294901760
        %v2171 = vsub.f32 %v1218, %v2170
        %v2172 = vand.u32 %v2171, 4294901760
        %v2173 = vsub.f32 %v2171, %v2172
        %v2174 = vand.u32 %v2173, 4294901760
        %2175 = vmatmul.f32.gmra.mxu0 %v2174
        %v2176 = vpop.f32.mrf.mxu0
        %v2177 = vadd.f32 0.0, %v2176
        %v2178 = vand.u32 %v1222, 4294901760
        %v2179 = vsub.f32 %v1222, %v2178
        %v2180 = vand.u32 %v2179, 4294901760
        %v2181 = vsub.f32 %v2179, %v2180
        %v2182 = vand.u32 %v2181, 4294901760
        %2183 = vmatmul.f32.gmra.mxu0 %v2182
        %v2184 = vpop.f32.mrf.mxu0
        %v2185 = vadd.f32 0.0, %v2184
        %v2186 = vand.u32 %v1226, 4294901760
        %v2187 = vsub.f32 %v1226, %v2186
        %v2188 = vand.u32 %v2187, 4294901760
        %v2189 = vsub.f32 %v2187, %v2188
        %v2190 = vand.u32 %v2189, 4294901760
        %2191 = vmatmul.f32.gmra.mxu0 %v2190
        %v2192 = vpop.f32.mrf.mxu0
        %v2193 = vadd.f32 0.0, %v2192
        %v2194 = vand.u32 %v1972, 4294901760
        %v2195 = vsub.f32 %v1972, %v2194
        %v2196 = vand.u32 %v2195, 4294901760
        %v2197 = vsub.f32 %v2195, %v2196
        %v2198 = vand.u32 %v2197, 4294901760
        %2199 = vmatmul.f32.gmra.mxu0 %v2198
        %v2200 = vpop.f32.mrf.mxu0
        %v2201 = vadd.f32 0.0, %v2200
        %v2202 = vand.u32 %v1976, 4294901760
        %v2203 = vsub.f32 %v1976, %v2202
        %v2204 = vand.u32 %v2203, 4294901760
        %v2205 = vsub.f32 %v2203, %v2204
        %v2206 = vand.u32 %v2205, 4294901760
        %2207 = vmatmul.f32.gmra.mxu0 %v2206
        %v2208 = vpop.f32.mrf.mxu0
        %v2209 = vadd.f32 0.0, %v2208
        %v2210 = vand.u32 %v1980, 4294901760
        %v2211 = vsub.f32 %v1980, %v2210
        %v2212 = vand.u32 %v2211, 4294901760
        %v2213 = vsub.f32 %v2211, %v2212
        %v2214 = vand.u32 %v2213, 4294901760
        %2215 = vmatmul.f32.gmra.mxu0 %v2214
        %v2216 = vpop.f32.mrf.mxu0
        %v2217 = vadd.f32 0.0, %v2216
        %v2218 = vand.u32 %v1984, 4294901760
        %v2219 = vsub.f32 %v1984, %v2218
        %v2220 = vand.u32 %v2219, 4294901760
        %v2221 = vsub.f32 %v2219, %v2220
        %v2222 = vand.u32 %v2221, 4294901760
        %2223 = vmatmul.f32.gmra.mxu0 %v2222
        %v2224 = vpop.f32.mrf.mxu0
        %v2225 = vadd.f32 0.0, %v2224
        %v2226 = vand.u32 %v1988, 4294901760
        %v2227 = vsub.f32 %v1988, %v2226
        %v2228 = vand.u32 %v2227, 4294901760
        %v2229 = vsub.f32 %v2227, %v2228
        %v2230 = vand.u32 %v2229, 4294901760
        %2231 = vmatmul.f32.gmra.mxu0 %v2230
        %v2232 = vpop.f32.mrf.mxu0
        %v2233 = vadd.f32 0.0, %v2232
        %v2234 = vand.u32 %v1992, 4294901760
        %v2235 = vsub.f32 %v1992, %v2234
        %v2236 = vand.u32 %v2235, 4294901760
        %v2237 = vsub.f32 %v2235, %v2236
        %v2238 = vand.u32 %v2237, 4294901760
        %2239 = vmatmul.f32.gmra.mxu0 %v2238
        %v2240 = vpop.f32.mrf.mxu0
        %v2241 = vadd.f32 0.0, %v2240
        %v2242 = vand.u32 %v1996, 4294901760
        %v2243 = vsub.f32 %v1996, %v2242
        %v2244 = vand.u32 %v2243, 4294901760
        %v2245 = vsub.f32 %v2243, %v2244
        %v2246 = vand.u32 %v2245, 4294901760
        %2247 = vmatmul.f32.gmra.mxu0 %v2246
        %v2248 = vpop.f32.mrf.mxu0
        %v2249 = vadd.f32 0.0, %v2248
        %v2250 = vand.u32 %v2000, 4294901760
        %v2251 = vsub.f32 %v2000, %v2250
        %v2252 = vand.u32 %v2251, 4294901760
        %v2253 = vsub.f32 %v2251, %v2252
        %v2254 = vand.u32 %v2253, 4294901760
        %2255 = vmatmul.f32.gmra.mxu0 %v2254
        %v2256 = vpop.f32.mrf.mxu0
        %v2257 = vadd.f32 0.0, %v2256
        %v2258 = vand.u32 %v2004, 4294901760
        %v2259 = vsub.f32 %v2004, %v2258
        %v2260 = vand.u32 %v2259, 4294901760
        %v2261 = vsub.f32 %v2259, %v2260
        %v2262 = vand.u32 %v2261, 4294901760
        %2263 = vmatmul.f32.gmra.mxu0 %v2262
        %v2264 = vpop.f32.mrf.mxu0
        %v2265 = vadd.f32 0.0, %v2264
        %v2266 = vand.u32 %v2008, 4294901760
        %v2267 = vsub.f32 %v2008, %v2266
        %v2268 = vand.u32 %v2267, 4294901760
        %v2269 = vsub.f32 %v2267, %v2268
        %v2270 = vand.u32 %v2269, 4294901760
        %2271 = vmatmul.f32.gmra.mxu0 %v2270
        %v2272 = vpop.f32.mrf.mxu0
        %v2273 = vadd.f32 0.0, %v2272
        %v2274 = vand.u32 %v2012, 4294901760
        %v2275 = vsub.f32 %v2012, %v2274
        %v2276 = vand.u32 %v2275, 4294901760
        %v2277 = vsub.f32 %v2275, %v2276
        %v2278 = vand.u32 %v2277, 4294901760
        %2279 = vmatmul.f32.gmra.mxu0 %v2278
        %v2280 = vpop.f32.mrf.mxu0
        %v2281 = vadd.f32 0.0, %v2280
        %v2282 = vand.u32 %v2016, 4294901760
        %v2283 = vsub.f32 %v2016, %v2282
        %v2284 = vand.u32 %v2283, 4294901760
        %v2285 = vsub.f32 %v2283, %v2284
        %v2286 = vand.u32 %v2285, 4294901760
        %2287 = vmatmul.f32.gmra.mxu0 %v2286
        %v2288 = vpop.f32.mrf.mxu0
        %v2289 = vadd.f32 0.0, %v2288
        %v2290 = vand.u32 %v2020, 4294901760
        %v2291 = vsub.f32 %v2020, %v2290
        %v2292 = vand.u32 %v2291, 4294901760
        %v2293 = vsub.f32 %v2291, %v2292
        %v2294 = vand.u32 %v2293, 4294901760
        %2295 = vmatmul.f32.gmra.mxu0 %v2294
        %v2296 = vpop.f32.mrf.mxu0
        %v2297 = vadd.f32 0.0, %v2296
        %v2298 = vand.u32 %v2024, 4294901760
        %v2299 = vsub.f32 %v2024, %v2298
        %v2300 = vand.u32 %v2299, 4294901760
        %v2301 = vsub.f32 %v2299, %v2300
        %v2302 = vand.u32 %v2301, 4294901760
        %2303 = vmatmul.f32.gmra.mxu0 %v2302
        %v2304 = vpop.f32.mrf.mxu0
        %v2305 = vadd.f32 0.0, %v2304
        %v2306 = vand.u32 %v2028, 4294901760
        %v2307 = vsub.f32 %v2028, %v2306
        %v2308 = vand.u32 %v2307, 4294901760
        %v2309 = vsub.f32 %v2307, %v2308
        %v2310 = vand.u32 %v2309, 4294901760
        %2311 = vmatmul.f32.gmra.mxu0 %v2310
        %v2312 = vpop.f32.mrf.mxu0
        %v2313 = vadd.f32 0.0, %v2312
        %v2314 = vand.u32 %v2032, 4294901760
        %v2315 = vsub.f32 %v2032, %v2314
        %v2316 = vand.u32 %v2315, 4294901760
        %v2317 = vsub.f32 %v2315, %v2316
        %v2318 = vand.u32 %v2317, 4294901760
        %2319 = vmatmul.f32.gmra.mxu0 %v2318
        %v2320 = vpop.f32.mrf.mxu0
        %v2321 = vadd.f32 0.0, %v2320
        %2322 = vdwg.mxu0
        %v2323 = vand.u32 %v420, 4294901760
        %v2324 = vsub.f32 %v420, %v2323
        %v2325 = vand.u32 %v2324, 4294901760
        %v2326 = vsub.f32 %v2324, %v2325
        %v2327 = vand.u32 %v2326, 4294901760
        %2328 = vmatpush.msra.mxu0 %v2327
        %v2329 = vand.u32 %v418, 4294901760
        %v2330 = vsub.f32 %v418, %v2329
        %v2331 = vand.u32 %v2330, 4294901760
        %v2332 = vsub.f32 %v2330, %v2331
        %v2333 = vand.u32 %v2332, 4294901760
        %2334 = vmatpush.msra.mxu0 %v2333
        %v2335 = vand.u32 %v416, 4294901760
        %v2336 = vsub.f32 %v416, %v2335
        %v2337 = vand.u32 %v2336, 4294901760
        %v2338 = vsub.f32 %v2336, %v2337
        %v2339 = vand.u32 %v2338, 4294901760
        %2340 = vmatpush.msra.mxu0 %v2339
        %v2341 = vand.u32 %v414, 4294901760
        %v2342 = vsub.f32 %v414, %v2341
        %v2343 = vand.u32 %v2342, 4294901760
        %v2344 = vsub.f32 %v2342, %v2343
        %v2345 = vand.u32 %v2344, 4294901760
        %2346 = vmatpush.msra.mxu0 %v2345
        %v2347 = vand.u32 %v412, 4294901760
        %v2348 = vsub.f32 %v412, %v2347
        %v2349 = vand.u32 %v2348, 4294901760
        %v2350 = vsub.f32 %v2348, %v2349
        %v2351 = vand.u32 %v2350, 4294901760
        %2352 = vmatpush.msra.mxu0 %v2351
        %v2353 = vand.u32 %v410, 4294901760
        %v2354 = vsub.f32 %v410, %v2353
        %v2355 = vand.u32 %v2354, 4294901760
        %v2356 = vsub.f32 %v2354, %v2355
        %v2357 = vand.u32 %v2356, 4294901760
        %2358 = vmatpush.msra.mxu0 %v2357
        %v2359 = vand.u32 %v408, 4294901760
        %v2360 = vsub.f32 %v408, %v2359
        %v2361 = vand.u32 %v2360, 4294901760
        %v2362 = vsub.f32 %v2360, %v2361
        %v2363 = vand.u32 %v2362, 4294901760
        %2364 = vmatpush.msra.mxu0 %v2363
        %v2365 = vand.u32 %v406, 4294901760
        %v2366 = vsub.f32 %v406, %v2365
        %v2367 = vand.u32 %v2366, 4294901760
        %v2368 = vsub.f32 %v2366, %v2367
        %v2369 = vand.u32 %v2368, 4294901760
        %2370 = vmatpush.msra.mxu0 %v2369
        %v2371 = vand.u32 %v404, 4294901760
        %v2372 = vsub.f32 %v404, %v2371
        %v2373 = vand.u32 %v2372, 4294901760
        %v2374 = vsub.f32 %v2372, %v2373
        %v2375 = vand.u32 %v2374, 4294901760
        %2376 = vmatpush.msra.mxu0 %v2375
        %v2377 = vand.u32 %v402, 4294901760
        %v2378 = vsub.f32 %v402, %v2377
        %v2379 = vand.u32 %v2378, 4294901760
        %v2380 = vsub.f32 %v2378, %v2379
        %v2381 = vand.u32 %v2380, 4294901760
        %2382 = vmatpush.msra.mxu0 %v2381
        %v2383 = vand.u32 %v400, 4294901760
        %v2384 = vsub.f32 %v400, %v2383
        %v2385 = vand.u32 %v2384, 4294901760
        %v2386 = vsub.f32 %v2384, %v2385
        %v2387 = vand.u32 %v2386, 4294901760
        %2388 = vmatpush.msra.mxu0 %v2387
        %v2389 = vand.u32 %v398, 4294901760
        %v2390 = vsub.f32 %v398, %v2389
        %v2391 = vand.u32 %v2390, 4294901760
        %v2392 = vsub.f32 %v2390, %v2391
        %v2393 = vand.u32 %v2392, 4294901760
        %2394 = vmatpush.msra.mxu0 %v2393
        %v2395 = vand.u32 %v396, 4294901760
        %v2396 = vsub.f32 %v396, %v2395
        %v2397 = vand.u32 %v2396, 4294901760
        %v2398 = vsub.f32 %v2396, %v2397
        %v2399 = vand.u32 %v2398, 4294901760
        %2400 = vmatpush.msra.mxu0 %v2399
        %v2401 = vand.u32 %v394, 4294901760
        %v2402 = vsub.f32 %v394, %v2401
        %v2403 = vand.u32 %v2402, 4294901760
        %v2404 = vsub.f32 %v2402, %v2403
        %v2405 = vand.u32 %v2404, 4294901760
        %2406 = vmatpush.msra.mxu0 %v2405
        %v2407 = vand.u32 %v392, 4294901760
        %v2408 = vsub.f32 %v392, %v2407
        %v2409 = vand.u32 %v2408, 4294901760
        %v2410 = vsub.f32 %v2408, %v2409
        %v2411 = vand.u32 %v2410, 4294901760
        %2412 = vmatpush.msra.mxu0 %v2411
        %v2413 = vand.u32 %v390, 4294901760
        %v2414 = vsub.f32 %v390, %v2413
        %v2415 = vand.u32 %v2414, 4294901760
        %v2416 = vsub.f32 %v2414, %v2415
        %v2417 = vand.u32 %v2416, 4294901760
        %2418 = vmatpush.msra.mxu0 %v2417
        %v2419 = vand.u32 %v1166, 4294901760
        %2420 = vmatmul.f32.gmra.mxu0 %v2419
        %v2421 = vpop.f32.mrf.mxu0
        %v2422 = vadd.f32 %v2073, %v2421
        %v2423 = vand.u32 %v1170, 4294901760
        %2424 = vmatmul.f32.gmra.mxu0 %v2423
        %v2425 = vpop.f32.mrf.mxu0
        %v2426 = vadd.f32 %v2081, %v2425
        %v2427 = vand.u32 %v1174, 4294901760
        %2428 = vmatmul.f32.gmra.mxu0 %v2427
        %v2429 = vpop.f32.mrf.mxu0
        %v2430 = vadd.f32 %v2089, %v2429
        %v2431 = vand.u32 %v1178, 4294901760
        %2432 = vmatmul.f32.gmra.mxu0 %v2431
        %v2433 = vpop.f32.mrf.mxu0
        %v2434 = vadd.f32 %v2097, %v2433
        %v2435 = vand.u32 %v1182, 4294901760
        %2436 = vmatmul.f32.gmra.mxu0 %v2435
        %v2437 = vpop.f32.mrf.mxu0
        %v2438 = vadd.f32 %v2105, %v2437
        %v2439 = vand.u32 %v1186, 4294901760
        %2440 = vmatmul.f32.gmra.mxu0 %v2439
        %v2441 = vpop.f32.mrf.mxu0
        %v2442 = vadd.f32 %v2113, %v2441
        %v2443 = vand.u32 %v1190, 4294901760
        %2444 = vmatmul.f32.gmra.mxu0 %v2443
        %v2445 = vpop.f32.mrf.mxu0
        %v2446 = vadd.f32 %v2121, %v2445
        %v2447 = vand.u32 %v1194, 4294901760
        %2448 = vmatmul.f32.gmra.mxu0 %v2447
        %v2449 = vpop.f32.mrf.mxu0
        %v2450 = vadd.f32 %v2129, %v2449
        %v2451 = vand.u32 %v1198, 4294901760
        %2452 = vmatmul.f32.gmra.mxu0 %v2451
        %v2453 = vpop.f32.mrf.mxu0
        %v2454 = vadd.f32 %v2137, %v2453
        %v2455 = vand.u32 %v1202, 4294901760
        %2456 = vmatmul.f32.gmra.mxu0 %v2455
        %v2457 = vpop.f32.mrf.mxu0
        %v2458 = vadd.f32 %v2145, %v2457
        %v2459 = vand.u32 %v1206, 4294901760
        %2460 = vmatmul.f32.gmra.mxu0 %v2459
        %v2461 = vpop.f32.mrf.mxu0
        %v2462 = vadd.f32 %v2153, %v2461
        %v2463 = vand.u32 %v1210, 4294901760
        %2464 = vmatmul.f32.gmra.mxu0 %v2463
        %v2465 = vpop.f32.mrf.mxu0
        %v2466 = vadd.f32 %v2161, %v2465
        %v2467 = vand.u32 %v1214, 4294901760
        %2468 = vmatmul.f32.gmra.mxu0 %v2467
        %v2469 = vpop.f32.mrf.mxu0
        %v2470 = vadd.f32 %v2169, %v2469
        %v2471 = vand.u32 %v1218, 4294901760
        %2472 = vmatmul.f32.gmra.mxu0 %v2471
        %v2473 = vpop.f32.mrf.mxu0
        %v2474 = vadd.f32 %v2177, %v2473
        %v2475 = vand.u32 %v1222, 4294901760
        %2476 = vmatmul.f32.gmra.mxu0 %v2475
        %v2477 = vpop.f32.mrf.mxu0
        %v2478 = vadd.f32 %v2185, %v2477
        %v2479 = vand.u32 %v1226, 4294901760
        %2480 = vmatmul.f32.gmra.mxu0 %v2479
        %v2481 = vpop.f32.mrf.mxu0
        %v2482 = vadd.f32 %v2193, %v2481
        %v2483 = vand.u32 %v1972, 4294901760
        %2484 = vmatmul.f32.gmra.mxu0 %v2483
        %v2485 = vpop.f32.mrf.mxu0
        %v2486 = vadd.f32 %v2201, %v2485
        %v2487 = vand.u32 %v1976, 4294901760
        %2488 = vmatmul.f32.gmra.mxu0 %v2487
        %v2489 = vpop.f32.mrf.mxu0
        %v2490 = vadd.f32 %v2209, %v2489
        %v2491 = vand.u32 %v1980, 4294901760
        %2492 = vmatmul.f32.gmra.mxu0 %v2491
        %v2493 = vpop.f32.mrf.mxu0
        %v2494 = vadd.f32 %v2217, %v2493
        %v2495 = vand.u32 %v1984, 4294901760
        %2496 = vmatmul.f32.gmra.mxu0 %v2495
        %v2497 = vpop.f32.mrf.mxu0
        %v2498 = vadd.f32 %v2225, %v2497
        %v2499 = vand.u32 %v1988, 4294901760
        %2500 = vmatmul.f32.gmra.mxu0 %v2499
        %v2501 = vpop.f32.mrf.mxu0
        %v2502 = vadd.f32 %v2233, %v2501
        %v2503 = vand.u32 %v1992, 4294901760
        %2504 = vmatmul.f32.gmra.mxu0 %v2503
        %v2505 = vpop.f32.mrf.mxu0
        %v2506 = vadd.f32 %v2241, %v2505
        %v2507 = vand.u32 %v1996, 4294901760
        %2508 = vmatmul.f32.gmra.mxu0 %v2507
        %v2509 = vpop.f32.mrf.mxu0
        %v2510 = vadd.f32 %v2249, %v2509
        %v2511 = vand.u32 %v2000, 4294901760
        %2512 = vmatmul.f32.gmra.mxu0 %v2511
        %v2513 = vpop.f32.mrf.mxu0
        %v2514 = vadd.f32 %v2257, %v2513
        %v2515 = vand.u32 %v2004, 4294901760
        %2516 = vmatmul.f32.gmra.mxu0 %v2515
        %v2517 = vpop.f32.mrf.mxu0
        %v2518 = vadd.f32 %v2265, %v2517
        %v2519 = vand.u32 %v2008, 4294901760
        %2520 = vmatmul.f32.gmra.mxu0 %v2519
        %v2521 = vpop.f32.mrf.mxu0
        %v2522 = vadd.f32 %v2273, %v2521
        %v2523 = vand.u32 %v2012, 4294901760
        %2524 = vmatmul.f32.gmra.mxu0 %v2523
        %v2525 = vpop.f32.mrf.mxu0
        %v2526 = vadd.f32 %v2281, %v2525
        %v2527 = vand.u32 %v2016, 4294901760
        %2528 = vmatmul.f32.gmra.mxu0 %v2527
        %v2529 = vpop.f32.mrf.mxu0
        %v2530 = vadd.f32 %v2289, %v2529
        %v2531 = vand.u32 %v2020, 4294901760
        %2532 = vmatmul.f32.gmra.mxu0 %v2531
        %v2533 = vpop.f32.mrf.mxu0
        %v2534 = vadd.f32 %v2297, %v2533
        %v2535 = vand.u32 %v2024, 4294901760
        %2536 = vmatmul.f32.gmra.mxu0 %v2535
        %v2537 = vpop.f32.mrf.mxu0
        %v2538 = vadd.f32 %v2305, %v2537
        %v2539 = vand.u32 %v2028, 4294901760
        %2540 = vmatmul.f32.gmra.mxu0 %v2539
        %v2541 = vpop.f32.mrf.mxu0
        %v2542 = vadd.f32 %v2313, %v2541
        %v2543 = vand.u32 %v2032, 4294901760
        %2544 = vmatmul.f32.gmra.mxu0 %v2543
        %v2545 = vpop.f32.mrf.mxu0
        %v2546 = vadd.f32 %v2321, %v2545
        %2547 = vdwg.mxu0
        %v2548 = vand.u32 %v420, 4294901760
        %v2549 = vsub.f32 %v420, %v2548
        %2550 = vmatpush.msra.mxu0 %v2549
        %v2551 = vand.u32 %v418, 4294901760
        %v2552 = vsub.f32 %v418, %v2551
        %2553 = vmatpush.msra.mxu0 %v2552
        %v2554 = vand.u32 %v416, 4294901760
        %v2555 = vsub.f32 %v416, %v2554
        %2556 = vmatpush.msra.mxu0 %v2555
        %v2557 = vand.u32 %v414, 4294901760
        %v2558 = vsub.f32 %v414, %v2557
        %2559 = vmatpush.msra.mxu0 %v2558
        %v2560 = vand.u32 %v412, 4294901760
        %v2561 = vsub.f32 %v412, %v2560
        %2562 = vmatpush.msra.mxu0 %v2561
        %v2563 = vand.u32 %v410, 4294901760
        %v2564 = vsub.f32 %v410, %v2563
        %2565 = vmatpush.msra.mxu0 %v2564
        %v2566 = vand.u32 %v408, 4294901760
        %v2567 = vsub.f32 %v408, %v2566
        %2568 = vmatpush.msra.mxu0 %v2567
        %v2569 = vand.u32 %v406, 4294901760
        %v2570 = vsub.f32 %v406, %v2569
        %2571 = vmatpush.msra.mxu0 %v2570
        %v2572 = vand.u32 %v404, 4294901760
        %v2573 = vsub.f32 %v404, %v2572
        %2574 = vmatpush.msra.mxu0 %v2573
        %v2575 = vand.u32 %v402, 4294901760
        %v2576 = vsub.f32 %v402, %v2575
        %2577 = vmatpush.msra.mxu0 %v2576
        %v2578 = vand.u32 %v400, 4294901760
        %v2579 = vsub.f32 %v400, %v2578
        %2580 = vmatpush.msra.mxu0 %v2579
        %v2581 = vand.u32 %v398, 4294901760
        %v2582 = vsub.f32 %v398, %v2581
        %2583 = vmatpush.msra.mxu0 %v2582
        %v2584 = vand.u32 %v396, 4294901760
        %v2585 = vsub.f32 %v396, %v2584
        %2586 = vmatpush.msra.mxu0 %v2585
        %v2587 = vand.u32 %v394, 4294901760
        %v2588 = vsub.f32 %v394, %v2587
        %2589 = vmatpush.msra.mxu0 %v2588
        %v2590 = vand.u32 %v392, 4294901760
        %v2591 = vsub.f32 %v392, %v2590
        %2592 = vmatpush.msra.mxu0 %v2591
        %v2593 = vand.u32 %v390, 4294901760
        %v2594 = vsub.f32 %v390, %v2593
        %2595 = vmatpush.msra.mxu0 %v2594
        %v2596 = vand.u32 %v1166, 4294901760
        %v2597 = vsub.f32 %v1166, %v2596
        %2598 = vmatmul.f32.gmra.mxu0 %v2597
        %v2599 = vpop.f32.mrf.mxu0
        %v2600 = vadd.f32 %v2422, %v2599
        %v2601 = vand.u32 %v1170, 4294901760
        %v2602 = vsub.f32 %v1170, %v2601
        %2603 = vmatmul.f32.gmra.mxu0 %v2602
        %v2604 = vpop.f32.mrf.mxu0
        %v2605 = vadd.f32 %v2426, %v2604
        %v2606 = vand.u32 %v1174, 4294901760
        %v2607 = vsub.f32 %v1174, %v2606
        %2608 = vmatmul.f32.gmra.mxu0 %v2607
        %v2609 = vpop.f32.mrf.mxu0
        %v2610 = vadd.f32 %v2430, %v2609
        %v2611 = vand.u32 %v1178, 4294901760
        %v2612 = vsub.f32 %v1178, %v2611
        %2613 = vmatmul.f32.gmra.mxu0 %v2612
        %v2614 = vpop.f32.mrf.mxu0
        %v2615 = vadd.f32 %v2434, %v2614
        %v2616 = vand.u32 %v1182, 4294901760
        %v2617 = vsub.f32 %v1182, %v2616
        %2618 = vmatmul.f32.gmra.mxu0 %v2617
        %v2619 = vpop.f32.mrf.mxu0
        %v2620 = vadd.f32 %v2438, %v2619
        %v2621 = vand.u32 %v1186, 4294901760
        %v2622 = vsub.f32 %v1186, %v2621
        %2623 = vmatmul.f32.gmra.mxu0 %v2622
        %v2624 = vpop.f32.mrf.mxu0
        %v2625 = vadd.f32 %v2442, %v2624
        %v2626 = vand.u32 %v1190, 4294901760
        %v2627 = vsub.f32 %v1190, %v2626
        %2628 = vmatmul.f32.gmra.mxu0 %v2627
        %v2629 = vpop.f32.mrf.mxu0
        %v2630 = vadd.f32 %v2446, %v2629
        %v2631 = vand.u32 %v1194, 4294901760
        %v2632 = vsub.f32 %v1194, %v2631
        %2633 = vmatmul.f32.gmra.mxu0 %v2632
        %v2634 = vpop.f32.mrf.mxu0
        %v2635 = vadd.f32 %v2450, %v2634
        %v2636 = vand.u32 %v1198, 4294901760
        %v2637 = vsub.f32 %v1198, %v2636
        %2638 = vmatmul.f32.gmra.mxu0 %v2637
        %v2639 = vpop.f32.mrf.mxu0
        %v2640 = vadd.f32 %v2454, %v2639
        %v2641 = vand.u32 %v1202, 4294901760
        %v2642 = vsub.f32 %v1202, %v2641
        %2643 = vmatmul.f32.gmra.mxu0 %v2642
        %v2644 = vpop.f32.mrf.mxu0
        %v2645 = vadd.f32 %v2458, %v2644
        %v2646 = vand.u32 %v1206, 4294901760
        %v2647 = vsub.f32 %v1206, %v2646
        %2648 = vmatmul.f32.gmra.mxu0 %v2647
        %v2649 = vpop.f32.mrf.mxu0
        %v2650 = vadd.f32 %v2462, %v2649
        %v2651 = vand.u32 %v1210, 4294901760
        %v2652 = vsub.f32 %v1210, %v2651
        %2653 = vmatmul.f32.gmra.mxu0 %v2652
        %v2654 = vpop.f32.mrf.mxu0
        %v2655 = vadd.f32 %v2466, %v2654
        %v2656 = vand.u32 %v1214, 4294901760
        %v2657 = vsub.f32 %v1214, %v2656
        %2658 = vmatmul.f32.gmra.mxu0 %v2657
        %v2659 = vpop.f32.mrf.mxu0
        %v2660 = vadd.f32 %v2470, %v2659
        %v2661 = vand.u32 %v1218, 4294901760
        %v2662 = vsub.f32 %v1218, %v2661
        %2663 = vmatmul.f32.gmra.mxu0 %v2662
        %v2664 = vpop.f32.mrf.mxu0
        %v2665 = vadd.f32 %v2474, %v2664
        %v2666 = vand.u32 %v1222, 4294901760
        %v2667 = vsub.f32 %v1222, %v2666
        %2668 = vmatmul.f32.gmra.mxu0 %v2667
        %v2669 = vpop.f32.mrf.mxu0
        %v2670 = vadd.f32 %v2478, %v2669
        %v2671 = vand.u32 %v1226, 4294901760
        %v2672 = vsub.f32 %v1226, %v2671
        %2673 = vmatmul.f32.gmra.mxu0 %v2672
        %v2674 = vpop.f32.mrf.mxu0
        %v2675 = vadd.f32 %v2482, %v2674
        %v2676 = vand.u32 %v1972, 4294901760
        %v2677 = vsub.f32 %v1972, %v2676
        %2678 = vmatmul.f32.gmra.mxu0 %v2677
        %v2679 = vpop.f32.mrf.mxu0
        %v2680 = vadd.f32 %v2486, %v2679
        %v2681 = vand.u32 %v1976, 4294901760
        %v2682 = vsub.f32 %v1976, %v2681
        %2683 = vmatmul.f32.gmra.mxu0 %v2682
        %v2684 = vpop.f32.mrf.mxu0
        %v2685 = vadd.f32 %v2490, %v2684
        %v2686 = vand.u32 %v1980, 4294901760
        %v2687 = vsub.f32 %v1980, %v2686
        %2688 = vmatmul.f32.gmra.mxu0 %v2687
        %v2689 = vpop.f32.mrf.mxu0
        %v2690 = vadd.f32 %v2494, %v2689
        %v2691 = vand.u32 %v1984, 4294901760
        %v2692 = vsub.f32 %v1984, %v2691
        %2693 = vmatmul.f32.gmra.mxu0 %v2692
        %v2694 = vpop.f32.mrf.mxu0
        %v2695 = vadd.f32 %v2498, %v2694
        %v2696 = vand.u32 %v1988, 4294901760
        %v2697 = vsub.f32 %v1988, %v2696
        %2698 = vmatmul.f32.gmra.mxu0 %v2697
        %v2699 = vpop.f32.mrf.mxu0
        %v2700 = vadd.f32 %v2502, %v2699
        %v2701 = vand.u32 %v1992, 4294901760
        %v2702 = vsub.f32 %v1992, %v2701
        %2703 = vmatmul.f32.gmra.mxu0 %v2702
        %v2704 = vpop.f32.mrf.mxu0
        %v2705 = vadd.f32 %v2506, %v2704
        %v2706 = vand.u32 %v1996, 4294901760
        %v2707 = vsub.f32 %v1996, %v2706
        %2708 = vmatmul.f32.gmra.mxu0 %v2707
        %v2709 = vpop.f32.mrf.mxu0
        %v2710 = vadd.f32 %v2510, %v2709
        %v2711 = vand.u32 %v2000, 4294901760
        %v2712 = vsub.f32 %v2000, %v2711
        %2713 = vmatmul.f32.gmra.mxu0 %v2712
        %v2714 = vpop.f32.mrf.mxu0
        %v2715 = vadd.f32 %v2514, %v2714
        %v2716 = vand.u32 %v2004, 4294901760
        %v2717 = vsub.f32 %v2004, %v2716
        %2718 = vmatmul.f32.gmra.mxu0 %v2717
        %v2719 = vpop.f32.mrf.mxu0
        %v2720 = vadd.f32 %v2518, %v2719
        %v2721 = vand.u32 %v2008, 4294901760
        %v2722 = vsub.f32 %v2008, %v2721
        %2723 = vmatmul.f32.gmra.mxu0 %v2722
        %v2724 = vpop.f32.mrf.mxu0
        %v2725 = vadd.f32 %v2522, %v2724
        %v2726 = vand.u32 %v2012, 4294901760
        %v2727 = vsub.f32 %v2012, %v2726
        %2728 = vmatmul.f32.gmra.mxu0 %v2727
        %v2729 = vpop.f32.mrf.mxu0
        %v2730 = vadd.f32 %v2526, %v2729
        %v2731 = vand.u32 %v2016, 4294901760
        %v2732 = vsub.f32 %v2016, %v2731
        %2733 = vmatmul.f32.gmra.mxu0 %v2732
        %v2734 = vpop.f32.mrf.mxu0
        %v2735 = vadd.f32 %v2530, %v2734
        %v2736 = vand.u32 %v2020, 4294901760
        %v2737 = vsub.f32 %v2020, %v2736
        %2738 = vmatmul.f32.gmra.mxu0 %v2737
        %v2739 = vpop.f32.mrf.mxu0
        %v2740 = vadd.f32 %v2534, %v2739
        %v2741 = vand.u32 %v2024, 4294901760
        %v2742 = vsub.f32 %v2024, %v2741
        %2743 = vmatmul.f32.gmra.mxu0 %v2742
        %v2744 = vpop.f32.mrf.mxu0
        %v2745 = vadd.f32 %v2538, %v2744
        %v2746 = vand.u32 %v2028, 4294901760
        %v2747 = vsub.f32 %v2028, %v2746
        %2748 = vmatmul.f32.gmra.mxu0 %v2747
        %v2749 = vpop.f32.mrf.mxu0
        %v2750 = vadd.f32 %v2542, %v2749
        %v2751 = vand.u32 %v2032, 4294901760
        %v2752 = vsub.f32 %v2032, %v2751
        %2753 = vmatmul.f32.gmra.mxu0 %v2752
        %v2754 = vpop.f32.mrf.mxu0
        %v2755 = vadd.f32 %v2546, %v2754
        %2756 = vdwg.mxu0
        %v2757 = vand.u32 %v420, 4294901760
        %2758 = vmatpush.msra.mxu0 %v2757
        %v2759 = vand.u32 %v418, 4294901760
        %2760 = vmatpush.msra.mxu0 %v2759
        %v2761 = vand.u32 %v416, 4294901760
        %2762 = vmatpush.msra.mxu0 %v2761
        %v2763 = vand.u32 %v414, 4294901760
        %2764 = vmatpush.msra.mxu0 %v2763
        %v2765 = vand.u32 %v412, 4294901760
        %2766 = vmatpush.msra.mxu0 %v2765
        %v2767 = vand.u32 %v410, 4294901760
        %2768 = vmatpush.msra.mxu0 %v2767
        %v2769 = vand.u32 %v408, 4294901760
        %2770 = vmatpush.msra.mxu0 %v2769
        %v2771 = vand.u32 %v406, 4294901760
        %2772 = vmatpush.msra.mxu0 %v2771
        %v2773 = vand.u32 %v404, 4294901760
        %2774 = vmatpush.msra.mxu0 %v2773
        %v2775 = vand.u32 %v402, 4294901760
        %2776 = vmatpush.msra.mxu0 %v2775
        %v2777 = vand.u32 %v400, 4294901760
        %2778 = vmatpush.msra.mxu0 %v2777
        %v2779 = vand.u32 %v398, 4294901760
        %2780 = vmatpush.msra.mxu0 %v2779
        %v2781 = vand.u32 %v396, 4294901760
        %2782 = vmatpush.msra.mxu0 %v2781
        %v2783 = vand.u32 %v394, 4294901760
        %2784 = vmatpush.msra.mxu0 %v2783
        %v2785 = vand.u32 %v392, 4294901760
        %2786 = vmatpush.msra.mxu0 %v2785
        %v2787 = vand.u32 %v390, 4294901760
        %2788 = vmatpush.msra.mxu0 %v2787
        %v2789 = vand.u32 %v1166, 4294901760
        %v2790 = vsub.f32 %v1166, %v2789
        %v2791 = vand.u32 %v2790, 4294901760
        %2792 = vmatmul.f32.gmra.mxu0 %v2791
        %v2793 = vpop.f32.mrf.mxu0
        %v2794 = vadd.f32 %v2600, %v2793
        %v2795 = vand.u32 %v1170, 4294901760
        %v2796 = vsub.f32 %v1170, %v2795
        %v2797 = vand.u32 %v2796, 4294901760
        %2798 = vmatmul.f32.gmra.mxu0 %v2797
        %v2799 = vpop.f32.mrf.mxu0
        %v2800 = vadd.f32 %v2605, %v2799
        %v2801 = vand.u32 %v1174, 4294901760
        %v2802 = vsub.f32 %v1174, %v2801
        %v2803 = vand.u32 %v2802, 4294901760
        %2804 = vmatmul.f32.gmra.mxu0 %v2803
        %v2805 = vpop.f32.mrf.mxu0
        %v2806 = vadd.f32 %v2610, %v2805
        %v2807 = vand.u32 %v1178, 4294901760
        %v2808 = vsub.f32 %v1178, %v2807
        %v2809 = vand.u32 %v2808, 4294901760
        %2810 = vmatmul.f32.gmra.mxu0 %v2809
        %v2811 = vpop.f32.mrf.mxu0
        %v2812 = vadd.f32 %v2615, %v2811
        %v2813 = vand.u32 %v1182, 4294901760
        %v2814 = vsub.f32 %v1182, %v2813
        %v2815 = vand.u32 %v2814, 4294901760
        %2816 = vmatmul.f32.gmra.mxu0 %v2815
        %v2817 = vpop.f32.mrf.mxu0
        %v2818 = vadd.f32 %v2620, %v2817
        %v2819 = vand.u32 %v1186, 4294901760
        %v2820 = vsub.f32 %v1186, %v2819
        %v2821 = vand.u32 %v2820, 4294901760
        %2822 = vmatmul.f32.gmra.mxu0 %v2821
        %v2823 = vpop.f32.mrf.mxu0
        %v2824 = vadd.f32 %v2625, %v2823
        %v2825 = vand.u32 %v1190, 4294901760
        %v2826 = vsub.f32 %v1190, %v2825
        %v2827 = vand.u32 %v2826, 4294901760
        %2828 = vmatmul.f32.gmra.mxu0 %v2827
        %v2829 = vpop.f32.mrf.mxu0
        %v2830 = vadd.f32 %v2630, %v2829
        %v2831 = vand.u32 %v1194, 4294901760
        %v2832 = vsub.f32 %v1194, %v2831
        %v2833 = vand.u32 %v2832, 4294901760
        %2834 = vmatmul.f32.gmra.mxu0 %v2833
        %v2835 = vpop.f32.mrf.mxu0
        %v2836 = vadd.f32 %v2635, %v2835
        %v2837 = vand.u32 %v1198, 4294901760
        %v2838 = vsub.f32 %v1198, %v2837
        %v2839 = vand.u32 %v2838, 4294901760
        %2840 = vmatmul.f32.gmra.mxu0 %v2839
        %v2841 = vpop.f32.mrf.mxu0
        %v2842 = vadd.f32 %v2640, %v2841
        %v2843 = vand.u32 %v1202, 4294901760
        %v2844 = vsub.f32 %v1202, %v2843
        %v2845 = vand.u32 %v2844, 4294901760
        %2846 = vmatmul.f32.gmra.mxu0 %v2845
        %v2847 = vpop.f32.mrf.mxu0
        %v2848 = vadd.f32 %v2645, %v2847
        %v2849 = vand.u32 %v1206, 4294901760
        %v2850 = vsub.f32 %v1206, %v2849
        %v2851 = vand.u32 %v2850, 4294901760
        %2852 = vmatmul.f32.gmra.mxu0 %v2851
        %v2853 = vpop.f32.mrf.mxu0
        %v2854 = vadd.f32 %v2650, %v2853
        %v2855 = vand.u32 %v1210, 4294901760
        %v2856 = vsub.f32 %v1210, %v2855
        %v2857 = vand.u32 %v2856, 4294901760
        %2858 = vmatmul.f32.gmra.mxu0 %v2857
        %v2859 = vpop.f32.mrf.mxu0
        %v2860 = vadd.f32 %v2655, %v2859
        %v2861 = vand.u32 %v1214, 4294901760
        %v2862 = vsub.f32 %v1214, %v2861
        %v2863 = vand.u32 %v2862, 4294901760
        %2864 = vmatmul.f32.gmra.mxu0 %v2863
        %v2865 = vpop.f32.mrf.mxu0
        %v2866 = vadd.f32 %v2660, %v2865
        %v2867 = vand.u32 %v1218, 4294901760
        %v2868 = vsub.f32 %v1218, %v2867
        %v2869 = vand.u32 %v2868, 4294901760
        %2870 = vmatmul.f32.gmra.mxu0 %v2869
        %v2871 = vpop.f32.mrf.mxu0
        %v2872 = vadd.f32 %v2665, %v2871
        %v2873 = vand.u32 %v1222, 4294901760
        %v2874 = vsub.f32 %v1222, %v2873
        %v2875 = vand.u32 %v2874, 4294901760
        %2876 = vmatmul.f32.gmra.mxu0 %v2875
        %v2877 = vpop.f32.mrf.mxu0
        %v2878 = vadd.f32 %v2670, %v2877
        %v2879 = vand.u32 %v1226, 4294901760
        %v2880 = vsub.f32 %v1226, %v2879
        %v2881 = vand.u32 %v2880, 4294901760
        %2882 = vmatmul.f32.gmra.mxu0 %v2881
        %v2883 = vpop.f32.mrf.mxu0
        %v2884 = vadd.f32 %v2675, %v2883
        %v2885 = vand.u32 %v1972, 4294901760
        %v2886 = vsub.f32 %v1972, %v2885
        %v2887 = vand.u32 %v2886, 4294901760
        %2888 = vmatmul.f32.gmra.mxu0 %v2887
        %v2889 = vpop.f32.mrf.mxu0
        %v2890 = vadd.f32 %v2680, %v2889
        %v2891 = vand.u32 %v1976, 4294901760
        %v2892 = vsub.f32 %v1976, %v2891
        %v2893 = vand.u32 %v2892, 4294901760
        %2894 = vmatmul.f32.gmra.mxu0 %v2893
        %v2895 = vpop.f32.mrf.mxu0
        %v2896 = vadd.f32 %v2685, %v2895
        %v2897 = vand.u32 %v1980, 4294901760
        %v2898 = vsub.f32 %v1980, %v2897
        %v2899 = vand.u32 %v2898, 4294901760
        %2900 = vmatmul.f32.gmra.mxu0 %v2899
        %v2901 = vpop.f32.mrf.mxu0
        %v2902 = vadd.f32 %v2690, %v2901
        %v2903 = vand.u32 %v1984, 4294901760
        %v2904 = vsub.f32 %v1984, %v2903
        %v2905 = vand.u32 %v2904, 4294901760
        %2906 = vmatmul.f32.gmra.mxu0 %v2905
        %v2907 = vpop.f32.mrf.mxu0
        %v2908 = vadd.f32 %v2695, %v2907
        %v2909 = vand.u32 %v1988, 4294901760
        %v2910 = vsub.f32 %v1988, %v2909
        %v2911 = vand.u32 %v2910, 4294901760
        %2912 = vmatmul.f32.gmra.mxu0 %v2911
        %v2913 = vpop.f32.mrf.mxu0
        %v2914 = vadd.f32 %v2700, %v2913
        %v2915 = vand.u32 %v1992, 4294901760
        %v2916 = vsub.f32 %v1992, %v2915
        %v2917 = vand.u32 %v2916, 4294901760
        %2918 = vmatmul.f32.gmra.mxu0 %v2917
        %v2919 = vpop.f32.mrf.mxu0
        %v2920 = vadd.f32 %v2705, %v2919
        %v2921 = vand.u32 %v1996, 4294901760
        %v2922 = vsub.f32 %v1996, %v2921
        %v2923 = vand.u32 %v2922, 4294901760
        %2924 = vmatmul.f32.gmra.mxu0 %v2923
        %v2925 = vpop.f32.mrf.mxu0
        %v2926 = vadd.f32 %v2710, %v2925
        %v2927 = vand.u32 %v2000, 4294901760
        %v2928 = vsub.f32 %v2000, %v2927
        %v2929 = vand.u32 %v2928, 4294901760
        %2930 = vmatmul.f32.gmra.mxu0 %v2929
        %v2931 = vpop.f32.mrf.mxu0
        %v2932 = vadd.f32 %v2715, %v2931
        %v2933 = vand.u32 %v2004, 4294901760
        %v2934 = vsub.f32 %v2004, %v2933
        %v2935 = vand.u32 %v2934, 4294901760
        %2936 = vmatmul.f32.gmra.mxu0 %v2935
        %v2937 = vpop.f32.mrf.mxu0
        %v2938 = vadd.f32 %v2720, %v2937
        %v2939 = vand.u32 %v2008, 4294901760
        %v2940 = vsub.f32 %v2008, %v2939
        %v2941 = vand.u32 %v2940, 4294901760
        %2942 = vmatmul.f32.gmra.mxu0 %v2941
        %v2943 = vpop.f32.mrf.mxu0
        %v2944 = vadd.f32 %v2725, %v2943
        %v2945 = vand.u32 %v2012, 4294901760
        %v2946 = vsub.f32 %v2012, %v2945
        %v2947 = vand.u32 %v2946, 4294901760
        %2948 = vmatmul.f32.gmra.mxu0 %v2947
        %v2949 = vpop.f32.mrf.mxu0
        %v2950 = vadd.f32 %v2730, %v2949
        %v2951 = vand.u32 %v2016, 4294901760
        %v2952 = vsub.f32 %v2016, %v2951
        %v2953 = vand.u32 %v2952, 4294901760
        %2954 = vmatmul.f32.gmra.mxu0 %v2953
        %v2955 = vpop.f32.mrf.mxu0
        %v2956 = vadd.f32 %v2735, %v2955
        %v2957 = vand.u32 %v2020, 4294901760
        %v2958 = vsub.f32 %v2020, %v2957
        %v2959 = vand.u32 %v2958, 4294901760
        %2960 = vmatmul.f32.gmra.mxu0 %v2959
        %v2961 = vpop.f32.mrf.mxu0
        %v2962 = vadd.f32 %v2740, %v2961
        %v2963 = vand.u32 %v2024, 4294901760
        %v2964 = vsub.f32 %v2024, %v2963
        %v2965 = vand.u32 %v2964, 4294901760
        %2966 = vmatmul.f32.gmra.mxu0 %v2965
        %v2967 = vpop.f32.mrf.mxu0
        %v2968 = vadd.f32 %v2745, %v2967
        %v2969 = vand.u32 %v2028, 4294901760
        %v2970 = vsub.f32 %v2028, %v2969
        %v2971 = vand.u32 %v2970, 4294901760
        %2972 = vmatmul.f32.gmra.mxu0 %v2971
        %v2973 = vpop.f32.mrf.mxu0
        %v2974 = vadd.f32 %v2750, %v2973
        %v2975 = vand.u32 %v2032, 4294901760
        %v2976 = vsub.f32 %v2032, %v2975
        %v2977 = vand.u32 %v2976, 4294901760
        %2978 = vmatmul.f32.gmra.mxu0 %v2977
        %v2979 = vpop.f32.mrf.mxu0
        %v2980 = vadd.f32 %v2755, %v2979
        %2981 = vdwg.mxu0
        %v2982 = vand.u32 %v420, 4294901760
        %v2983 = vsub.f32 %v420, %v2982
        %v2984 = vand.u32 %v2983, 4294901760
        %2985 = vmatpush.msra.mxu0 %v2984
        %v2986 = vand.u32 %v418, 4294901760
        %v2987 = vsub.f32 %v418, %v2986
        %v2988 = vand.u32 %v2987, 4294901760
        %2989 = vmatpush.msra.mxu0 %v2988
        %v2990 = vand.u32 %v416, 4294901760
        %v2991 = vsub.f32 %v416, %v2990
        %v2992 = vand.u32 %v2991, 4294901760
        %2993 = vmatpush.msra.mxu0 %v2992
        %v2994 = vand.u32 %v414, 4294901760
        %v2995 = vsub.f32 %v414, %v2994
        %v2996 = vand.u32 %v2995, 4294901760
        %2997 = vmatpush.msra.mxu0 %v2996
        %v2998 = vand.u32 %v412, 4294901760
        %v2999 = vsub.f32 %v412, %v2998
        %v3000 = vand.u32 %v2999, 4294901760
        %3001 = vmatpush.msra.mxu0 %v3000
        %v3002 = vand.u32 %v410, 4294901760
        %v3003 = vsub.f32 %v410, %v3002
        %v3004 = vand.u32 %v3003, 4294901760
        %3005 = vmatpush.msra.mxu0 %v3004
        %v3006 = vand.u32 %v408, 4294901760
        %v3007 = vsub.f32 %v408, %v3006
        %v3008 = vand.u32 %v3007, 4294901760
        %3009 = vmatpush.msra.mxu0 %v3008
        %v3010 = vand.u32 %v406, 4294901760
        %v3011 = vsub.f32 %v406, %v3010
        %v3012 = vand.u32 %v3011, 4294901760
        %3013 = vmatpush.msra.mxu0 %v3012
        %v3014 = vand.u32 %v404, 4294901760
        %v3015 = vsub.f32 %v404, %v3014
        %v3016 = vand.u32 %v3015, 4294901760
        %3017 = vmatpush.msra.mxu0 %v3016
        %v3018 = vand.u32 %v402, 4294901760
        %v3019 = vsub.f32 %v402, %v3018
        %v3020 = vand.u32 %v3019, 4294901760
        %3021 = vmatpush.msra.mxu0 %v3020
        %v3022 = vand.u32 %v400, 4294901760
        %v3023 = vsub.f32 %v400, %v3022
        %v3024 = vand.u32 %v3023, 4294901760
        %3025 = vmatpush.msra.mxu0 %v3024
        %v3026 = vand.u32 %v398, 4294901760
        %v3027 = vsub.f32 %v398, %v3026
        %v3028 = vand.u32 %v3027, 4294901760
        %3029 = vmatpush.msra.mxu0 %v3028
        %v3030 = vand.u32 %v396, 4294901760
        %v3031 = vsub.f32 %v396, %v3030
        %v3032 = vand.u32 %v3031, 4294901760
        %3033 = vmatpush.msra.mxu0 %v3032
        %v3034 = vand.u32 %v394, 4294901760
        %v3035 = vsub.f32 %v394, %v3034
        %v3036 = vand.u32 %v3035, 4294901760
        %3037 = vmatpush.msra.mxu0 %v3036
        %v3038 = vand.u32 %v392, 4294901760
        %v3039 = vsub.f32 %v392, %v3038
        %v3040 = vand.u32 %v3039, 4294901760
        %3041 = vmatpush.msra.mxu0 %v3040
        %v3042 = vand.u32 %v390, 4294901760
        %v3043 = vsub.f32 %v390, %v3042
        %v3044 = vand.u32 %v3043, 4294901760
        %3045 = vmatpush.msra.mxu0 %v3044
        %v3046 = vand.u32 %v1166, 4294901760
        %3047 = vmatmul.f32.gmra.mxu0 %v3046
        %v3048 = vpop.f32.mrf.mxu0
        %v3049 = vadd.f32 %v2794, %v3048
        %v3050 = vand.u32 %v1170, 4294901760
        %3051 = vmatmul.f32.gmra.mxu0 %v3050
        %v3052 = vpop.f32.mrf.mxu0
        %v3053 = vadd.f32 %v2800, %v3052
        %v3054 = vand.u32 %v1174, 4294901760
        %3055 = vmatmul.f32.gmra.mxu0 %v3054
        %v3056 = vpop.f32.mrf.mxu0
        %v3057 = vadd.f32 %v2806, %v3056
        %v3058 = vand.u32 %v1178, 4294901760
        %3059 = vmatmul.f32.gmra.mxu0 %v3058
        %v3060 = vpop.f32.mrf.mxu0
        %v3061 = vadd.f32 %v2812, %v3060
        %v3062 = vand.u32 %v1182, 4294901760
        %3063 = vmatmul.f32.gmra.mxu0 %v3062
        %v3064 = vpop.f32.mrf.mxu0
        %v3065 = vadd.f32 %v2818, %v3064
        %v3066 = vand.u32 %v1186, 4294901760
        %3067 = vmatmul.f32.gmra.mxu0 %v3066
        %v3068 = vpop.f32.mrf.mxu0
        %v3069 = vadd.f32 %v2824, %v3068
        %v3070 = vand.u32 %v1190, 4294901760
        %3071 = vmatmul.f32.gmra.mxu0 %v3070
        %v3072 = vpop.f32.mrf.mxu0
        %v3073 = vadd.f32 %v2830, %v3072
        %v3074 = vand.u32 %v1194, 4294901760
        %3075 = vmatmul.f32.gmra.mxu0 %v3074
        %v3076 = vpop.f32.mrf.mxu0
        %v3077 = vadd.f32 %v2836, %v3076
        %v3078 = vand.u32 %v1198, 4294901760
        %3079 = vmatmul.f32.gmra.mxu0 %v3078
        %v3080 = vpop.f32.mrf.mxu0
        %v3081 = vadd.f32 %v2842, %v3080
        %v3082 = vand.u32 %v1202, 4294901760
        %3083 = vmatmul.f32.gmra.mxu0 %v3082
        %v3084 = vpop.f32.mrf.mxu0
        %v3085 = vadd.f32 %v2848, %v3084
        %v3086 = vand.u32 %v1206, 4294901760
        %3087 = vmatmul.f32.gmra.mxu0 %v3086
        %v3088 = vpop.f32.mrf.mxu0
        %v3089 = vadd.f32 %v2854, %v3088
        %v3090 = vand.u32 %v1210, 4294901760
        %3091 = vmatmul.f32.gmra.mxu0 %v3090
        %v3092 = vpop.f32.mrf.mxu0
        %v3093 = vadd.f32 %v2860, %v3092
        %v3094 = vand.u32 %v1214, 4294901760
        %3095 = vmatmul.f32.gmra.mxu0 %v3094
        %v3096 = vpop.f32.mrf.mxu0
        %v3097 = vadd.f32 %v2866, %v3096
        %v3098 = vand.u32 %v1218, 4294901760
        %3099 = vmatmul.f32.gmra.mxu0 %v3098
        %v3100 = vpop.f32.mrf.mxu0
        %v3101 = vadd.f32 %v2872, %v3100
        %v3102 = vand.u32 %v1222, 4294901760
        %3103 = vmatmul.f32.gmra.mxu0 %v3102
        %v3104 = vpop.f32.mrf.mxu0
        %v3105 = vadd.f32 %v2878, %v3104
        %v3106 = vand.u32 %v1226, 4294901760
        %3107 = vmatmul.f32.gmra.mxu0 %v3106
        %v3108 = vpop.f32.mrf.mxu0
        %v3109 = vadd.f32 %v2884, %v3108
        %v3110 = vand.u32 %v1972, 4294901760
        %3111 = vmatmul.f32.gmra.mxu0 %v3110
        %v3112 = vpop.f32.mrf.mxu0
        %v3113 = vadd.f32 %v2890, %v3112
        %v3114 = vand.u32 %v1976, 4294901760
        %3115 = vmatmul.f32.gmra.mxu0 %v3114
        %v3116 = vpop.f32.mrf.mxu0
        %v3117 = vadd.f32 %v2896, %v3116
        %v3118 = vand.u32 %v1980, 4294901760
        %3119 = vmatmul.f32.gmra.mxu0 %v3118
        %v3120 = vpop.f32.mrf.mxu0
        %v3121 = vadd.f32 %v2902, %v3120
        %v3122 = vand.u32 %v1984, 4294901760
        %3123 = vmatmul.f32.gmra.mxu0 %v3122
        %v3124 = vpop.f32.mrf.mxu0
        %v3125 = vadd.f32 %v2908, %v3124
        %v3126 = vand.u32 %v1988, 4294901760
        %3127 = vmatmul.f32.gmra.mxu0 %v3126
        %v3128 = vpop.f32.mrf.mxu0
        %v3129 = vadd.f32 %v2914, %v3128
        %v3130 = vand.u32 %v1992, 4294901760
        %3131 = vmatmul.f32.gmra.mxu0 %v3130
        %v3132 = vpop.f32.mrf.mxu0
        %v3133 = vadd.f32 %v2920, %v3132
        %v3134 = vand.u32 %v1996, 4294901760
        %3135 = vmatmul.f32.gmra.mxu0 %v3134
        %v3136 = vpop.f32.mrf.mxu0
        %v3137 = vadd.f32 %v2926, %v3136
        %v3138 = vand.u32 %v2000, 4294901760
        %3139 = vmatmul.f32.gmra.mxu0 %v3138
        %v3140 = vpop.f32.mrf.mxu0
        %v3141 = vadd.f32 %v2932, %v3140
        %v3142 = vand.u32 %v2004, 4294901760
        %3143 = vmatmul.f32.gmra.mxu0 %v3142
        %v3144 = vpop.f32.mrf.mxu0
        %v3145 = vadd.f32 %v2938, %v3144
        %v3146 = vand.u32 %v2008, 4294901760
        %3147 = vmatmul.f32.gmra.mxu0 %v3146
        %v3148 = vpop.f32.mrf.mxu0
        %v3149 = vadd.f32 %v2944, %v3148
        %v3150 = vand.u32 %v2012, 4294901760
        %3151 = vmatmul.f32.gmra.mxu0 %v3150
        %v3152 = vpop.f32.mrf.mxu0
        %v3153 = vadd.f32 %v2950, %v3152
        %v3154 = vand.u32 %v2016, 4294901760
        %3155 = vmatmul.f32.gmra.mxu0 %v3154
        %v3156 = vpop.f32.mrf.mxu0
        %v3157 = vadd.f32 %v2956, %v3156
        %v3158 = vand.u32 %v2020, 4294901760
        %3159 = vmatmul.f32.gmra.mxu0 %v3158
        %v3160 = vpop.f32.mrf.mxu0
        %v3161 = vadd.f32 %v2962, %v3160
        %v3162 = vand.u32 %v2024, 4294901760
        %3163 = vmatmul.f32.gmra.mxu0 %v3162
        %v3164 = vpop.f32.mrf.mxu0
        %v3165 = vadd.f32 %v2968, %v3164
        %v3166 = vand.u32 %v2028, 4294901760
        %3167 = vmatmul.f32.gmra.mxu0 %v3166
        %v3168 = vpop.f32.mrf.mxu0
        %v3169 = vadd.f32 %v2974, %v3168
        %v3170 = vand.u32 %v2032, 4294901760
        %3171 = vmatmul.f32.gmra.mxu0 %v3170
        %v3172 = vpop.f32.mrf.mxu0
        %v3173 = vadd.f32 %v2980, %v3172
        %3174 = vdwg.mxu0
        %v3175 = vand.u32 %v420, 4294901760
        %3176 = vmatpush.msra.mxu0 %v3175
        %v3177 = vand.u32 %v418, 4294901760
        %3178 = vmatpush.msra.mxu0 %v3177
        %v3179 = vand.u32 %v416, 4294901760
        %3180 = vmatpush.msra.mxu0 %v3179
        %v3181 = vand.u32 %v414, 4294901760
        %3182 = vmatpush.msra.mxu0 %v3181
        %v3183 = vand.u32 %v412, 4294901760
        %3184 = vmatpush.msra.mxu0 %v3183
        %v3185 = vand.u32 %v410, 4294901760
        %3186 = vmatpush.msra.mxu0 %v3185
        %v3187 = vand.u32 %v408, 4294901760
        %3188 = vmatpush.msra.mxu0 %v3187
        %v3189 = vand.u32 %v406, 4294901760
        %3190 = vmatpush.msra.mxu0 %v3189
        %v3191 = vand.u32 %v404, 4294901760
        %3192 = vmatpush.msra.mxu0 %v3191
        %v3193 = vand.u32 %v402, 4294901760
        %3194 = vmatpush.msra.mxu0 %v3193
        %v3195 = vand.u32 %v400, 4294901760
        %3196 = vmatpush.msra.mxu0 %v3195
        %v3197 = vand.u32 %v398, 4294901760
        %3198 = vmatpush.msra.mxu0 %v3197
        %v3199 = vand.u32 %v396, 4294901760
        %3200 = vmatpush.msra.mxu0 %v3199
        %v3201 = vand.u32 %v394, 4294901760
        %3202 = vmatpush.msra.mxu0 %v3201
        %v3203 = vand.u32 %v392, 4294901760
        %3204 = vmatpush.msra.mxu0 %v3203
        %v3205 = vand.u32 %v390, 4294901760
        %3206 = vmatpush.msra.mxu0 %v3205
        %v3207 = vand.u32 %v1166, 4294901760
        %3208 = vmatmul.f32.gmra.mxu0 %v3207
        %v3209 = vpop.f32.mrf.mxu0
        %v3210 = vadd.f32 %v3049, %v3209
        %v3211 = vand.u32 %v1170, 4294901760
        %3212 = vmatmul.f32.gmra.mxu0 %v3211
        %v3213 = vpop.f32.mrf.mxu0
        %v3214 = vadd.f32 %v3053, %v3213
        %v3215 = vand.u32 %v1174, 4294901760
        %3216 = vmatmul.f32.gmra.mxu0 %v3215
        %v3217 = vpop.f32.mrf.mxu0
        %v3218 = vadd.f32 %v3057, %v3217
        %v3219 = vand.u32 %v1178, 4294901760
        %3220 = vmatmul.f32.gmra.mxu0 %v3219
        %v3221 = vpop.f32.mrf.mxu0
        %v3222 = vadd.f32 %v3061, %v3221
        %v3223 = vand.u32 %v1182, 4294901760
        %3224 = vmatmul.f32.gmra.mxu0 %v3223
        %v3225 = vpop.f32.mrf.mxu0
        %v3226 = vadd.f32 %v3065, %v3225
        %v3227 = vand.u32 %v1186, 4294901760
        %3228 = vmatmul.f32.gmra.mxu0 %v3227
        %v3229 = vpop.f32.mrf.mxu0
        %v3230 = vadd.f32 %v3069, %v3229
        %v3231 = vand.u32 %v1190, 4294901760
        %3232 = vmatmul.f32.gmra.mxu0 %v3231
        %v3233 = vpop.f32.mrf.mxu0
        %v3234 = vadd.f32 %v3073, %v3233
        %v3235 = vand.u32 %v1194, 4294901760
        %3236 = vmatmul.f32.gmra.mxu0 %v3235
        %v3237 = vpop.f32.mrf.mxu0
        %v3238 = vadd.f32 %v3077, %v3237
        %v3239 = vand.u32 %v1198, 4294901760
        %3240 = vmatmul.f32.gmra.mxu0 %v3239
        %v3241 = vpop.f32.mrf.mxu0
        %v3242 = vadd.f32 %v3081, %v3241
        %v3243 = vand.u32 %v1202, 4294901760
        %3244 = vmatmul.f32.gmra.mxu0 %v3243
        %v3245 = vpop.f32.mrf.mxu0
        %v3246 = vadd.f32 %v3085, %v3245
        %v3247 = vand.u32 %v1206, 4294901760
        %3248 = vmatmul.f32.gmra.mxu0 %v3247
        %v3249 = vpop.f32.mrf.mxu0
        %v3250 = vadd.f32 %v3089, %v3249
        %v3251 = vand.u32 %v1210, 4294901760
        %3252 = vmatmul.f32.gmra.mxu0 %v3251
        %v3253 = vpop.f32.mrf.mxu0
        %v3254 = vadd.f32 %v3093, %v3253
        %v3255 = vand.u32 %v1214, 4294901760
        %3256 = vmatmul.f32.gmra.mxu0 %v3255
        %v3257 = vpop.f32.mrf.mxu0
        %v3258 = vadd.f32 %v3097, %v3257
        %v3259 = vand.u32 %v1218, 4294901760
        %3260 = vmatmul.f32.gmra.mxu0 %v3259
        %v3261 = vpop.f32.mrf.mxu0
        %v3262 = vadd.f32 %v3101, %v3261
        %v3263 = vand.u32 %v1222, 4294901760
        %3264 = vmatmul.f32.gmra.mxu0 %v3263
        %v3265 = vpop.f32.mrf.mxu0
        %v3266 = vadd.f32 %v3105, %v3265
        %v3267 = vand.u32 %v1226, 4294901760
        %3268 = vmatmul.f32.gmra.mxu0 %v3267
        %v3269 = vpop.f32.mrf.mxu0
        %v3270 = vadd.f32 %v3109, %v3269
        %v3271 = vand.u32 %v1972, 4294901760
        %3272 = vmatmul.f32.gmra.mxu0 %v3271
        %v3273 = vpop.f32.mrf.mxu0
        %v3274 = vadd.f32 %v3113, %v3273
        %v3275 = vand.u32 %v1976, 4294901760
        %3276 = vmatmul.f32.gmra.mxu0 %v3275
        %v3277 = vpop.f32.mrf.mxu0
        %v3278 = vadd.f32 %v3117, %v3277
        %v3279 = vand.u32 %v1980, 4294901760
        %3280 = vmatmul.f32.gmra.mxu0 %v3279
        %v3281 = vpop.f32.mrf.mxu0
        %v3282 = vadd.f32 %v3121, %v3281
        %v3283 = vand.u32 %v1984, 4294901760
        %3284 = vmatmul.f32.gmra.mxu0 %v3283
        %v3285 = vpop.f32.mrf.mxu0
        %v3286 = vadd.f32 %v3125, %v3285
        %v3287 = vand.u32 %v1988, 4294901760
        %3288 = vmatmul.f32.gmra.mxu0 %v3287
        %v3289 = vpop.f32.mrf.mxu0
        %v3290 = vadd.f32 %v3129, %v3289
        %v3291 = vand.u32 %v1992, 4294901760
        %3292 = vmatmul.f32.gmra.mxu0 %v3291
        %v3293 = vpop.f32.mrf.mxu0
        %v3294 = vadd.f32 %v3133, %v3293
        %v3295 = vand.u32 %v1996, 4294901760
        %3296 = vmatmul.f32.gmra.mxu0 %v3295
        %v3297 = vpop.f32.mrf.mxu0
        %v3298 = vadd.f32 %v3137, %v3297
        %v3299 = vand.u32 %v2000, 4294901760
        %3300 = vmatmul.f32.gmra.mxu0 %v3299
        %v3301 = vpop.f32.mrf.mxu0
        %v3302 = vadd.f32 %v3141, %v3301
        %v3303 = vand.u32 %v2004, 4294901760
        %3304 = vmatmul.f32.gmra.mxu0 %v3303
        %v3305 = vpop.f32.mrf.mxu0
        %v3306 = vadd.f32 %v3145, %v3305
        %v3307 = vand.u32 %v2008, 4294901760
        %3308 = vmatmul.f32.gmra.mxu0 %v3307
        %v3309 = vpop.f32.mrf.mxu0
        %v3310 = vadd.f32 %v3149, %v3309
        %v3311 = vand.u32 %v2012, 4294901760
        %3312 = vmatmul.f32.gmra.mxu0 %v3311
        %v3313 = vpop.f32.mrf.mxu0
        %v3314 = vadd.f32 %v3153, %v3313
        %v3315 = vand.u32 %v2016, 4294901760
        %3316 = vmatmul.f32.gmra.mxu0 %v3315
        %v3317 = vpop.f32.mrf.mxu0
        %v3318 = vadd.f32 %v3157, %v3317
        %v3319 = vand.u32 %v2020, 4294901760
        %3320 = vmatmul.f32.gmra.mxu0 %v3319
        %v3321 = vpop.f32.mrf.mxu0
        %v3322 = vadd.f32 %v3161, %v3321
        %v3323 = vand.u32 %v2024, 4294901760
        %3324 = vmatmul.f32.gmra.mxu0 %v3323
        %v3325 = vpop.f32.mrf.mxu0
        %v3326 = vadd.f32 %v3165, %v3325
        %v3327 = vand.u32 %v2028, 4294901760
        %3328 = vmatmul.f32.gmra.mxu0 %v3327
        %v3329 = vpop.f32.mrf.mxu0
        %v3330 = vadd.f32 %v3169, %v3329
        %v3331 = vand.u32 %v2032, 4294901760
        %3332 = vmatmul.f32.gmra.mxu0 %v3331
        %v3333 = vpop.f32.mrf.mxu0
        %v3334 = vadd.f32 %v3173, %v3333
        %3335 = vdwg.mxu0
        %v3336 = vand.u32 %v421, 4294901760
        %3337 = vmatpush.msra.mxu0 %v3336
        %v3338 = vand.u32 %v419, 4294901760
        %3339 = vmatpush.msra.mxu0 %v3338
        %v3340 = vand.u32 %v417, 4294901760
        %3341 = vmatpush.msra.mxu0 %v3340
        %v3342 = vand.u32 %v415, 4294901760
        %3343 = vmatpush.msra.mxu0 %v3342
        %v3344 = vand.u32 %v413, 4294901760
        %3345 = vmatpush.msra.mxu0 %v3344
        %v3346 = vand.u32 %v411, 4294901760
        %3347 = vmatpush.msra.mxu0 %v3346
        %v3348 = vand.u32 %v409, 4294901760
        %3349 = vmatpush.msra.mxu0 %v3348
        %v3350 = vand.u32 %v407, 4294901760
        %3351 = vmatpush.msra.mxu0 %v3350
        %v3352 = vand.u32 %v405, 4294901760
        %3353 = vmatpush.msra.mxu0 %v3352
        %v3354 = vand.u32 %v403, 4294901760
        %3355 = vmatpush.msra.mxu0 %v3354
        %v3356 = vand.u32 %v401, 4294901760
        %3357 = vmatpush.msra.mxu0 %v3356
        %v3358 = vand.u32 %v399, 4294901760
        %3359 = vmatpush.msra.mxu0 %v3358
        %v3360 = vand.u32 %v397, 4294901760
        %3361 = vmatpush.msra.mxu0 %v3360
        %v3362 = vand.u32 %v395, 4294901760
        %3363 = vmatpush.msra.mxu0 %v3362
        %v3364 = vand.u32 %v393, 4294901760
        %3365 = vmatpush.msra.mxu0 %v3364
        %v3366 = vand.u32 %v391, 4294901760
        %3367 = vmatpush.msra.mxu0 %v3366
        %v3368 = vand.u32 %v1166, 4294901760
        %v3369 = vsub.f32 %v1166, %v3368
        %v3370 = vand.u32 %v3369, 4294901760
        %v3371 = vsub.f32 %v3369, %v3370
        %v3372 = vand.u32 %v3371, 4294901760
        %3373 = vmatmul.f32.gmra.mxu0 %v3372
        %v3374 = vpop.f32.mrf.mxu0
        %v3375 = vadd.f32 0.0, %v3374
        %v3376 = vand.u32 %v1170, 4294901760
        %v3377 = vsub.f32 %v1170, %v3376
        %v3378 = vand.u32 %v3377, 4294901760
        %v3379 = vsub.f32 %v3377, %v3378
        %v3380 = vand.u32 %v3379, 4294901760
        %3381 = vmatmul.f32.gmra.mxu0 %v3380
        %v3382 = vpop.f32.mrf.mxu0
        %v3383 = vadd.f32 0.0, %v3382
        %v3384 = vand.u32 %v1174, 4294901760
        %v3385 = vsub.f32 %v1174, %v3384
        %v3386 = vand.u32 %v3385, 4294901760
        %v3387 = vsub.f32 %v3385, %v3386
        %v3388 = vand.u32 %v3387, 4294901760
        %3389 = vmatmul.f32.gmra.mxu0 %v3388
        %v3390 = vpop.f32.mrf.mxu0
        %v3391 = vadd.f32 0.0, %v3390
        %v3392 = vand.u32 %v1178, 4294901760
        %v3393 = vsub.f32 %v1178, %v3392
        %v3394 = vand.u32 %v3393, 4294901760
        %v3395 = vsub.f32 %v3393, %v3394
        %v3396 = vand.u32 %v3395, 4294901760
        %3397 = vmatmul.f32.gmra.mxu0 %v3396
        %v3398 = vpop.f32.mrf.mxu0
        %v3399 = vadd.f32 0.0, %v3398
        %v3400 = vand.u32 %v1182, 4294901760
        %v3401 = vsub.f32 %v1182, %v3400
        %v3402 = vand.u32 %v3401, 4294901760
        %v3403 = vsub.f32 %v3401, %v3402
        %v3404 = vand.u32 %v3403, 4294901760
        %3405 = vmatmul.f32.gmra.mxu0 %v3404
        %v3406 = vpop.f32.mrf.mxu0
        %v3407 = vadd.f32 0.0, %v3406
        %v3408 = vand.u32 %v1186, 4294901760
        %v3409 = vsub.f32 %v1186, %v3408
        %v3410 = vand.u32 %v3409, 4294901760
        %v3411 = vsub.f32 %v3409, %v3410
        %v3412 = vand.u32 %v3411, 4294901760
        %3413 = vmatmul.f32.gmra.mxu0 %v3412
        %v3414 = vpop.f32.mrf.mxu0
        %v3415 = vadd.f32 0.0, %v3414
        %v3416 = vand.u32 %v1190, 4294901760
        %v3417 = vsub.f32 %v1190, %v3416
        %v3418 = vand.u32 %v3417, 4294901760
        %v3419 = vsub.f32 %v3417, %v3418
        %v3420 = vand.u32 %v3419, 4294901760
        %3421 = vmatmul.f32.gmra.mxu0 %v3420
        %v3422 = vpop.f32.mrf.mxu0
        %v3423 = vadd.f32 0.0, %v3422
        %v3424 = vand.u32 %v1194, 4294901760
        %v3425 = vsub.f32 %v1194, %v3424
        %v3426 = vand.u32 %v3425, 4294901760
        %v3427 = vsub.f32 %v3425, %v3426
        %v3428 = vand.u32 %v3427, 4294901760
        %3429 = vmatmul.f32.gmra.mxu0 %v3428
        %v3430 = vpop.f32.mrf.mxu0
        %v3431 = vadd.f32 0.0, %v3430
        %v3432 = vand.u32 %v1198, 4294901760
        %v3433 = vsub.f32 %v1198, %v3432
        %v3434 = vand.u32 %v3433, 4294901760
        %v3435 = vsub.f32 %v3433, %v3434
        %v3436 = vand.u32 %v3435, 4294901760
        %3437 = vmatmul.f32.gmra.mxu0 %v3436
        %v3438 = vpop.f32.mrf.mxu0
        %v3439 = vadd.f32 0.0, %v3438
        %v3440 = vand.u32 %v1202, 4294901760
        %v3441 = vsub.f32 %v1202, %v3440
        %v3442 = vand.u32 %v3441, 4294901760
        %v3443 = vsub.f32 %v3441, %v3442
        %v3444 = vand.u32 %v3443, 4294901760
        %3445 = vmatmul.f32.gmra.mxu0 %v3444
        %v3446 = vpop.f32.mrf.mxu0
        %v3447 = vadd.f32 0.0, %v3446
        %v3448 = vand.u32 %v1206, 4294901760
        %v3449 = vsub.f32 %v1206, %v3448
        %v3450 = vand.u32 %v3449, 4294901760
        %v3451 = vsub.f32 %v3449, %v3450
        %v3452 = vand.u32 %v3451, 4294901760
        %3453 = vmatmul.f32.gmra.mxu0 %v3452
        %v3454 = vpop.f32.mrf.mxu0
        %v3455 = vadd.f32 0.0, %v3454
        %v3456 = vand.u32 %v1210, 4294901760
        %v3457 = vsub.f32 %v1210, %v3456
        %v3458 = vand.u32 %v3457, 4294901760
        %v3459 = vsub.f32 %v3457, %v3458
        %v3460 = vand.u32 %v3459, 4294901760
        %3461 = vmatmul.f32.gmra.mxu0 %v3460
        %v3462 = vpop.f32.mrf.mxu0
        %v3463 = vadd.f32 0.0, %v3462
        %v3464 = vand.u32 %v1214, 4294901760
        %v3465 = vsub.f32 %v1214, %v3464
        %v3466 = vand.u32 %v3465, 4294901760
        %v3467 = vsub.f32 %v3465, %v3466
        %v3468 = vand.u32 %v3467, 4294901760
        %3469 = vmatmul.f32.gmra.mxu0 %v3468
        %v3470 = vpop.f32.mrf.mxu0
        %v3471 = vadd.f32 0.0, %v3470
        %v3472 = vand.u32 %v1218, 4294901760
        %v3473 = vsub.f32 %v1218, %v3472
        %v3474 = vand.u32 %v3473, 4294901760
        %v3475 = vsub.f32 %v3473, %v3474
        %v3476 = vand.u32 %v3475, 4294901760
        %3477 = vmatmul.f32.gmra.mxu0 %v3476
        %v3478 = vpop.f32.mrf.mxu0
        %v3479 = vadd.f32 0.0, %v3478
        %v3480 = vand.u32 %v1222, 4294901760
        %v3481 = vsub.f32 %v1222, %v3480
        %v3482 = vand.u32 %v3481, 4294901760
        %v3483 = vsub.f32 %v3481, %v3482
        %v3484 = vand.u32 %v3483, 4294901760
        %3485 = vmatmul.f32.gmra.mxu0 %v3484
        %v3486 = vpop.f32.mrf.mxu0
        %v3487 = vadd.f32 0.0, %v3486
        %v3488 = vand.u32 %v1226, 4294901760
        %v3489 = vsub.f32 %v1226, %v3488
        %v3490 = vand.u32 %v3489, 4294901760
        %v3491 = vsub.f32 %v3489, %v3490
        %v3492 = vand.u32 %v3491, 4294901760
        %3493 = vmatmul.f32.gmra.mxu0 %v3492
        %v3494 = vpop.f32.mrf.mxu0
        %v3495 = vadd.f32 0.0, %v3494
        %v3496 = vand.u32 %v1972, 4294901760
        %v3497 = vsub.f32 %v1972, %v3496
        %v3498 = vand.u32 %v3497, 4294901760
        %v3499 = vsub.f32 %v3497, %v3498
        %v3500 = vand.u32 %v3499, 4294901760
        %3501 = vmatmul.f32.gmra.mxu0 %v3500
        %v3502 = vpop.f32.mrf.mxu0
        %v3503 = vadd.f32 0.0, %v3502
        %v3504 = vand.u32 %v1976, 4294901760
        %v3505 = vsub.f32 %v1976, %v3504
        %v3506 = vand.u32 %v3505, 4294901760
        %v3507 = vsub.f32 %v3505, %v3506
        %v3508 = vand.u32 %v3507, 4294901760
        %3509 = vmatmul.f32.gmra.mxu0 %v3508
        %v3510 = vpop.f32.mrf.mxu0
        %v3511 = vadd.f32 0.0, %v3510
        %v3512 = vand.u32 %v1980, 4294901760
        %v3513 = vsub.f32 %v1980, %v3512
        %v3514 = vand.u32 %v3513, 4294901760
        %v3515 = vsub.f32 %v3513, %v3514
        %v3516 = vand.u32 %v3515, 4294901760
        %3517 = vmatmul.f32.gmra.mxu0 %v3516
        %v3518 = vpop.f32.mrf.mxu0
        %v3519 = vadd.f32 0.0, %v3518
        %v3520 = vand.u32 %v1984, 4294901760
        %v3521 = vsub.f32 %v1984, %v3520
        %v3522 = vand.u32 %v3521, 4294901760
        %v3523 = vsub.f32 %v3521, %v3522
        %v3524 = vand.u32 %v3523, 4294901760
        %3525 = vmatmul.f32.gmra.mxu0 %v3524
        %v3526 = vpop.f32.mrf.mxu0
        %v3527 = vadd.f32 0.0, %v3526
        %v3528 = vand.u32 %v1988, 4294901760
        %v3529 = vsub.f32 %v1988, %v3528
        %v3530 = vand.u32 %v3529, 4294901760
        %v3531 = vsub.f32 %v3529, %v3530
        %v3532 = vand.u32 %v3531, 4294901760
        %3533 = vmatmul.f32.gmra.mxu0 %v3532
        %v3534 = vpop.f32.mrf.mxu0
        %v3535 = vadd.f32 0.0, %v3534
        %v3536 = vand.u32 %v1992, 4294901760
        %v3537 = vsub.f32 %v1992, %v3536
        %v3538 = vand.u32 %v3537, 4294901760
        %v3539 = vsub.f32 %v3537, %v3538
        %v3540 = vand.u32 %v3539, 4294901760
        %3541 = vmatmul.f32.gmra.mxu0 %v3540
        %v3542 = vpop.f32.mrf.mxu0
        %v3543 = vadd.f32 0.0, %v3542
        %v3544 = vand.u32 %v1996, 4294901760
        %v3545 = vsub.f32 %v1996, %v3544
        %v3546 = vand.u32 %v3545, 4294901760
        %v3547 = vsub.f32 %v3545, %v3546
        %v3548 = vand.u32 %v3547, 4294901760
        %3549 = vmatmul.f32.gmra.mxu0 %v3548
        %v3550 = vpop.f32.mrf.mxu0
        %v3551 = vadd.f32 0.0, %v3550
        %v3552 = vand.u32 %v2000, 4294901760
        %v3553 = vsub.f32 %v2000, %v3552
        %v3554 = vand.u32 %v3553, 4294901760
        %v3555 = vsub.f32 %v3553, %v3554
        %v3556 = vand.u32 %v3555, 4294901760
        %3557 = vmatmul.f32.gmra.mxu0 %v3556
        %v3558 = vpop.f32.mrf.mxu0
        %v3559 = vadd.f32 0.0, %v3558
        %v3560 = vand.u32 %v2004, 4294901760
        %v3561 = vsub.f32 %v2004, %v3560
        %v3562 = vand.u32 %v3561, 4294901760
        %v3563 = vsub.f32 %v3561, %v3562
        %v3564 = vand.u32 %v3563, 4294901760
        %3565 = vmatmul.f32.gmra.mxu0 %v3564
        %v3566 = vpop.f32.mrf.mxu0
        %v3567 = vadd.f32 0.0, %v3566
        %v3568 = vand.u32 %v2008, 4294901760
        %v3569 = vsub.f32 %v2008, %v3568
        %v3570 = vand.u32 %v3569, 4294901760
        %v3571 = vsub.f32 %v3569, %v3570
        %v3572 = vand.u32 %v3571, 4294901760
        %3573 = vmatmul.f32.gmra.mxu0 %v3572
        %v3574 = vpop.f32.mrf.mxu0
        %v3575 = vadd.f32 0.0, %v3574
        %v3576 = vand.u32 %v2012, 4294901760
        %v3577 = vsub.f32 %v2012, %v3576
        %v3578 = vand.u32 %v3577, 4294901760
        %v3579 = vsub.f32 %v3577, %v3578
        %v3580 = vand.u32 %v3579, 4294901760
        %3581 = vmatmul.f32.gmra.mxu0 %v3580
        %v3582 = vpop.f32.mrf.mxu0
        %v3583 = vadd.f32 0.0, %v3582
        %v3584 = vand.u32 %v2016, 4294901760
        %v3585 = vsub.f32 %v2016, %v3584
        %v3586 = vand.u32 %v3585, 4294901760
        %v3587 = vsub.f32 %v3585, %v3586
        %v3588 = vand.u32 %v3587, 4294901760
        %3589 = vmatmul.f32.gmra.mxu0 %v3588
        %v3590 = vpop.f32.mrf.mxu0
        %v3591 = vadd.f32 0.0, %v3590
        %v3592 = vand.u32 %v2020, 4294901760
        %v3593 = vsub.f32 %v2020, %v3592
        %v3594 = vand.u32 %v3593, 4294901760
        %v3595 = vsub.f32 %v3593, %v3594
        %v3596 = vand.u32 %v3595, 4294901760
        %3597 = vmatmul.f32.gmra.mxu0 %v3596
        %v3598 = vpop.f32.mrf.mxu0
        %v3599 = vadd.f32 0.0, %v3598
        %v3600 = vand.u32 %v2024, 4294901760
        %v3601 = vsub.f32 %v2024, %v3600
        %v3602 = vand.u32 %v3601, 4294901760
        %v3603 = vsub.f32 %v3601, %v3602
        %v3604 = vand.u32 %v3603, 4294901760
        %3605 = vmatmul.f32.gmra.mxu0 %v3604
        %v3606 = vpop.f32.mrf.mxu0
        %v3607 = vadd.f32 0.0, %v3606
        %v3608 = vand.u32 %v2028, 4294901760
        %v3609 = vsub.f32 %v2028, %v3608
        %v3610 = vand.u32 %v3609, 4294901760
        %v3611 = vsub.f32 %v3609, %v3610
        %v3612 = vand.u32 %v3611, 4294901760
        %3613 = vmatmul.f32.gmra.mxu0 %v3612
        %v3614 = vpop.f32.mrf.mxu0
        %v3615 = vadd.f32 0.0, %v3614
        %v3616 = vand.u32 %v2032, 4294901760
        %v3617 = vsub.f32 %v2032, %v3616
        %v3618 = vand.u32 %v3617, 4294901760
        %v3619 = vsub.f32 %v3617, %v3618
        %v3620 = vand.u32 %v3619, 4294901760
        %3621 = vmatmul.f32.gmra.mxu0 %v3620
        %v3622 = vpop.f32.mrf.mxu0
        %v3623 = vadd.f32 0.0, %v3622
        %3624 = vdwg.mxu0
        %v3625 = vand.u32 %v421, 4294901760
        %v3626 = vsub.f32 %v421, %v3625
        %v3627 = vand.u32 %v3626, 4294901760
        %v3628 = vsub.f32 %v3626, %v3627
        %v3629 = vand.u32 %v3628, 4294901760
        %3630 = vmatpush.msra.mxu0 %v3629
        %v3631 = vand.u32 %v419, 4294901760
        %v3632 = vsub.f32 %v419, %v3631
        %v3633 = vand.u32 %v3632, 4294901760
        %v3634 = vsub.f32 %v3632, %v3633
        %v3635 = vand.u32 %v3634, 4294901760
        %3636 = vmatpush.msra.mxu0 %v3635
        %v3637 = vand.u32 %v417, 4294901760
        %v3638 = vsub.f32 %v417, %v3637
        %v3639 = vand.u32 %v3638, 4294901760
        %v3640 = vsub.f32 %v3638, %v3639
        %v3641 = vand.u32 %v3640, 4294901760
        %3642 = vmatpush.msra.mxu0 %v3641
        %v3643 = vand.u32 %v415, 4294901760
        %v3644 = vsub.f32 %v415, %v3643
        %v3645 = vand.u32 %v3644, 4294901760
        %v3646 = vsub.f32 %v3644, %v3645
        %v3647 = vand.u32 %v3646, 4294901760
        %3648 = vmatpush.msra.mxu0 %v3647
        %v3649 = vand.u32 %v413, 4294901760
        %v3650 = vsub.f32 %v413, %v3649
        %v3651 = vand.u32 %v3650, 4294901760
        %v3652 = vsub.f32 %v3650, %v3651
        %v3653 = vand.u32 %v3652, 4294901760
        %3654 = vmatpush.msra.mxu0 %v3653
        %v3655 = vand.u32 %v411, 4294901760
        %v3656 = vsub.f32 %v411, %v3655
        %v3657 = vand.u32 %v3656, 4294901760
        %v3658 = vsub.f32 %v3656, %v3657
        %v3659 = vand.u32 %v3658, 4294901760
        %3660 = vmatpush.msra.mxu0 %v3659
        %v3661 = vand.u32 %v409, 4294901760
        %v3662 = vsub.f32 %v409, %v3661
        %v3663 = vand.u32 %v3662, 4294901760
        %v3664 = vsub.f32 %v3662, %v3663
        %v3665 = vand.u32 %v3664, 4294901760
        %3666 = vmatpush.msra.mxu0 %v3665
        %v3667 = vand.u32 %v407, 4294901760
        %v3668 = vsub.f32 %v407, %v3667
        %v3669 = vand.u32 %v3668, 4294901760
        %v3670 = vsub.f32 %v3668, %v3669
        %v3671 = vand.u32 %v3670, 4294901760
        %3672 = vmatpush.msra.mxu0 %v3671
        %v3673 = vand.u32 %v405, 4294901760
        %v3674 = vsub.f32 %v405, %v3673
        %v3675 = vand.u32 %v3674, 4294901760
        %v3676 = vsub.f32 %v3674, %v3675
        %v3677 = vand.u32 %v3676, 4294901760
        %3678 = vmatpush.msra.mxu0 %v3677
        %v3679 = vand.u32 %v403, 4294901760
        %v3680 = vsub.f32 %v403, %v3679
        %v3681 = vand.u32 %v3680, 4294901760
        %v3682 = vsub.f32 %v3680, %v3681
        %v3683 = vand.u32 %v3682, 4294901760
        %3684 = vmatpush.msra.mxu0 %v3683
        %v3685 = vand.u32 %v401, 4294901760
        %v3686 = vsub.f32 %v401, %v3685
        %v3687 = vand.u32 %v3686, 4294901760
        %v3688 = vsub.f32 %v3686, %v3687
        %v3689 = vand.u32 %v3688, 4294901760
        %3690 = vmatpush.msra.mxu0 %v3689
        %v3691 = vand.u32 %v399, 4294901760
        %v3692 = vsub.f32 %v399, %v3691
        %v3693 = vand.u32 %v3692, 4294901760
        %v3694 = vsub.f32 %v3692, %v3693
        %v3695 = vand.u32 %v3694, 4294901760
        %3696 = vmatpush.msra.mxu0 %v3695
        %v3697 = vand.u32 %v397, 4294901760
        %v3698 = vsub.f32 %v397, %v3697
        %v3699 = vand.u32 %v3698, 4294901760
        %v3700 = vsub.f32 %v3698, %v3699
        %v3701 = vand.u32 %v3700, 4294901760
        %3702 = vmatpush.msra.mxu0 %v3701
        %v3703 = vand.u32 %v395, 4294901760
        %v3704 = vsub.f32 %v395, %v3703
        %v3705 = vand.u32 %v3704, 4294901760
        %v3706 = vsub.f32 %v3704, %v3705
        %v3707 = vand.u32 %v3706, 4294901760
        %3708 = vmatpush.msra.mxu0 %v3707
        %v3709 = vand.u32 %v393, 4294901760
        %v3710 = vsub.f32 %v393, %v3709
        %v3711 = vand.u32 %v3710, 4294901760
        %v3712 = vsub.f32 %v3710, %v3711
        %v3713 = vand.u32 %v3712, 4294901760
        %3714 = vmatpush.msra.mxu0 %v3713
        %v3715 = vand.u32 %v391, 4294901760
        %v3716 = vsub.f32 %v391, %v3715
        %v3717 = vand.u32 %v3716, 4294901760
        %v3718 = vsub.f32 %v3716, %v3717
        %v3719 = vand.u32 %v3718, 4294901760
        %3720 = vmatpush.msra.mxu0 %v3719
        %v3721 = vand.u32 %v1166, 4294901760
        %3722 = vmatmul.f32.gmra.mxu0 %v3721
        %v3723 = vpop.f32.mrf.mxu0
        %v3724 = vadd.f32 %v3375, %v3723
        %v3725 = vand.u32 %v1170, 4294901760
        %3726 = vmatmul.f32.gmra.mxu0 %v3725
        %v3727 = vpop.f32.mrf.mxu0
        %v3728 = vadd.f32 %v3383, %v3727
        %v3729 = vand.u32 %v1174, 4294901760
        %3730 = vmatmul.f32.gmra.mxu0 %v3729
        %v3731 = vpop.f32.mrf.mxu0
        %v3732 = vadd.f32 %v3391, %v3731
        %v3733 = vand.u32 %v1178, 4294901760
        %3734 = vmatmul.f32.gmra.mxu0 %v3733
        %v3735 = vpop.f32.mrf.mxu0
        %v3736 = vadd.f32 %v3399, %v3735
        %v3737 = vand.u32 %v1182, 4294901760
        %3738 = vmatmul.f32.gmra.mxu0 %v3737
        %v3739 = vpop.f32.mrf.mxu0
        %v3740 = vadd.f32 %v3407, %v3739
        %v3741 = vand.u32 %v1186, 4294901760
        %3742 = vmatmul.f32.gmra.mxu0 %v3741
        %v3743 = vpop.f32.mrf.mxu0
        %v3744 = vadd.f32 %v3415, %v3743
        %v3745 = vand.u32 %v1190, 4294901760
        %3746 = vmatmul.f32.gmra.mxu0 %v3745
        %v3747 = vpop.f32.mrf.mxu0
        %v3748 = vadd.f32 %v3423, %v3747
        %v3749 = vand.u32 %v1194, 4294901760
        %3750 = vmatmul.f32.gmra.mxu0 %v3749
        %v3751 = vpop.f32.mrf.mxu0
        %v3752 = vadd.f32 %v3431, %v3751
        %v3753 = vand.u32 %v1198, 4294901760
        %3754 = vmatmul.f32.gmra.mxu0 %v3753
        %v3755 = vpop.f32.mrf.mxu0
        %v3756 = vadd.f32 %v3439, %v3755
        %v3757 = vand.u32 %v1202, 4294901760
        %3758 = vmatmul.f32.gmra.mxu0 %v3757
        %v3759 = vpop.f32.mrf.mxu0
        %v3760 = vadd.f32 %v3447, %v3759
        %v3761 = vand.u32 %v1206, 4294901760
        %3762 = vmatmul.f32.gmra.mxu0 %v3761
        %v3763 = vpop.f32.mrf.mxu0
        %v3764 = vadd.f32 %v3455, %v3763
        %v3765 = vand.u32 %v1210, 4294901760
        %3766 = vmatmul.f32.gmra.mxu0 %v3765
        %v3767 = vpop.f32.mrf.mxu0
        %v3768 = vadd.f32 %v3463, %v3767
        %v3769 = vand.u32 %v1214, 4294901760
        %3770 = vmatmul.f32.gmra.mxu0 %v3769
        %v3771 = vpop.f32.mrf.mxu0
        %v3772 = vadd.f32 %v3471, %v3771
        %v3773 = vand.u32 %v1218, 4294901760
        %3774 = vmatmul.f32.gmra.mxu0 %v3773
        %v3775 = vpop.f32.mrf.mxu0
        %v3776 = vadd.f32 %v3479, %v3775
        %v3777 = vand.u32 %v1222, 4294901760
        %3778 = vmatmul.f32.gmra.mxu0 %v3777
        %v3779 = vpop.f32.mrf.mxu0
        %v3780 = vadd.f32 %v3487, %v3779
        %v3781 = vand.u32 %v1226, 4294901760
        %3782 = vmatmul.f32.gmra.mxu0 %v3781
        %v3783 = vpop.f32.mrf.mxu0
        %v3784 = vadd.f32 %v3495, %v3783
        %v3785 = vand.u32 %v1972, 4294901760
        %3786 = vmatmul.f32.gmra.mxu0 %v3785
        %v3787 = vpop.f32.mrf.mxu0
        %v3788 = vadd.f32 %v3503, %v3787
        %v3789 = vand.u32 %v1976, 4294901760
        %3790 = vmatmul.f32.gmra.mxu0 %v3789
        %v3791 = vpop.f32.mrf.mxu0
        %v3792 = vadd.f32 %v3511, %v3791
        %v3793 = vand.u32 %v1980, 4294901760
        %3794 = vmatmul.f32.gmra.mxu0 %v3793
        %v3795 = vpop.f32.mrf.mxu0
        %v3796 = vadd.f32 %v3519, %v3795
        %v3797 = vand.u32 %v1984, 4294901760
        %3798 = vmatmul.f32.gmra.mxu0 %v3797
        %v3799 = vpop.f32.mrf.mxu0
        %v3800 = vadd.f32 %v3527, %v3799
        %v3801 = vand.u32 %v1988, 4294901760
        %3802 = vmatmul.f32.gmra.mxu0 %v3801
        %v3803 = vpop.f32.mrf.mxu0
        %v3804 = vadd.f32 %v3535, %v3803
        %v3805 = vand.u32 %v1992, 4294901760
        %3806 = vmatmul.f32.gmra.mxu0 %v3805
        %v3807 = vpop.f32.mrf.mxu0
        %v3808 = vadd.f32 %v3543, %v3807
        %v3809 = vand.u32 %v1996, 4294901760
        %3810 = vmatmul.f32.gmra.mxu0 %v3809
        %v3811 = vpop.f32.mrf.mxu0
        %v3812 = vadd.f32 %v3551, %v3811
        %v3813 = vand.u32 %v2000, 4294901760
        %3814 = vmatmul.f32.gmra.mxu0 %v3813
        %v3815 = vpop.f32.mrf.mxu0
        %v3816 = vadd.f32 %v3559, %v3815
        %v3817 = vand.u32 %v2004, 4294901760
        %3818 = vmatmul.f32.gmra.mxu0 %v3817
        %v3819 = vpop.f32.mrf.mxu0
        %v3820 = vadd.f32 %v3567, %v3819
        %v3821 = vand.u32 %v2008, 4294901760
        %3822 = vmatmul.f32.gmra.mxu0 %v3821
        %v3823 = vpop.f32.mrf.mxu0
        %v3824 = vadd.f32 %v3575, %v3823
        %v3825 = vand.u32 %v2012, 4294901760
        %3826 = vmatmul.f32.gmra.mxu0 %v3825
        %v3827 = vpop.f32.mrf.mxu0
        %v3828 = vadd.f32 %v3583, %v3827
        %v3829 = vand.u32 %v2016, 4294901760
        %3830 = vmatmul.f32.gmra.mxu0 %v3829
        %v3831 = vpop.f32.mrf.mxu0
        %v3832 = vadd.f32 %v3591, %v3831
        %v3833 = vand.u32 %v2020, 4294901760
        %3834 = vmatmul.f32.gmra.mxu0 %v3833
        %v3835 = vpop.f32.mrf.mxu0
        %v3836 = vadd.f32 %v3599, %v3835
        %v3837 = vand.u32 %v2024, 4294901760
        %3838 = vmatmul.f32.gmra.mxu0 %v3837
        %v3839 = vpop.f32.mrf.mxu0
        %v3840 = vadd.f32 %v3607, %v3839
        %v3841 = vand.u32 %v2028, 4294901760
        %3842 = vmatmul.f32.gmra.mxu0 %v3841
        %v3843 = vpop.f32.mrf.mxu0
        %v3844 = vadd.f32 %v3615, %v3843
        %v3845 = vand.u32 %v2032, 4294901760
        %3846 = vmatmul.f32.gmra.mxu0 %v3845
        %v3847 = vpop.f32.mrf.mxu0
        %v3848 = vadd.f32 %v3623, %v3847
        %3849 = vdwg.mxu0
        %v3850 = vand.u32 %v421, 4294901760
        %v3851 = vsub.f32 %v421, %v3850
        %3852 = vmatpush.msra.mxu0 %v3851
        %v3853 = vand.u32 %v419, 4294901760
        %v3854 = vsub.f32 %v419, %v3853
        %3855 = vmatpush.msra.mxu0 %v3854
        %v3856 = vand.u32 %v417, 4294901760
        %v3857 = vsub.f32 %v417, %v3856
        %3858 = vmatpush.msra.mxu0 %v3857
        %v3859 = vand.u32 %v415, 4294901760
        %v3860 = vsub.f32 %v415, %v3859
        %3861 = vmatpush.msra.mxu0 %v3860
        %v3862 = vand.u32 %v413, 4294901760
        %v3863 = vsub.f32 %v413, %v3862
        %3864 = vmatpush.msra.mxu0 %v3863
        %v3865 = vand.u32 %v411, 4294901760
        %v3866 = vsub.f32 %v411, %v3865
        %3867 = vmatpush.msra.mxu0 %v3866
        %v3868 = vand.u32 %v409, 4294901760
        %v3869 = vsub.f32 %v409, %v3868
        %3870 = vmatpush.msra.mxu0 %v3869
        %v3871 = vand.u32 %v407, 4294901760
        %v3872 = vsub.f32 %v407, %v3871
        %3873 = vmatpush.msra.mxu0 %v3872
        %v3874 = vand.u32 %v405, 4294901760
        %v3875 = vsub.f32 %v405, %v3874
        %3876 = vmatpush.msra.mxu0 %v3875
        %v3877 = vand.u32 %v403, 4294901760
        %v3878 = vsub.f32 %v403, %v3877
        %3879 = vmatpush.msra.mxu0 %v3878
        %v3880 = vand.u32 %v401, 4294901760
        %v3881 = vsub.f32 %v401, %v3880
        %3882 = vmatpush.msra.mxu0 %v3881
        %v3883 = vand.u32 %v399, 4294901760
        %v3884 = vsub.f32 %v399, %v3883
        %3885 = vmatpush.msra.mxu0 %v3884
        %v3886 = vand.u32 %v397, 4294901760
        %v3887 = vsub.f32 %v397, %v3886
        %3888 = vmatpush.msra.mxu0 %v3887
        %v3889 = vand.u32 %v395, 4294901760
        %v3890 = vsub.f32 %v395, %v3889
        %3891 = vmatpush.msra.mxu0 %v3890
        %v3892 = vand.u32 %v393, 4294901760
        %v3893 = vsub.f32 %v393, %v3892
        %3894 = vmatpush.msra.mxu0 %v3893
        %v3895 = vand.u32 %v391, 4294901760
        %v3896 = vsub.f32 %v391, %v3895
        %3897 = vmatpush.msra.mxu0 %v3896
        %v3898 = vand.u32 %v1166, 4294901760
        %v3899 = vsub.f32 %v1166, %v3898
        %3900 = vmatmul.f32.gmra.mxu0 %v3899
        %v3901 = vpop.f32.mrf.mxu0
        %v3902 = vadd.f32 %v3724, %v3901
        %v3903 = vand.u32 %v1170, 4294901760
        %v3904 = vsub.f32 %v1170, %v3903
        %3905 = vmatmul.f32.gmra.mxu0 %v3904
        %v3906 = vpop.f32.mrf.mxu0
        %v3907 = vadd.f32 %v3728, %v3906
        %v3908 = vand.u32 %v1174, 4294901760
        %v3909 = vsub.f32 %v1174, %v3908
        %3910 = vmatmul.f32.gmra.mxu0 %v3909
        %v3911 = vpop.f32.mrf.mxu0
        %v3912 = vadd.f32 %v3732, %v3911
        %v3913 = vand.u32 %v1178, 4294901760
        %v3914 = vsub.f32 %v1178, %v3913
        %3915 = vmatmul.f32.gmra.mxu0 %v3914
        %v3916 = vpop.f32.mrf.mxu0
        %v3917 = vadd.f32 %v3736, %v3916
        %v3918 = vand.u32 %v1182, 4294901760
        %v3919 = vsub.f32 %v1182, %v3918
        %3920 = vmatmul.f32.gmra.mxu0 %v3919
        %v3921 = vpop.f32.mrf.mxu0
        %v3922 = vadd.f32 %v3740, %v3921
        %v3923 = vand.u32 %v1186, 4294901760
        %v3924 = vsub.f32 %v1186, %v3923
        %3925 = vmatmul.f32.gmra.mxu0 %v3924
        %v3926 = vpop.f32.mrf.mxu0
        %v3927 = vadd.f32 %v3744, %v3926
        %v3928 = vand.u32 %v1190, 4294901760
        %v3929 = vsub.f32 %v1190, %v3928
        %3930 = vmatmul.f32.gmra.mxu0 %v3929
        %v3931 = vpop.f32.mrf.mxu0
        %v3932 = vadd.f32 %v3748, %v3931
        %v3933 = vand.u32 %v1194, 4294901760
        %v3934 = vsub.f32 %v1194, %v3933
        %3935 = vmatmul.f32.gmra.mxu0 %v3934
        %v3936 = vpop.f32.mrf.mxu0
        %v3937 = vadd.f32 %v3752, %v3936
        %v3938 = vand.u32 %v1198, 4294901760
        %v3939 = vsub.f32 %v1198, %v3938
        %3940 = vmatmul.f32.gmra.mxu0 %v3939
        %v3941 = vpop.f32.mrf.mxu0
        %v3942 = vadd.f32 %v3756, %v3941
        %v3943 = vand.u32 %v1202, 4294901760
        %v3944 = vsub.f32 %v1202, %v3943
        %3945 = vmatmul.f32.gmra.mxu0 %v3944
        %v3946 = vpop.f32.mrf.mxu0
        %v3947 = vadd.f32 %v3760, %v3946
        %v3948 = vand.u32 %v1206, 4294901760
        %v3949 = vsub.f32 %v1206, %v3948
        %3950 = vmatmul.f32.gmra.mxu0 %v3949
        %v3951 = vpop.f32.mrf.mxu0
        %v3952 = vadd.f32 %v3764, %v3951
        %v3953 = vand.u32 %v1210, 4294901760
        %v3954 = vsub.f32 %v1210, %v3953
        %3955 = vmatmul.f32.gmra.mxu0 %v3954
        %v3956 = vpop.f32.mrf.mxu0
        %v3957 = vadd.f32 %v3768, %v3956
        %v3958 = vand.u32 %v1214, 4294901760
        %v3959 = vsub.f32 %v1214, %v3958
        %3960 = vmatmul.f32.gmra.mxu0 %v3959
        %v3961 = vpop.f32.mrf.mxu0
        %v3962 = vadd.f32 %v3772, %v3961
        %v3963 = vand.u32 %v1218, 4294901760
        %v3964 = vsub.f32 %v1218, %v3963
        %3965 = vmatmul.f32.gmra.mxu0 %v3964
        %v3966 = vpop.f32.mrf.mxu0
        %v3967 = vadd.f32 %v3776, %v3966
        %v3968 = vand.u32 %v1222, 4294901760
        %v3969 = vsub.f32 %v1222, %v3968
        %3970 = vmatmul.f32.gmra.mxu0 %v3969
        %v3971 = vpop.f32.mrf.mxu0
        %v3972 = vadd.f32 %v3780, %v3971
        %v3973 = vand.u32 %v1226, 4294901760
        %v3974 = vsub.f32 %v1226, %v3973
        %3975 = vmatmul.f32.gmra.mxu0 %v3974
        %v3976 = vpop.f32.mrf.mxu0
        %v3977 = vadd.f32 %v3784, %v3976
        %v3978 = vand.u32 %v1972, 4294901760
        %v3979 = vsub.f32 %v1972, %v3978
        %3980 = vmatmul.f32.gmra.mxu0 %v3979
        %v3981 = vpop.f32.mrf.mxu0
        %v3982 = vadd.f32 %v3788, %v3981
        %v3983 = vand.u32 %v1976, 4294901760
        %v3984 = vsub.f32 %v1976, %v3983
        %3985 = vmatmul.f32.gmra.mxu0 %v3984
        %v3986 = vpop.f32.mrf.mxu0
        %v3987 = vadd.f32 %v3792, %v3986
        %v3988 = vand.u32 %v1980, 4294901760
        %v3989 = vsub.f32 %v1980, %v3988
        %3990 = vmatmul.f32.gmra.mxu0 %v3989
        %v3991 = vpop.f32.mrf.mxu0
        %v3992 = vadd.f32 %v3796, %v3991
        %v3993 = vand.u32 %v1984, 4294901760
        %v3994 = vsub.f32 %v1984, %v3993
        %3995 = vmatmul.f32.gmra.mxu0 %v3994
        %v3996 = vpop.f32.mrf.mxu0
        %v3997 = vadd.f32 %v3800, %v3996
        %v3998 = vand.u32 %v1988, 4294901760
        %v3999 = vsub.f32 %v1988, %v3998
        %4000 = vmatmul.f32.gmra.mxu0 %v3999
        %v4001 = vpop.f32.mrf.mxu0
        %v4002 = vadd.f32 %v3804, %v4001
        %v4003 = vand.u32 %v1992, 4294901760
        %v4004 = vsub.f32 %v1992, %v4003
        %4005 = vmatmul.f32.gmra.mxu0 %v4004
        %v4006 = vpop.f32.mrf.mxu0
        %v4007 = vadd.f32 %v3808, %v4006
        %v4008 = vand.u32 %v1996, 4294901760
        %v4009 = vsub.f32 %v1996, %v4008
        %4010 = vmatmul.f32.gmra.mxu0 %v4009
        %v4011 = vpop.f32.mrf.mxu0
        %v4012 = vadd.f32 %v3812, %v4011
        %v4013 = vand.u32 %v2000, 4294901760
        %v4014 = vsub.f32 %v2000, %v4013
        %4015 = vmatmul.f32.gmra.mxu0 %v4014
        %v4016 = vpop.f32.mrf.mxu0
        %v4017 = vadd.f32 %v3816, %v4016
        %v4018 = vand.u32 %v2004, 4294901760
        %v4019 = vsub.f32 %v2004, %v4018
        %4020 = vmatmul.f32.gmra.mxu0 %v4019
        %v4021 = vpop.f32.mrf.mxu0
        %v4022 = vadd.f32 %v3820, %v4021
        %v4023 = vand.u32 %v2008, 4294901760
        %v4024 = vsub.f32 %v2008, %v4023
        %4025 = vmatmul.f32.gmra.mxu0 %v4024
        %v4026 = vpop.f32.mrf.mxu0
        %v4027 = vadd.f32 %v3824, %v4026
        %v4028 = vand.u32 %v2012, 4294901760
        %v4029 = vsub.f32 %v2012, %v4028
        %4030 = vmatmul.f32.gmra.mxu0 %v4029
        %v4031 = vpop.f32.mrf.mxu0
        %v4032 = vadd.f32 %v3828, %v4031
        %v4033 = vand.u32 %v2016, 4294901760
        %v4034 = vsub.f32 %v2016, %v4033
        %4035 = vmatmul.f32.gmra.mxu0 %v4034
        %v4036 = vpop.f32.mrf.mxu0
        %v4037 = vadd.f32 %v3832, %v4036
        %v4038 = vand.u32 %v2020, 4294901760
        %v4039 = vsub.f32 %v2020, %v4038
        %4040 = vmatmul.f32.gmra.mxu0 %v4039
        %v4041 = vpop.f32.mrf.mxu0
        %v4042 = vadd.f32 %v3836, %v4041
        %v4043 = vand.u32 %v2024, 4294901760
        %v4044 = vsub.f32 %v2024, %v4043
        %4045 = vmatmul.f32.gmra.mxu0 %v4044
        %v4046 = vpop.f32.mrf.mxu0
        %v4047 = vadd.f32 %v3840, %v4046
        %v4048 = vand.u32 %v2028, 4294901760
        %v4049 = vsub.f32 %v2028, %v4048
        %4050 = vmatmul.f32.gmra.mxu0 %v4049
        %v4051 = vpop.f32.mrf.mxu0
        %v4052 = vadd.f32 %v3844, %v4051
        %v4053 = vand.u32 %v2032, 4294901760
        %v4054 = vsub.f32 %v2032, %v4053
        %4055 = vmatmul.f32.gmra.mxu0 %v4054
        %v4056 = vpop.f32.mrf.mxu0
        %v4057 = vadd.f32 %v3848, %v4056
        %4058 = vdwg.mxu0
        %v4059 = vand.u32 %v421, 4294901760
        %4060 = vmatpush.msra.mxu0 %v4059
        %v4061 = vand.u32 %v419, 4294901760
        %4062 = vmatpush.msra.mxu0 %v4061
        %v4063 = vand.u32 %v417, 4294901760
        %4064 = vmatpush.msra.mxu0 %v4063
        %v4065 = vand.u32 %v415, 4294901760
        %4066 = vmatpush.msra.mxu0 %v4065
        %v4067 = vand.u32 %v413, 4294901760
        %4068 = vmatpush.msra.mxu0 %v4067
        %v4069 = vand.u32 %v411, 4294901760
        %4070 = vmatpush.msra.mxu0 %v4069
        %v4071 = vand.u32 %v409, 4294901760
        %4072 = vmatpush.msra.mxu0 %v4071
        %v4073 = vand.u32 %v407, 4294901760
        %4074 = vmatpush.msra.mxu0 %v4073
        %v4075 = vand.u32 %v405, 4294901760
        %4076 = vmatpush.msra.mxu0 %v4075
        %v4077 = vand.u32 %v403, 4294901760
        %4078 = vmatpush.msra.mxu0 %v4077
        %v4079 = vand.u32 %v401, 4294901760
        %4080 = vmatpush.msra.mxu0 %v4079
        %v4081 = vand.u32 %v399, 4294901760
        %4082 = vmatpush.msra.mxu0 %v4081
        %v4083 = vand.u32 %v397, 4294901760
        %4084 = vmatpush.msra.mxu0 %v4083
        %v4085 = vand.u32 %v395, 4294901760
        %4086 = vmatpush.msra.mxu0 %v4085
        %v4087 = vand.u32 %v393, 4294901760
        %4088 = vmatpush.msra.mxu0 %v4087
        %v4089 = vand.u32 %v391, 4294901760
        %4090 = vmatpush.msra.mxu0 %v4089
        %v4091 = vand.u32 %v1166, 4294901760
        %v4092 = vsub.f32 %v1166, %v4091
        %v4093 = vand.u32 %v4092, 4294901760
        %4094 = vmatmul.f32.gmra.mxu0 %v4093
        %v4095 = vpop.f32.mrf.mxu0
        %v4096 = vadd.f32 %v3902, %v4095
        %v4097 = vand.u32 %v1170, 4294901760
        %v4098 = vsub.f32 %v1170, %v4097
        %v4099 = vand.u32 %v4098, 4294901760
        %4100 = vmatmul.f32.gmra.mxu0 %v4099
        %v4101 = vpop.f32.mrf.mxu0
        %v4102 = vadd.f32 %v3907, %v4101
        %v4103 = vand.u32 %v1174, 4294901760
        %v4104 = vsub.f32 %v1174, %v4103
        %v4105 = vand.u32 %v4104, 4294901760
        %4106 = vmatmul.f32.gmra.mxu0 %v4105
        %v4107 = vpop.f32.mrf.mxu0
        %v4108 = vadd.f32 %v3912, %v4107
        %v4109 = vand.u32 %v1178, 4294901760
        %v4110 = vsub.f32 %v1178, %v4109
        %v4111 = vand.u32 %v4110, 4294901760
        %4112 = vmatmul.f32.gmra.mxu0 %v4111
        %v4113 = vpop.f32.mrf.mxu0
        %v4114 = vadd.f32 %v3917, %v4113
        %v4115 = vand.u32 %v1182, 4294901760
        %v4116 = vsub.f32 %v1182, %v4115
        %v4117 = vand.u32 %v4116, 4294901760
        %4118 = vmatmul.f32.gmra.mxu0 %v4117
        %v4119 = vpop.f32.mrf.mxu0
        %v4120 = vadd.f32 %v3922, %v4119
        %v4121 = vand.u32 %v1186, 4294901760
        %v4122 = vsub.f32 %v1186, %v4121
        %v4123 = vand.u32 %v4122, 4294901760
        %4124 = vmatmul.f32.gmra.mxu0 %v4123
        %v4125 = vpop.f32.mrf.mxu0
        %v4126 = vadd.f32 %v3927, %v4125
        %v4127 = vand.u32 %v1190, 4294901760
        %v4128 = vsub.f32 %v1190, %v4127
        %v4129 = vand.u32 %v4128, 4294901760
        %4130 = vmatmul.f32.gmra.mxu0 %v4129
        %v4131 = vpop.f32.mrf.mxu0
        %v4132 = vadd.f32 %v3932, %v4131
        %v4133 = vand.u32 %v1194, 4294901760
        %v4134 = vsub.f32 %v1194, %v4133
        %v4135 = vand.u32 %v4134, 4294901760
        %4136 = vmatmul.f32.gmra.mxu0 %v4135
        %v4137 = vpop.f32.mrf.mxu0
        %v4138 = vadd.f32 %v3937, %v4137
        %v4139 = vand.u32 %v1198, 4294901760
        %v4140 = vsub.f32 %v1198, %v4139
        %v4141 = vand.u32 %v4140, 4294901760
        %4142 = vmatmul.f32.gmra.mxu0 %v4141
        %v4143 = vpop.f32.mrf.mxu0
        %v4144 = vadd.f32 %v3942, %v4143
        %v4145 = vand.u32 %v1202, 4294901760
        %v4146 = vsub.f32 %v1202, %v4145
        %v4147 = vand.u32 %v4146, 4294901760
        %4148 = vmatmul.f32.gmra.mxu0 %v4147
        %v4149 = vpop.f32.mrf.mxu0
        %v4150 = vadd.f32 %v3947, %v4149
        %v4151 = vand.u32 %v1206, 4294901760
        %v4152 = vsub.f32 %v1206, %v4151
        %v4153 = vand.u32 %v4152, 4294901760
        %4154 = vmatmul.f32.gmra.mxu0 %v4153
        %v4155 = vpop.f32.mrf.mxu0
        %v4156 = vadd.f32 %v3952, %v4155
        %v4157 = vand.u32 %v1210, 4294901760
        %v4158 = vsub.f32 %v1210, %v4157
        %v4159 = vand.u32 %v4158, 4294901760
        %4160 = vmatmul.f32.gmra.mxu0 %v4159
        %v4161 = vpop.f32.mrf.mxu0
        %v4162 = vadd.f32 %v3957, %v4161
        %v4163 = vand.u32 %v1214, 4294901760
        %v4164 = vsub.f32 %v1214, %v4163
        %v4165 = vand.u32 %v4164, 4294901760
        %4166 = vmatmul.f32.gmra.mxu0 %v4165
        %v4167 = vpop.f32.mrf.mxu0
        %v4168 = vadd.f32 %v3962, %v4167
        %v4169 = vand.u32 %v1218, 4294901760
        %v4170 = vsub.f32 %v1218, %v4169
        %v4171 = vand.u32 %v4170, 4294901760
        %4172 = vmatmul.f32.gmra.mxu0 %v4171
        %v4173 = vpop.f32.mrf.mxu0
        %v4174 = vadd.f32 %v3967, %v4173
        %v4175 = vand.u32 %v1222, 4294901760
        %v4176 = vsub.f32 %v1222, %v4175
        %v4177 = vand.u32 %v4176, 4294901760
        %4178 = vmatmul.f32.gmra.mxu0 %v4177
        %v4179 = vpop.f32.mrf.mxu0
        %v4180 = vadd.f32 %v3972, %v4179
        %v4181 = vand.u32 %v1226, 4294901760
        %v4182 = vsub.f32 %v1226, %v4181
        %v4183 = vand.u32 %v4182, 4294901760
        %4184 = vmatmul.f32.gmra.mxu0 %v4183
        %v4185 = vpop.f32.mrf.mxu0
        %v4186 = vadd.f32 %v3977, %v4185
        %v4187 = vand.u32 %v1972, 4294901760
        %v4188 = vsub.f32 %v1972, %v4187
        %v4189 = vand.u32 %v4188, 4294901760
        %4190 = vmatmul.f32.gmra.mxu0 %v4189
        %v4191 = vpop.f32.mrf.mxu0
        %v4192 = vadd.f32 %v3982, %v4191
        %v4193 = vand.u32 %v1976, 4294901760
        %v4194 = vsub.f32 %v1976, %v4193
        %v4195 = vand.u32 %v4194, 4294901760
        %4196 = vmatmul.f32.gmra.mxu0 %v4195
        %v4197 = vpop.f32.mrf.mxu0
        %v4198 = vadd.f32 %v3987, %v4197
        %v4199 = vand.u32 %v1980, 4294901760
        %v4200 = vsub.f32 %v1980, %v4199
        %v4201 = vand.u32 %v4200, 4294901760
        %4202 = vmatmul.f32.gmra.mxu0 %v4201
        %v4203 = vpop.f32.mrf.mxu0
        %v4204 = vadd.f32 %v3992, %v4203
        %v4205 = vand.u32 %v1984, 4294901760
        %v4206 = vsub.f32 %v1984, %v4205
        %v4207 = vand.u32 %v4206, 4294901760
        %4208 = vmatmul.f32.gmra.mxu0 %v4207
        %v4209 = vpop.f32.mrf.mxu0
        %v4210 = vadd.f32 %v3997, %v4209
        %v4211 = vand.u32 %v1988, 4294901760
        %v4212 = vsub.f32 %v1988, %v4211
        %v4213 = vand.u32 %v4212, 4294901760
        %4214 = vmatmul.f32.gmra.mxu0 %v4213
        %v4215 = vpop.f32.mrf.mxu0
        %v4216 = vadd.f32 %v4002, %v4215
        %v4217 = vand.u32 %v1992, 4294901760
        %v4218 = vsub.f32 %v1992, %v4217
        %v4219 = vand.u32 %v4218, 4294901760
        %4220 = vmatmul.f32.gmra.mxu0 %v4219
        %v4221 = vpop.f32.mrf.mxu0
        %v4222 = vadd.f32 %v4007, %v4221
        %v4223 = vand.u32 %v1996, 4294901760
        %v4224 = vsub.f32 %v1996, %v4223
        %v4225 = vand.u32 %v4224, 4294901760
        %4226 = vmatmul.f32.gmra.mxu0 %v4225
        %v4227 = vpop.f32.mrf.mxu0
        %v4228 = vadd.f32 %v4012, %v4227
        %v4229 = vand.u32 %v2000, 4294901760
        %v4230 = vsub.f32 %v2000, %v4229
        %v4231 = vand.u32 %v4230, 4294901760
        %4232 = vmatmul.f32.gmra.mxu0 %v4231
        %v4233 = vpop.f32.mrf.mxu0
        %v4234 = vadd.f32 %v4017, %v4233
        %v4235 = vand.u32 %v2004, 4294901760
        %v4236 = vsub.f32 %v2004, %v4235
        %v4237 = vand.u32 %v4236, 4294901760
        %4238 = vmatmul.f32.gmra.mxu0 %v4237
        %v4239 = vpop.f32.mrf.mxu0
        %v4240 = vadd.f32 %v4022, %v4239
        %v4241 = vand.u32 %v2008, 4294901760
        %v4242 = vsub.f32 %v2008, %v4241
        %v4243 = vand.u32 %v4242, 4294901760
        %4244 = vmatmul.f32.gmra.mxu0 %v4243
        %v4245 = vpop.f32.mrf.mxu0
        %v4246 = vadd.f32 %v4027, %v4245
        %v4247 = vand.u32 %v2012, 4294901760
        %v4248 = vsub.f32 %v2012, %v4247
        %v4249 = vand.u32 %v4248, 4294901760
        %4250 = vmatmul.f32.gmra.mxu0 %v4249
        %v4251 = vpop.f32.mrf.mxu0
        %v4252 = vadd.f32 %v4032, %v4251
        %v4253 = vand.u32 %v2016, 4294901760
        %v4254 = vsub.f32 %v2016, %v4253
        %v4255 = vand.u32 %v4254, 4294901760
        %4256 = vmatmul.f32.gmra.mxu0 %v4255
        %v4257 = vpop.f32.mrf.mxu0
        %v4258 = vadd.f32 %v4037, %v4257
        %v4259 = vand.u32 %v2020, 4294901760
        %v4260 = vsub.f32 %v2020, %v4259
        %v4261 = vand.u32 %v4260, 4294901760
        %4262 = vmatmul.f32.gmra.mxu0 %v4261
        %v4263 = vpop.f32.mrf.mxu0
        %v4264 = vadd.f32 %v4042, %v4263
        %v4265 = vand.u32 %v2024, 4294901760
        %v4266 = vsub.f32 %v2024, %v4265
        %v4267 = vand.u32 %v4266, 4294901760
        %4268 = vmatmul.f32.gmra.mxu0 %v4267
        %v4269 = vpop.f32.mrf.mxu0
        %v4270 = vadd.f32 %v4047, %v4269
        %v4271 = vand.u32 %v2028, 4294901760
        %v4272 = vsub.f32 %v2028, %v4271
        %v4273 = vand.u32 %v4272, 4294901760
        %4274 = vmatmul.f32.gmra.mxu0 %v4273
        %v4275 = vpop.f32.mrf.mxu0
        %v4276 = vadd.f32 %v4052, %v4275
        %v4277 = vand.u32 %v2032, 4294901760
        %v4278 = vsub.f32 %v2032, %v4277
        %v4279 = vand.u32 %v4278, 4294901760
        %4280 = vmatmul.f32.gmra.mxu0 %v4279
        %v4281 = vpop.f32.mrf.mxu0
        %v4282 = vadd.f32 %v4057, %v4281
        %4283 = vdwg.mxu0
        %v4284 = vand.u32 %v421, 4294901760
        %v4285 = vsub.f32 %v421, %v4284
        %v4286 = vand.u32 %v4285, 4294901760
        %4287 = vmatpush.msra.mxu0 %v4286
        %v4288 = vand.u32 %v419, 4294901760
        %v4289 = vsub.f32 %v419, %v4288
        %v4290 = vand.u32 %v4289, 4294901760
        %4291 = vmatpush.msra.mxu0 %v4290
        %v4292 = vand.u32 %v417, 4294901760
        %v4293 = vsub.f32 %v417, %v4292
        %v4294 = vand.u32 %v4293, 4294901760
        %4295 = vmatpush.msra.mxu0 %v4294
        %v4296 = vand.u32 %v415, 4294901760
        %v4297 = vsub.f32 %v415, %v4296
        %v4298 = vand.u32 %v4297, 4294901760
        %4299 = vmatpush.msra.mxu0 %v4298
        %v4300 = vand.u32 %v413, 4294901760
        %v4301 = vsub.f32 %v413, %v4300
        %v4302 = vand.u32 %v4301, 4294901760
        %4303 = vmatpush.msra.mxu0 %v4302
        %v4304 = vand.u32 %v411, 4294901760
        %v4305 = vsub.f32 %v411, %v4304
        %v4306 = vand.u32 %v4305, 4294901760
        %4307 = vmatpush.msra.mxu0 %v4306
        %v4308 = vand.u32 %v409, 4294901760
        %v4309 = vsub.f32 %v409, %v4308
        %v4310 = vand.u32 %v4309, 4294901760
        %4311 = vmatpush.msra.mxu0 %v4310
        %v4312 = vand.u32 %v407, 4294901760
        %v4313 = vsub.f32 %v407, %v4312
        %v4314 = vand.u32 %v4313, 4294901760
        %4315 = vmatpush.msra.mxu0 %v4314
        %v4316 = vand.u32 %v405, 4294901760
        %v4317 = vsub.f32 %v405, %v4316
        %v4318 = vand.u32 %v4317, 4294901760
        %4319 = vmatpush.msra.mxu0 %v4318
        %v4320 = vand.u32 %v403, 4294901760
        %v4321 = vsub.f32 %v403, %v4320
        %v4322 = vand.u32 %v4321, 4294901760
        %4323 = vmatpush.msra.mxu0 %v4322
        %v4324 = vand.u32 %v401, 4294901760
        %v4325 = vsub.f32 %v401, %v4324
        %v4326 = vand.u32 %v4325, 4294901760
        %4327 = vmatpush.msra.mxu0 %v4326
        %v4328 = vand.u32 %v399, 4294901760
        %v4329 = vsub.f32 %v399, %v4328
        %v4330 = vand.u32 %v4329, 4294901760
        %4331 = vmatpush.msra.mxu0 %v4330
        %v4332 = vand.u32 %v397, 4294901760
        %v4333 = vsub.f32 %v397, %v4332
        %v4334 = vand.u32 %v4333, 4294901760
        %4335 = vmatpush.msra.mxu0 %v4334
        %v4336 = vand.u32 %v395, 4294901760
        %v4337 = vsub.f32 %v395, %v4336
        %v4338 = vand.u32 %v4337, 4294901760
        %4339 = vmatpush.msra.mxu0 %v4338
        %v4340 = vand.u32 %v393, 4294901760
        %v4341 = vsub.f32 %v393, %v4340
        %v4342 = vand.u32 %v4341, 4294901760
        %4343 = vmatpush.msra.mxu0 %v4342
        %v4344 = vand.u32 %v391, 4294901760
        %v4345 = vsub.f32 %v391, %v4344
        %v4346 = vand.u32 %v4345, 4294901760
        %4347 = vmatpush.msra.mxu0 %v4346
        %v4348 = vand.u32 %v1166, 4294901760
        %4349 = vmatmul.f32.gmra.mxu0 %v4348
        %v4350 = vpop.f32.mrf.mxu0
        %v4351 = vadd.f32 %v4096, %v4350
        %v4352 = vand.u32 %v1170, 4294901760
        %4353 = vmatmul.f32.gmra.mxu0 %v4352
        %v4354 = vpop.f32.mrf.mxu0
        %v4355 = vadd.f32 %v4102, %v4354
        %v4356 = vand.u32 %v1174, 4294901760
        %4357 = vmatmul.f32.gmra.mxu0 %v4356
        %v4358 = vpop.f32.mrf.mxu0
        %v4359 = vadd.f32 %v4108, %v4358
        %v4360 = vand.u32 %v1178, 4294901760
        %4361 = vmatmul.f32.gmra.mxu0 %v4360
        %v4362 = vpop.f32.mrf.mxu0
        %v4363 = vadd.f32 %v4114, %v4362
        %v4364 = vand.u32 %v1182, 4294901760
        %4365 = vmatmul.f32.gmra.mxu0 %v4364
        %v4366 = vpop.f32.mrf.mxu0
        %v4367 = vadd.f32 %v4120, %v4366
        %v4368 = vand.u32 %v1186, 4294901760
        %4369 = vmatmul.f32.gmra.mxu0 %v4368
        %v4370 = vpop.f32.mrf.mxu0
        %v4371 = vadd.f32 %v4126, %v4370
        %v4372 = vand.u32 %v1190, 4294901760
        %4373 = vmatmul.f32.gmra.mxu0 %v4372
        %v4374 = vpop.f32.mrf.mxu0
        %v4375 = vadd.f32 %v4132, %v4374
        %v4376 = vand.u32 %v1194, 4294901760
        %4377 = vmatmul.f32.gmra.mxu0 %v4376
        %v4378 = vpop.f32.mrf.mxu0
        %v4379 = vadd.f32 %v4138, %v4378
        %v4380 = vand.u32 %v1198, 4294901760
        %4381 = vmatmul.f32.gmra.mxu0 %v4380
        %v4382 = vpop.f32.mrf.mxu0
        %v4383 = vadd.f32 %v4144, %v4382
        %v4384 = vand.u32 %v1202, 4294901760
        %4385 = vmatmul.f32.gmra.mxu0 %v4384
        %v4386 = vpop.f32.mrf.mxu0
        %v4387 = vadd.f32 %v4150, %v4386
        %v4388 = vand.u32 %v1206, 4294901760
        %4389 = vmatmul.f32.gmra.mxu0 %v4388
        %v4390 = vpop.f32.mrf.mxu0
        %v4391 = vadd.f32 %v4156, %v4390
        %v4392 = vand.u32 %v1210, 4294901760
        %4393 = vmatmul.f32.gmra.mxu0 %v4392
        %v4394 = vpop.f32.mrf.mxu0
        %v4395 = vadd.f32 %v4162, %v4394
        %v4396 = vand.u32 %v1214, 4294901760
        %4397 = vmatmul.f32.gmra.mxu0 %v4396
        %v4398 = vpop.f32.mrf.mxu0
        %v4399 = vadd.f32 %v4168, %v4398
        %v4400 = vand.u32 %v1218, 4294901760
        %4401 = vmatmul.f32.gmra.mxu0 %v4400
        %v4402 = vpop.f32.mrf.mxu0
        %v4403 = vadd.f32 %v4174, %v4402
        %v4404 = vand.u32 %v1222, 4294901760
        %4405 = vmatmul.f32.gmra.mxu0 %v4404
        %v4406 = vpop.f32.mrf.mxu0
        %v4407 = vadd.f32 %v4180, %v4406
        %v4408 = vand.u32 %v1226, 4294901760
        %4409 = vmatmul.f32.gmra.mxu0 %v4408
        %v4410 = vpop.f32.mrf.mxu0
        %v4411 = vadd.f32 %v4186, %v4410
        %v4412 = vand.u32 %v1972, 4294901760
        %4413 = vmatmul.f32.gmra.mxu0 %v4412
        %v4414 = vpop.f32.mrf.mxu0
        %v4415 = vadd.f32 %v4192, %v4414
        %v4416 = vand.u32 %v1976, 4294901760
        %4417 = vmatmul.f32.gmra.mxu0 %v4416
        %v4418 = vpop.f32.mrf.mxu0
        %v4419 = vadd.f32 %v4198, %v4418
        %v4420 = vand.u32 %v1980, 4294901760
        %4421 = vmatmul.f32.gmra.mxu0 %v4420
        %v4422 = vpop.f32.mrf.mxu0
        %v4423 = vadd.f32 %v4204, %v4422
        %v4424 = vand.u32 %v1984, 4294901760
        %4425 = vmatmul.f32.gmra.mxu0 %v4424
        %v4426 = vpop.f32.mrf.mxu0
        %v4427 = vadd.f32 %v4210, %v4426
        %v4428 = vand.u32 %v1988, 4294901760
        %4429 = vmatmul.f32.gmra.mxu0 %v4428
        %v4430 = vpop.f32.mrf.mxu0
        %v4431 = vadd.f32 %v4216, %v4430
        %v4432 = vand.u32 %v1992, 4294901760
        %4433 = vmatmul.f32.gmra.mxu0 %v4432
        %v4434 = vpop.f32.mrf.mxu0
        %v4435 = vadd.f32 %v4222, %v4434
        %v4436 = vand.u32 %v1996, 4294901760
        %4437 = vmatmul.f32.gmra.mxu0 %v4436
        %v4438 = vpop.f32.mrf.mxu0
        %v4439 = vadd.f32 %v4228, %v4438
        %v4440 = vand.u32 %v2000, 4294901760
        %4441 = vmatmul.f32.gmra.mxu0 %v4440
        %v4442 = vpop.f32.mrf.mxu0
        %v4443 = vadd.f32 %v4234, %v4442
        %v4444 = vand.u32 %v2004, 4294901760
        %4445 = vmatmul.f32.gmra.mxu0 %v4444
        %v4446 = vpop.f32.mrf.mxu0
        %v4447 = vadd.f32 %v4240, %v4446
        %v4448 = vand.u32 %v2008, 4294901760
        %4449 = vmatmul.f32.gmra.mxu0 %v4448
        %v4450 = vpop.f32.mrf.mxu0
        %v4451 = vadd.f32 %v4246, %v4450
        %v4452 = vand.u32 %v2012, 4294901760
        %4453 = vmatmul.f32.gmra.mxu0 %v4452
        %v4454 = vpop.f32.mrf.mxu0
        %v4455 = vadd.f32 %v4252, %v4454
        %v4456 = vand.u32 %v2016, 4294901760
        %4457 = vmatmul.f32.gmra.mxu0 %v4456
        %v4458 = vpop.f32.mrf.mxu0
        %v4459 = vadd.f32 %v4258, %v4458
        %v4460 = vand.u32 %v2020, 4294901760
        %4461 = vmatmul.f32.gmra.mxu0 %v4460
        %v4462 = vpop.f32.mrf.mxu0
        %v4463 = vadd.f32 %v4264, %v4462
        %v4464 = vand.u32 %v2024, 4294901760
        %4465 = vmatmul.f32.gmra.mxu0 %v4464
        %v4466 = vpop.f32.mrf.mxu0
        %v4467 = vadd.f32 %v4270, %v4466
        %v4468 = vand.u32 %v2028, 4294901760
        %4469 = vmatmul.f32.gmra.mxu0 %v4468
        %v4470 = vpop.f32.mrf.mxu0
        %v4471 = vadd.f32 %v4276, %v4470
        %v4472 = vand.u32 %v2032, 4294901760
        %4473 = vmatmul.f32.gmra.mxu0 %v4472
        %v4474 = vpop.f32.mrf.mxu0
        %v4475 = vadd.f32 %v4282, %v4474
        %4476 = vdwg.mxu0
        %v4477 = vand.u32 %v421, 4294901760
        %4478 = vmatpush.msra.mxu0 %v4477
        %v4479 = vand.u32 %v419, 4294901760
        %4480 = vmatpush.msra.mxu0 %v4479
        %v4481 = vand.u32 %v417, 4294901760
        %4482 = vmatpush.msra.mxu0 %v4481
        %v4483 = vand.u32 %v415, 4294901760
        %4484 = vmatpush.msra.mxu0 %v4483
        %v4485 = vand.u32 %v413, 4294901760
        %4486 = vmatpush.msra.mxu0 %v4485
        %v4487 = vand.u32 %v411, 4294901760
        %4488 = vmatpush.msra.mxu0 %v4487
        %v4489 = vand.u32 %v409, 4294901760
        %4490 = vmatpush.msra.mxu0 %v4489
        %v4491 = vand.u32 %v407, 4294901760
        %4492 = vmatpush.msra.mxu0 %v4491
        %v4493 = vand.u32 %v405, 4294901760
        %4494 = vmatpush.msra.mxu0 %v4493
        %v4495 = vand.u32 %v403, 4294901760
        %4496 = vmatpush.msra.mxu0 %v4495
        %v4497 = vand.u32 %v401, 4294901760
        %4498 = vmatpush.msra.mxu0 %v4497
        %v4499 = vand.u32 %v399, 4294901760
        %4500 = vmatpush.msra.mxu0 %v4499
        %v4501 = vand.u32 %v397, 4294901760
        %4502 = vmatpush.msra.mxu0 %v4501
        %v4503 = vand.u32 %v395, 4294901760
        %4504 = vmatpush.msra.mxu0 %v4503
        %v4505 = vand.u32 %v393, 4294901760
        %4506 = vmatpush.msra.mxu0 %v4505
        %v4507 = vand.u32 %v391, 4294901760
        %4508 = vmatpush.msra.mxu0 %v4507
        %v4509 = vand.u32 %v1166, 4294901760
        %4510 = vmatmul.f32.gmra.mxu0 %v4509
        %v4511 = vpop.f32.mrf.mxu0
        %v4512 = vadd.f32 %v4351, %v4511
        %v4513 = vand.u32 %v1170, 4294901760
        %4514 = vmatmul.f32.gmra.mxu0 %v4513
        %v4515 = vpop.f32.mrf.mxu0
        %v4516 = vadd.f32 %v4355, %v4515
        %v4517 = vand.u32 %v1174, 4294901760
        %4518 = vmatmul.f32.gmra.mxu0 %v4517
        %v4519 = vpop.f32.mrf.mxu0
        %v4520 = vadd.f32 %v4359, %v4519
        %v4521 = vand.u32 %v1178, 4294901760
        %4522 = vmatmul.f32.gmra.mxu0 %v4521
        %v4523 = vpop.f32.mrf.mxu0
        %v4524 = vadd.f32 %v4363, %v4523
        %v4525 = vand.u32 %v1182, 4294901760
        %4526 = vmatmul.f32.gmra.mxu0 %v4525
        %v4527 = vpop.f32.mrf.mxu0
        %v4528 = vadd.f32 %v4367, %v4527
        %v4529 = vand.u32 %v1186, 4294901760
        %4530 = vmatmul.f32.gmra.mxu0 %v4529
        %v4531 = vpop.f32.mrf.mxu0
        %v4532 = vadd.f32 %v4371, %v4531
        %v4533 = vand.u32 %v1190, 4294901760
        %4534 = vmatmul.f32.gmra.mxu0 %v4533
        %v4535 = vpop.f32.mrf.mxu0
        %v4536 = vadd.f32 %v4375, %v4535
        %v4537 = vand.u32 %v1194, 4294901760
        %4538 = vmatmul.f32.gmra.mxu0 %v4537
        %v4539 = vpop.f32.mrf.mxu0
        %v4540 = vadd.f32 %v4379, %v4539
        %v4541 = vand.u32 %v1198, 4294901760
        %4542 = vmatmul.f32.gmra.mxu0 %v4541
        %v4543 = vpop.f32.mrf.mxu0
        %v4544 = vadd.f32 %v4383, %v4543
        %v4545 = vand.u32 %v1202, 4294901760
        %4546 = vmatmul.f32.gmra.mxu0 %v4545
        %v4547 = vpop.f32.mrf.mxu0
        %v4548 = vadd.f32 %v4387, %v4547
        %v4549 = vand.u32 %v1206, 4294901760
        %4550 = vmatmul.f32.gmra.mxu0 %v4549
        %v4551 = vpop.f32.mrf.mxu0
        %v4552 = vadd.f32 %v4391, %v4551
        %v4553 = vand.u32 %v1210, 4294901760
        %4554 = vmatmul.f32.gmra.mxu0 %v4553
        %v4555 = vpop.f32.mrf.mxu0
        %v4556 = vadd.f32 %v4395, %v4555
        %v4557 = vand.u32 %v1214, 4294901760
        %4558 = vmatmul.f32.gmra.mxu0 %v4557
        %v4559 = vpop.f32.mrf.mxu0
        %v4560 = vadd.f32 %v4399, %v4559
        %v4561 = vand.u32 %v1218, 4294901760
        %4562 = vmatmul.f32.gmra.mxu0 %v4561
        %v4563 = vpop.f32.mrf.mxu0
        %v4564 = vadd.f32 %v4403, %v4563
        %v4565 = vand.u32 %v1222, 4294901760
        %4566 = vmatmul.f32.gmra.mxu0 %v4565
        %v4567 = vpop.f32.mrf.mxu0
        %v4568 = vadd.f32 %v4407, %v4567
        %v4569 = vand.u32 %v1226, 4294901760
        %4570 = vmatmul.f32.gmra.mxu0 %v4569
        %v4571 = vpop.f32.mrf.mxu0
        %v4572 = vadd.f32 %v4411, %v4571
        %v4573 = vand.u32 %v1972, 4294901760
        %4574 = vmatmul.f32.gmra.mxu0 %v4573
        %v4575 = vpop.f32.mrf.mxu0
        %v4576 = vadd.f32 %v4415, %v4575
        %v4577 = vand.u32 %v1976, 4294901760
        %4578 = vmatmul.f32.gmra.mxu0 %v4577
        %v4579 = vpop.f32.mrf.mxu0
        %v4580 = vadd.f32 %v4419, %v4579
        %v4581 = vand.u32 %v1980, 4294901760
        %4582 = vmatmul.f32.gmra.mxu0 %v4581
        %v4583 = vpop.f32.mrf.mxu0
        %v4584 = vadd.f32 %v4423, %v4583
        %v4585 = vand.u32 %v1984, 4294901760
        %4586 = vmatmul.f32.gmra.mxu0 %v4585
        %v4587 = vpop.f32.mrf.mxu0
        %v4588 = vadd.f32 %v4427, %v4587
        %v4589 = vand.u32 %v1988, 4294901760
        %4590 = vmatmul.f32.gmra.mxu0 %v4589
        %v4591 = vpop.f32.mrf.mxu0
        %v4592 = vadd.f32 %v4431, %v4591
        %v4593 = vand.u32 %v1992, 4294901760
        %4594 = vmatmul.f32.gmra.mxu0 %v4593
        %v4595 = vpop.f32.mrf.mxu0
        %v4596 = vadd.f32 %v4435, %v4595
        %v4597 = vand.u32 %v1996, 4294901760
        %4598 = vmatmul.f32.gmra.mxu0 %v4597
        %v4599 = vpop.f32.mrf.mxu0
        %v4600 = vadd.f32 %v4439, %v4599
        %v4601 = vand.u32 %v2000, 4294901760
        %4602 = vmatmul.f32.gmra.mxu0 %v4601
        %v4603 = vpop.f32.mrf.mxu0
        %v4604 = vadd.f32 %v4443, %v4603
        %v4605 = vand.u32 %v2004, 4294901760
        %4606 = vmatmul.f32.gmra.mxu0 %v4605
        %v4607 = vpop.f32.mrf.mxu0
        %v4608 = vadd.f32 %v4447, %v4607
        %v4609 = vand.u32 %v2008, 4294901760
        %4610 = vmatmul.f32.gmra.mxu0 %v4609
        %v4611 = vpop.f32.mrf.mxu0
        %v4612 = vadd.f32 %v4451, %v4611
        %v4613 = vand.u32 %v2012, 4294901760
        %4614 = vmatmul.f32.gmra.mxu0 %v4613
        %v4615 = vpop.f32.mrf.mxu0
        %v4616 = vadd.f32 %v4455, %v4615
        %v4617 = vand.u32 %v2016, 4294901760
        %4618 = vmatmul.f32.gmra.mxu0 %v4617
        %v4619 = vpop.f32.mrf.mxu0
        %v4620 = vadd.f32 %v4459, %v4619
        %v4621 = vand.u32 %v2020, 4294901760
        %4622 = vmatmul.f32.gmra.mxu0 %v4621
        %v4623 = vpop.f32.mrf.mxu0
        %v4624 = vadd.f32 %v4463, %v4623
        %v4625 = vand.u32 %v2024, 4294901760
        %4626 = vmatmul.f32.gmra.mxu0 %v4625
        %v4627 = vpop.f32.mrf.mxu0
        %v4628 = vadd.f32 %v4467, %v4627
        %v4629 = vand.u32 %v2028, 4294901760
        %4630 = vmatmul.f32.gmra.mxu0 %v4629
        %v4631 = vpop.f32.mrf.mxu0
        %v4632 = vadd.f32 %v4471, %v4631
        %v4633 = vand.u32 %v2032, 4294901760
        %4634 = vmatmul.f32.gmra.mxu0 %v4633
        %v4635 = vpop.f32.mrf.mxu0
        %v4636 = vadd.f32 %v4475, %v4635
        %4637 = vdwg.mxu0
        %v4638 = vadd.f32 %v3210, %v3214
        %v4639 = vadd.f32 %v4638, %v3218
        %v4640 = vadd.f32 %v4639, %v3222
        %v4641 = vadd.f32 %v4640, %v3226
        %v4642 = vadd.f32 %v4641, %v3230
        %v4643 = vadd.f32 %v4642, %v3234
        %v4644 = vadd.f32 %v4643, %v3238
        %v4645 = vadd.f32 %v4644, %v3242
        %v4646 = vadd.f32 %v4645, %v3246
        %v4647 = vadd.f32 %v4646, %v3250
        %v4648 = vadd.f32 %v4647, %v3254
        %v4649 = vadd.f32 %v4648, %v3258
        %v4650 = vadd.f32 %v4649, %v3262
        %v4651 = vadd.f32 %v4650, %v3266
        %v4652 = vadd.f32 %v4651, %v3270
        %v4653 = vadd.f32 %v4652, %v3274
        %v4654 = vadd.f32 %v4653, %v3278
        %v4655 = vadd.f32 %v4654, %v3282
        %v4656 = vadd.f32 %v4655, %v3286
        %v4657 = vadd.f32 %v4656, %v3290
        %v4658 = vadd.f32 %v4657, %v3294
        %v4659 = vadd.f32 %v4658, %v3298
        %v4660 = vadd.f32 %v4659, %v3302
        %v4661 = vadd.f32 %v4660, %v3306
        %v4662 = vadd.f32 %v4661, %v3310
        %v4663 = vadd.f32 %v4662, %v3314
        %v4664 = vadd.f32 %v4663, %v3318
        %v4665 = vadd.f32 %v4664, %v3322
        %v4666 = vadd.f32 %v4665, %v3326
        %v4667 = vadd.f32 %v4666, %v3330
        %v4668 = vadd.f32 %v4667, %v3334
        %v4669 = vrot.slane %v4668, 4
        %v4670 = vadd.f32 %v4668, %v4669
        %v4671 = vrot.slane %v4670, 2
        %v4672 = vadd.f32 %v4670, %v4671
        %v4673 = vrot.slane %v4672, 1
        %v4674 = vadd.f32 %v4672, %v4673
        %v4675 = vadd.f32 %v4512, %v4516
        %v4676 = vadd.f32 %v4675, %v4520
        %v4677 = vadd.f32 %v4676, %v4524
        %v4678 = vadd.f32 %v4677, %v4528
        %v4679 = vadd.f32 %v4678, %v4532
        %v4680 = vadd.f32 %v4679, %v4536
        %v4681 = vadd.f32 %v4680, %v4540
        %v4682 = vadd.f32 %v4681, %v4544
        %v4683 = vadd.f32 %v4682, %v4548
        %v4684 = vadd.f32 %v4683, %v4552
        %v4685 = vadd.f32 %v4684, %v4556
        %v4686 = vadd.f32 %v4685, %v4560
        %v4687 = vadd.f32 %v4686, %v4564
        %v4688 = vadd.f32 %v4687, %v4568
        %v4689 = vadd.f32 %v4688, %v4572
        %v4690 = vadd.f32 %v4689, %v4576
        %v4691 = vadd.f32 %v4690, %v4580
        %v4692 = vadd.f32 %v4691, %v4584
        %v4693 = vadd.f32 %v4692, %v4588
        %v4694 = vadd.f32 %v4693, %v4592
        %v4695 = vadd.f32 %v4694, %v4596
        %v4696 = vadd.f32 %v4695, %v4600
        %v4697 = vadd.f32 %v4696, %v4604
        %v4698 = vadd.f32 %v4697, %v4608
        %v4699 = vadd.f32 %v4698, %v4612
        %v4700 = vadd.f32 %v4699, %v4616
        %v4701 = vadd.f32 %v4700, %v4620
        %v4702 = vadd.f32 %v4701, %v4624
        %v4703 = vadd.f32 %v4702, %v4628
        %v4704 = vadd.f32 %v4703, %v4632
        %v4705 = vadd.f32 %v4704, %v4636
        %v4706 = vrot.slane %v4705, 4
        %v4707 = vadd.f32 %v4705, %v4706
        %v4708 = vrot.slane %v4707, 2
        %v4709 = vadd.f32 %v4707, %v4708
        %v4710 = vrot.slane %v4709, 1
        %v4711 = vadd.f32 %v4709, %v4710
        %v4714 = vrot.slane %v4711, 7
        %vm4715 = vcmask 1040384
        %v4716 = vsel %vm4715, %v4674, %v4714
        %v4718 = vlaneseq
        %vm4719 = vcmp.ge.s32.totalorder %v4718, 0
        %vm4720 = vcmp.lt.s32.totalorder %v4718, 256
        %vm4721 = vmand %vm4719, %vm4720
        %4722 = vst.msk [vmem:[%s315] sm:$0x3] %vm4721, %v4716
        %v4723 = vmul.f32 %v3210, %v3210
        %v4724 = vmul.f32 %v4512, %v4512
        %v4725 = vmul.f32 %v3214, %v3214
        %v4726 = vmul.f32 %v4516, %v4516
        %v4727 = vmul.f32 %v3218, %v3218
        %v4728 = vmul.f32 %v4520, %v4520
        %v4729 = vmul.f32 %v3222, %v3222
        %v4730 = vmul.f32 %v4524, %v4524
        %v4731 = vmul.f32 %v3226, %v3226
        %v4732 = vmul.f32 %v4528, %v4528
        %v4733 = vmul.f32 %v3230, %v3230
        %v4734 = vmul.f32 %v4532, %v4532
        %v4735 = vmul.f32 %v3234, %v3234
        %v4736 = vmul.f32 %v4536, %v4536
        %v4737 = vmul.f32 %v3238, %v3238
        %v4738 = vmul.f32 %v4540, %v4540
        %v4739 = vmul.f32 %v3242, %v3242
        %v4740 = vmul.f32 %v4544, %v4544
        %v4741 = vmul.f32 %v3246, %v3246
        %v4742 = vmul.f32 %v4548, %v4548
        %v4743 = vmul.f32 %v3250, %v3250
        %v4744 = vmul.f32 %v4552, %v4552
        %v4745 = vmul.f32 %v3254, %v3254
        %v4746 = vmul.f32 %v4556, %v4556
        %v4747 = vmul.f32 %v3258, %v3258
        %v4748 = vmul.f32 %v4560, %v4560
        %v4749 = vmul.f32 %v3262, %v3262
        %v4750 = vmul.f32 %v4564, %v4564
        %v4751 = vmul.f32 %v3266, %v3266
        %v4752 = vmul.f32 %v4568, %v4568
        %v4753 = vmul.f32 %v3270, %v3270
        %v4754 = vmul.f32 %v4572, %v4572
        %v4755 = vmul.f32 %v3274, %v3274
        %v4756 = vmul.f32 %v4576, %v4576
        %v4757 = vmul.f32 %v3278, %v3278
        %v4758 = vmul.f32 %v4580, %v4580
        %v4759 = vmul.f32 %v3282, %v3282
        %v4760 = vmul.f32 %v4584, %v4584
        %v4761 = vmul.f32 %v3286, %v3286
        %v4762 = vmul.f32 %v4588, %v4588
        %v4763 = vmul.f32 %v3290, %v3290
        %v4764 = vmul.f32 %v4592, %v4592
        %v4765 = vmul.f32 %v3294, %v3294
        %v4766 = vmul.f32 %v4596, %v4596
        %v4767 = vmul.f32 %v3298, %v3298
        %v4768 = vmul.f32 %v4600, %v4600
        %v4769 = vmul.f32 %v3302, %v3302
        %v4770 = vmul.f32 %v4604, %v4604
        %v4771 = vmul.f32 %v3306, %v3306
        %v4772 = vmul.f32 %v4608, %v4608
        %v4773 = vmul.f32 %v3310, %v3310
        %v4774 = vmul.f32 %v4612, %v4612
        %v4775 = vmul.f32 %v3314, %v3314
        %v4776 = vmul.f32 %v4616, %v4616
        %v4777 = vmul.f32 %v3318, %v3318
        %v4778 = vmul.f32 %v4620, %v4620
        %v4779 = vmul.f32 %v3322, %v3322
        %v4780 = vmul.f32 %v4624, %v4624
        %v4781 = vmul.f32 %v3326, %v3326
        %v4782 = vmul.f32 %v4628, %v4628
        %v4783 = vmul.f32 %v3330, %v3330
        %v4784 = vmul.f32 %v4632, %v4632
        %v4785 = vmul.f32 %v3334, %v3334
        %v4786 = vmul.f32 %v4636, %v4636
        %v4787 = vadd.f32 %v4723, %v4725
        %v4788 = vadd.f32 %v4787, %v4727
        %v4789 = vadd.f32 %v4788, %v4729
        %v4790 = vadd.f32 %v4789, %v4731
        %v4791 = vadd.f32 %v4790, %v4733
        %v4792 = vadd.f32 %v4791, %v4735
        %v4793 = vadd.f32 %v4792, %v4737
        %v4794 = vadd.f32 %v4793, %v4739
        %v4795 = vadd.f32 %v4794, %v4741
        %v4796 = vadd.f32 %v4795, %v4743
        %v4797 = vadd.f32 %v4796, %v4745
        %v4798 = vadd.f32 %v4797, %v4747
        %v4799 = vadd.f32 %v4798, %v4749
        %v4800 = vadd.f32 %v4799, %v4751
        %v4801 = vadd.f32 %v4800, %v4753
        %v4802 = vadd.f32 %v4801, %v4755
        %v4803 = vadd.f32 %v4802, %v4757
        %v4804 = vadd.f32 %v4803, %v4759
        %v4805 = vadd.f32 %v4804, %v4761
        %v4806 = vadd.f32 %v4805, %v4763
        %v4807 = vadd.f32 %v4806, %v4765
        %v4808 = vadd.f32 %v4807, %v4767
        %v4809 = vadd.f32 %v4808, %v4769
        %v4810 = vadd.f32 %v4809, %v4771
        %v4811 = vadd.f32 %v4810, %v4773
        %v4812 = vadd.f32 %v4811, %v4775
        %v4813 = vadd.f32 %v4812, %v4777
        %v4814 = vadd.f32 %v4813, %v4779
        %v4815 = vadd.f32 %v4814, %v4781
        %v4816 = vadd.f32 %v4815, %v4783
        %v4817 = vadd.f32 %v4816, %v4785
        %v4818 = vrot.slane %v4817, 4
        %v4819 = vadd.f32 %v4817, %v4818
        %v4820 = vrot.slane %v4819, 2
        %v4821 = vadd.f32 %v4819, %v4820
        %v4822 = vrot.slane %v4821, 1
        %v4823 = vadd.f32 %v4821, %v4822
        %v4824 = vadd.f32 %v4724, %v4726
        %v4825 = vadd.f32 %v4824, %v4728
        %v4826 = vadd.f32 %v4825, %v4730
        %v4827 = vadd.f32 %v4826, %v4732
        %v4828 = vadd.f32 %v4827, %v4734
        %v4829 = vadd.f32 %v4828, %v4736
        %v4830 = vadd.f32 %v4829, %v4738
        %v4831 = vadd.f32 %v4830, %v4740
        %v4832 = vadd.f32 %v4831, %v4742
        %v4833 = vadd.f32 %v4832, %v4744
        %v4834 = vadd.f32 %v4833, %v4746
        %v4835 = vadd.f32 %v4834, %v4748
        %v4836 = vadd.f32 %v4835, %v4750
        %v4837 = vadd.f32 %v4836, %v4752
        %v4838 = vadd.f32 %v4837, %v4754
        %v4839 = vadd.f32 %v4838, %v4756
        %v4840 = vadd.f32 %v4839, %v4758
        %v4841 = vadd.f32 %v4840, %v4760
        %v4842 = vadd.f32 %v4841, %v4762
        %v4843 = vadd.f32 %v4842, %v4764
        %v4844 = vadd.f32 %v4843, %v4766
        %v4845 = vadd.f32 %v4844, %v4768
        %v4846 = vadd.f32 %v4845, %v4770
        %v4847 = vadd.f32 %v4846, %v4772
        %v4848 = vadd.f32 %v4847, %v4774
        %v4849 = vadd.f32 %v4848, %v4776
        %v4850 = vadd.f32 %v4849, %v4778
        %v4851 = vadd.f32 %v4850, %v4780
        %v4852 = vadd.f32 %v4851, %v4782
        %v4853 = vadd.f32 %v4852, %v4784
        %v4854 = vadd.f32 %v4853, %v4786
        %v4855 = vrot.slane %v4854, 4
        %v4856 = vadd.f32 %v4854, %v4855
        %v4857 = vrot.slane %v4856, 2
        %v4858 = vadd.f32 %v4856, %v4857
        %v4859 = vrot.slane %v4858, 1
        %v4860 = vadd.f32 %v4858, %v4859
        %v4863 = vrot.slane %v4860, 7
        %v4864 = vsel %vm4715, %v4823, %v4863
        %4866 = vst.msk [vmem:[%s322] sm:$0x3] %vm4721, %v4864
        %4867 = vst [vmem:[%s308] sm:$0xff] %v3210
        %4868 = vst [vmem:[%s308 + $0x8] sm:$0xff] %v4512
        %4869 = vst [vmem:[%s308 + $0x10] sm:$0xff] %v3214
        %4870 = vst [vmem:[%s308 + $0x18] sm:$0xff] %v4516
        %4871 = vst [vmem:[%s308 + $0x20] sm:$0xff] %v3218
        %4872 = vst [vmem:[%s308 + $0x28] sm:$0xff] %v4520
        %4873 = vst [vmem:[%s308 + $0x30] sm:$0xff] %v3222
        %4874 = vst [vmem:[%s308 + $0x38] sm:$0xff] %v4524
        %4875 = vst [vmem:[%s308 + $0x40] sm:$0xff] %v3226
        %4876 = vst [vmem:[%s308 + $0x48] sm:$0xff] %v4528
        %4877 = vst [vmem:[%s308 + $0x50] sm:$0xff] %v3230
        %4878 = vst [vmem:[%s308 + $0x58] sm:$0xff] %v4532
        %4879 = vst [vmem:[%s308 + $0x60] sm:$0xff] %v3234
        %4880 = vst [vmem:[%s308 + $0x68] sm:$0xff] %v4536
        %4881 = vst [vmem:[%s308 + $0x70] sm:$0xff] %v3238
        %4882 = vst [vmem:[%s308 + $0x78] sm:$0xff] %v4540
        %4883 = vst [vmem:[%s308 + $0x80] sm:$0xff] %v3242
        %4884 = vst [vmem:[%s308 + $0x88] sm:$0xff] %v4544
        %4885 = vst [vmem:[%s308 + $0x90] sm:$0xff] %v3246
        %4886 = vst [vmem:[%s308 + $0x98] sm:$0xff] %v4548
        %4887 = vst [vmem:[%s308 + $0xa0] sm:$0xff] %v3250
        %4888 = vst [vmem:[%s308 + $0xa8] sm:$0xff] %v4552
        %4889 = vst [vmem:[%s308 + $0xb0] sm:$0xff] %v3254
        %4890 = vst [vmem:[%s308 + $0xb8] sm:$0xff] %v4556
        %4891 = vst [vmem:[%s308 + $0xc0] sm:$0xff] %v3258
        %4892 = vst [vmem:[%s308 + $0xc8] sm:$0xff] %v4560
        %4893 = vst [vmem:[%s308 + $0xd0] sm:$0xff] %v3262
        %4894 = vst [vmem:[%s308 + $0xd8] sm:$0xff] %v4564
        %4895 = vst [vmem:[%s308 + $0xe0] sm:$0xff] %v3266
        %4896 = vst [vmem:[%s308 + $0xe8] sm:$0xff] %v4568
        %4897 = vst [vmem:[%s308 + $0xf0] sm:$0xff] %v3270
        %4898 = vst [vmem:[%s308 + $0xf8] sm:$0xff] %v4572
        %4899 = vst [vmem:[%s308 + $0x100] sm:$0xff] %v3274
        %4900 = vst [vmem:[%s308 + $0x108] sm:$0xff] %v4576
        %4901 = vst [vmem:[%s308 + $0x110] sm:$0xff] %v3278
        %4902 = vst [vmem:[%s308 + $0x118] sm:$0xff] %v4580
        %4903 = vst [vmem:[%s308 + $0x120] sm:$0xff] %v3282
        %4904 = vst [vmem:[%s308 + $0x128] sm:$0xff] %v4584
        %4905 = vst [vmem:[%s308 + $0x130] sm:$0xff] %v3286
        %4906 = vst [vmem:[%s308 + $0x138] sm:$0xff] %v4588
        %4907 = vst [vmem:[%s308 + $0x140] sm:$0xff] %v3290
        %4908 = vst [vmem:[%s308 + $0x148] sm:$0xff] %v4592
        %4909 = vst [vmem:[%s308 + $0x150] sm:$0xff] %v3294
        %4910 = vst [vmem:[%s308 + $0x158] sm:$0xff] %v4596
        %4911 = vst [vmem:[%s308 + $0x160] sm:$0xff] %v3298
        %4912 = vst [vmem:[%s308 + $0x168] sm:$0xff] %v4600
        %4913 = vst [vmem:[%s308 + $0x170] sm:$0xff] %v3302
        %4914 = vst [vmem:[%s308 + $0x178] sm:$0xff] %v4604
        %4915 = vst [vmem:[%s308 + $0x180] sm:$0xff] %v3306
        %4916 = vst [vmem:[%s308 + $0x188] sm:$0xff] %v4608
        %4917 = vst [vmem:[%s308 + $0x190] sm:$0xff] %v3310
        %4918 = vst [vmem:[%s308 + $0x198] sm:$0xff] %v4612
        %4919 = vst [vmem:[%s308 + $0x1a0] sm:$0xff] %v3314
        %4920 = vst [vmem:[%s308 + $0x1a8] sm:$0xff] %v4616
        %4921 = vst [vmem:[%s308 + $0x1b0] sm:$0xff] %v3318
        %4922 = vst [vmem:[%s308 + $0x1b8] sm:$0xff] %v4620
        %4923 = vst [vmem:[%s308 + $0x1c0] sm:$0xff] %v3322
        %4924 = vst [vmem:[%s308 + $0x1c8] sm:$0xff] %v4624
        %4925 = vst [vmem:[%s308 + $0x1d0] sm:$0xff] %v3326
        %4926 = vst [vmem:[%s308 + $0x1d8] sm:$0xff] %v4628
        %4927 = vst [vmem:[%s308 + $0x1e0] sm:$0xff] %v3330
        %4928 = vst [vmem:[%s308 + $0x1e8] sm:$0xff] %v4632
        %4929 = vst [vmem:[%s308 + $0x1f0] sm:$0xff] %v3334
        %4930 = vst [vmem:[%s308 + $0x1f8] sm:$0xff] %v4636
        %s4931 = sand.u32 %s110, 1
        %s4932 = scalar_lea.sflag [#allocation4], %s4931
        %s4933 = sand.u32 %s110, 1
        %s4934 = smul.addr %s4933, 512
        %s4935 = scalar_lea.vmem [#allocation8], %s4934
        %s4936 = sand.u32 %s29, 1
        %s4937 = scalar_lea.sflag [#allocation10], %s4936
        %s4938 = sand.u32 %s136, 1
        %s4939 = smul.addr %s4938, 2
        %s4940 = scalar_lea.vmem [#allocation9], %s4939
        %s4941 = sand.u32 %s29, 1
        %s4942 = scalar_lea.sflag [#allocation10], %s4941
        %s4943 = sand.u32 %s162, 1
        %s4944 = smul.addr %s4943, 2
        %s4945 = scalar_lea.vmem [#allocation11], %s4944
        // Predicated region
        $region45: #{tpu_custom_call.1} parent=31 // pred_check
          %p4946 = pneg %p120
        $region46: #{tpu_custom_call.1} parent=31 // pred_check_branch
          %4948 = sbr.rel (%p4946) target = $region48
        $region47: #{tpu_custom_call.1} parent=31 // pred_region
          %s4949 = smul.u32 2, %s29
          %4951 = vsyncadd %s4932, 0
          %s4952 = smul.addr %s4949, 32
          %s4953 = smul.addr %s4952, 8
          %s4954 = scalar_lea.hbm %s3, %s4953
          %s4955 = sshll.u32 %s4935, 4
          %s4956 = int_to_ptr.vmem [resolvable:$true] %s4955
          %s4957 = sshll.u32 %s4954, 4
          %s4958 = int_to_ptr.hbm [resolvable:$true] %s4957
          %4963 = dma.vmem_to_hbm [thread:$0]  %s4956, 8192, %s4958, %s4932, 256, 256, 16
        $region48: #{tpu_custom_call.1} parent=31 // pred_fallthru
          _
        // Predicated region
        $region49: #{tpu_custom_call.1} parent=31 // pred_check
          %p4964 = pneg %p146
        $region50: #{tpu_custom_call.1} parent=31 // pred_check_branch
          %4966 = sbr.rel (%p4964) target = $region52
        $region51: #{tpu_custom_call.1} parent=31 // pred_region
          %4968 = vsyncadd %s4937, 0
          %s4969 = smul.addr %s29, 2
          %s4970 = scalar_lea.hbm %s4, %s4969
          %s4972 = sshll.u32 %s4940, 4
          %s4973 = int_to_ptr.vmem [resolvable:$true] %s4972
          %s4974 = sshll.u32 %s4970, 4
          %s4975 = int_to_ptr.hbm [resolvable:$true] %s4974
          %4977 = dma.vmem_to_hbm [thread:$0]  %s4973, 32, %s4975, %s4937
        $region52: #{tpu_custom_call.1} parent=31 // pred_fallthru
          _
        // Predicated region
        $region53: #{tpu_custom_call.1} parent=31 // pred_check
          %p4978 = pneg %p172
        $region54: #{tpu_custom_call.1} parent=31 // pred_check_branch
          %4980 = sbr.rel (%p4978) target = $region56
        $region55: #{tpu_custom_call.1} parent=31 // pred_region
          %4982 = vsyncadd %s4942, 0
          %s4983 = smul.addr %s29, 2
          %s4984 = scalar_lea.hbm %s5, %s4983
          %s4986 = sshll.u32 %s4945, 4
          %s4987 = int_to_ptr.vmem [resolvable:$true] %s4986
          %s4988 = sshll.u32 %s4984, 4
          %s4989 = int_to_ptr.hbm [resolvable:$true] %s4988
          %4991 = dma.vmem_to_hbm [thread:$0]  %s4987, 32, %s4989, %s4942
        $region56: #{tpu_custom_call.1} parent=31 // pred_fallthru
          _
      $region32: #{tpu_custom_call.1} parent=5 // pred_fallthru
        _
      %p4992 = scmp.le.s32.totalorder 2, %s24
      // Predicated region
      $region57: #{tpu_custom_call.1} parent=5 // pred_check
        %p4993 = pneg %p4992
      $region58: #{tpu_custom_call.1} parent=5 // pred_check_branch
        %4995 = sbr.rel (%p4993) target = $region60
      $region59: #{tpu_custom_call.1} parent=5 // pred_region
        %s4996 = ssub.s32 %s24, 2
        // Predicated region
        $region61: #{tpu_custom_call.1} parent=59 // pred_check
          %p4997 = pneg %p126
        $region62: #{tpu_custom_call.1} parent=59 // pred_check_branch
          %4999 = sbr.rel (%p4997) target = $region64
        $region63: #{tpu_custom_call.1} parent=59 // pred_region
          %s5000 = sand.u32 %s111, 1
          %s5001 = scalar_lea.sflag [#allocation4], %s5000
          %s5002 = sand.u32 %s111, 1
          %s5003 = smul.addr %s5002, 512
          %s5004 = scalar_lea.vmem [#allocation8], %s5003
          %5006 = dma.done %s5001, 8192
        $region64: #{tpu_custom_call.1} parent=59 // pred_fallthru
          _
        // Predicated region
        $region65: #{tpu_custom_call.1} parent=59 // pred_check
          %p5007 = pneg %p152
        $region66: #{tpu_custom_call.1} parent=59 // pred_check_branch
          %5009 = sbr.rel (%p5007) target = $region68
        $region67: #{tpu_custom_call.1} parent=59 // pred_region
          %s5010 = sand.u32 %s30, 1
          %s5011 = scalar_lea.sflag [#allocation10], %s5010
          %s5012 = sand.u32 %s137, 1
          %s5013 = smul.addr %s5012, 2
          %s5014 = scalar_lea.vmem [#allocation9], %s5013
          %5016 = dma.done %s5011, 32
        $region68: #{tpu_custom_call.1} parent=59 // pred_fallthru
          _
        // Predicated region
        $region69: #{tpu_custom_call.1} parent=59 // pred_check
          %p5017 = pneg %p178
        $region70: #{tpu_custom_call.1} parent=59 // pred_check_branch
          %5019 = sbr.rel (%p5017) target = $region72
        $region71: #{tpu_custom_call.1} parent=59 // pred_region
          %s5020 = sand.u32 %s30, 1
          %s5021 = scalar_lea.sflag [#allocation10], %s5020
          %s5022 = sand.u32 %s163, 1
          %s5023 = smul.addr %s5022, 2
          %s5024 = scalar_lea.vmem [#allocation11], %s5023
          %5026 = dma.done %s5021, 32
        $region72: #{tpu_custom_call.1} parent=59 // pred_fallthru
          _
      $region60: #{tpu_custom_call.1} parent=5 // pred_fallthru
        _
    $region6: #{tpu_custom_call.1} parent=1 // loop_footer
      %s28 = sadd.s32 1, %s24
    $region7: #{tpu_custom_call.1} parent=1 // loop_footer_branch
      %23 = sbr.rel target = $region3
    $region8: #{tpu_custom_call.1} parent=1 // loop_exit
      _
    %5027 = vsyncpa [#allocation3], 1
    %s5028 = scalar_lea.sflag [#allocation3], 1
    %5029 = vsyncpa %s5028, 1
    %5030 = vsyncpa [#allocation6], 1
    %s5031 = scalar_lea.sflag [#allocation6], 1
    %5032 = vsyncpa %s5031, 1
    %5033 = vsyncpa [#allocation4], 1
    %s5034 = scalar_lea.sflag [#allocation4], 1
    %5035 = vsyncpa %s5034, 1
    %5036 = vsyncpa [#allocation10], 1
    %s5037 = scalar_lea.sflag [#allocation10], 1
    %5038 = vsyncpa %s5037, 1

</llo_original>
